<compile_context>
chip_gen: v7x
topology: tpu7x:2x2x1
jax: 0.10.0
libtpu: 0.0.40
codegen_flags: <defaults>
</compile_context>

<pallas_src>
import math
import functools

import jax
import jax.numpy as jnp
from jax.experimental import pallas as pl
from jax.experimental.pallas import tpu as pltpu


_LN_EPS = 1e-5
_NEG_INF = -1e30  # large finite negative: robust even if a row were fully masked


def _layer_norm(z, w, b):
    mu = jnp.mean(z, axis=-1, keepdims=True)
    c = z - mu
    var = jnp.mean(c * c, axis=-1, keepdims=True)
    return c * jax.lax.rsqrt(var + _LN_EPS) * w + b


def _gelu_tanh(z):
    # TODO(synk): PyTorch nn.GELU() default is the exact erf formulation; the
    # tanh approximation (deviation ~1e-4 at these activation scales) is used
    # because erf has no guaranteed Mosaic lowering.
    c = 0.7978845608028654  # sqrt(2/pi)
    return 0.5 * z * (1.0 + jnp.tanh(c * (z + 0.044715 * z * z * z)))


def _transformer_kernel(
        x_ref,
        ln1_w_ref, ln1_b_ref, w_qkv_ref, b_qkv_ref, w_proj_ref, b_proj_ref,
        ln2_w_ref, ln2_b_ref, w_fc_ref, b_fc_ref, w_fc2_ref, b_fc2_ref,
        lnf_w_ref, lnf_b_ref,
        o_ref,
        resid_ref,
        *, n_head: int, seq_len: int, n_seq: int):
    layer = pl.program_id(1)
    n_layer = pl.num_programs(1)

    H, T, Bb = n_head, seq_len, n_seq
    R = Bb * T
    cdtype = w_qkv_ref.dtype          # MXU operand dtype (bf16 by default)

    # Residual stream carried in an f32 VMEM scratch across the layer axis:
    # no per-layer dtype round-trip / store through o_ref.
    @pl.when(layer == 0)
    def _init():
        # transformer.drop(x) is identity in eval mode.
        resid_ref[...] = x_ref[...].astype(jnp.float32)

    x = resid_ref[...]                                      # (R, C) f32
    C = x.shape[-1]
    D = C // H
    scale = 1.0 / math.sqrt(D)

    # ---------------- attention sub-block: x = x + attn(ln_1(x)) -----------
    x_ln = _layer_norm(x, ln1_w_ref[0], ln1_b_ref[0])
    # Fused QKV projection: one lane-dense (R, C) @ (C, 3C) MXU matmul with
    # compute-dtype operands and f32 accumulation.
    qkv = jnp.dot(x_ln.astype(cdtype), w_qkv_ref[0],
                  preferred_element_type=jnp.float32) + b_qkv_ref[0]

    def split_heads(base):
        # (R, 3C) slab -> (H*Bb, T, D) batched layout.
        # TODO(synk): when D % 128 == 0 this should be one aligned repack
        # rather than H lane slices; at small D the slices are cheap and
        # known to lower cleanly.
        pieces = [qkv[:, base + h * D: base + (h + 1) * D].reshape(1, R, D)
                  for h in range(H)]
        return jnp.concatenate(pieces, axis=0).reshape(H * Bb, T, D).astype(cdtype)

    q = split_heads(0 * C)
    k = split_heads(1 * C)
    v = split_heads(2 * C)

    # Single batched contraction over all (head, batch) pairs.
    s = jnp.einsum('ntd,nsd->nts', q, k,
                   preferred_element_type=jnp.float32) * scale   # (H*Bb, T, T)
    # Causal mask from one (1, T, T) comparison, broadcast in jnp.where.
    rows = jax.lax.broadcasted_iota(jnp.int32, (1, T, T), 1)
    cols = jax.lax.broadcasted_iota(jnp.int32, (1, T, T), 2)
    s = jnp.where(rows >= cols, s, _NEG_INF)
    s = s - jnp.max(s, axis=-1, keepdims=True)
    p = jnp.exp(s)
    # Softmax denominator on the EUP reciprocal path instead of a VALU divide.
    p = p * pl.reciprocal(jnp.sum(p, axis=-1, keepdims=True), approx=True)
    # TODO(synk): for long sequences restructure into the KV-tiled
    # flash-attention pattern instead of materializing (H*Bb, T, T) scores.
    y = jnp.einsum('nts,nsd->ntd', p.astype(cdtype), v,
                   preferred_element_type=jnp.float32)           # (H*Bb, T, D)

    # Repack heads back into lanes once (head-major channels, matching the
    # PyTorch y.transpose(1,2).view(B,T,C)), then a single full-depth
    # (R, C) @ (C, C) output projection — no (H, R, C) intermediate.
    y = y.reshape(H, R, D)
    y_cat = jnp.concatenate([y[h] for h in range(H)], axis=-1)   # (R, C)
    attn_out = jnp.dot(y_cat.astype(cdtype), w_proj_ref[0],
                       preferred_element_type=jnp.float32) + b_proj_ref[0]
    x = x + attn_out

    # ---------------- MLP sub-block: x = x + mlp(ln_2(x)) -------------------
    x_ln2 = _layer_norm(x, ln2_w_ref[0], ln2_b_ref[0])
    h1 = jnp.dot(x_ln2.astype(cdtype), w_fc_ref[0],
                 preferred_element_type=jnp.float32) + b_fc_ref[0]
    h1 = _gelu_tanh(h1)
    mlp_out = jnp.dot(h1.astype(cdtype), w_fc2_ref[0],
                      preferred_element_type=jnp.float32) + b_fc2_ref[0]
    x = x + mlp_out

    @pl.when(layer < n_layer - 1)
    def _carry():
        resid_ref[...] = x

    @pl.when(layer == n_layer - 1)
    def _final():
        # Final LayerNorm fused into the last layer step; the only o_ref store.
        o_ref[...] = _layer_norm(x, lnf_w_ref[...],
                                 lnf_b_ref[...]).astype(o_ref.dtype)


# ------------------------- hardware queries (defensive) ----------------------

def _tpu_info():
    fn = getattr(pltpu, "get_tpu_info", None)
    if fn is None:
        return None
    try:
        return fn()
    except Exception:
        return None


def _int_attr(obj, names):
    for name in names:
        v = getattr(obj, name, None)
        if v is None:
            continue
        try:
            v = int(v)
        except (TypeError, ValueError):
            continue
        if v > 0:
            return v
    return None


def _num_tensorcores():
    info = _tpu_info()
    if info is not None:
        v = _int_attr(info, ("tensorcore_count", "num_tensorcores",
                             "num_cores", "cores_per_chip"))
        if v is not None:
            return v
    try:
        return max(1, int(getattr(jax.devices()[0], "num_cores", 1) or 1))
    except Exception:
        return 1


def _vmem_capacity_bytes():
    info = _tpu_info()
    if info is not None:
        v = _int_attr(info, ("vmem_capacity_bytes",))
        if v is not None:
            return v
    return 64 * 1024 * 1024       # conservative (v7x per-TC budget)


def _vmem_limit_bytes(R, C, H, Bb, T, w_itemsize):
    """Scoped-VMEM limit sized from the resident block set, with headroom."""
    w_layer = 12 * C * C * w_itemsize               # qkv + proj + fc + fc2 slabs
    b_layer = (3 * C + C + 4 * C + C + 4 * C) * 4   # linear biases + LN params
    weights = 2 * (w_layer + b_layer)               # double-buffered layer stream
    resid = R * C * 4                               # f32 residual scratch
    io = 2 * 2 * R * C * 4                          # x + out blocks, double-buffered
    scores = 2 * H * Bb * T * T * 4                 # s and p (TODO: flash-tile)
    acts = (3 * R * C + 3 * R * C + R * C + 2 * 4 * R * C) * 4
    need = weights + resid + io + scores + acts
    cap = _vmem_capacity_bytes()
    limit = min(cap - 4 * 1024 * 1024,
                max(32 * 1024 * 1024, (3 * need) // 2))
    return max(16 * 1024 * 1024, int(limit))


# --------------------------------- wrapper -----------------------------------

def transformer_forward(x, params, n_head, *, compute_dtype=jnp.bfloat16):
    """x: (B, T, C) -> (B, T, C).  params: stacked PyTorch-convention weights."""
    B, T, C = x.shape
    assert C % n_head == 0
    H = n_head
    D = C // H
    L = params['ln1_w'].shape[0]

    # Batch-block split for the "parallel" axis: >1 only on multi-TC chips
    # (v7x); on single-TC v5e/v6e use 1 so each layer's weight slab is
    # streamed from HBM exactly once.
    n_tc = _num_tensorcores()
    rows_total = B * T
    n_batch_blocks = 2 if (n_tc >= 2 and rows_total % 16 == 0) else 1
    R = rows_total // n_batch_blocks
    Bb = R // T

    cdtype = compute_dtype
    f32 = jnp.float32

    # ---- wrapper-side weight plumbing (no in-kernel transposes) ----
    ln1_w = params['ln1_w'].reshape(L, 1, C).astype(f32)
    ln1_b = params['ln1_b'].reshape(L, 1, C).astype(f32)
    ln2_w = params['ln2_w'].reshape(L, 1, C).astype(f32)
    ln2_b = params['ln2_b'].reshape(L, 1, C).astype(f32)
    # MXU weight slabs pre-transposed and pre-cast to the compute dtype
    # (bf16 by default: full MXU rate + half the weight DMA / VMEM).
    w_qkv = jnp.transpose(params['attn_w'], (0, 2, 1)).astype(cdtype)   # (L,C,3C)
    b_qkv = params['attn_b'].reshape(L, 1, 3 * C).astype(f32)
    w_proj = jnp.transpose(params['proj_w'], (0, 2, 1)).astype(cdtype)  # (L,C,C)
    b_proj = params['proj_b'].reshape(L, 1, C).astype(f32)
    w_fc = jnp.transpose(params['fc_w'], (0, 2, 1)).astype(cdtype)      # (L,C,4C)
    b_fc = params['fc_b'].reshape(L, 1, 4 * C).astype(f32)
    w_fc2 = jnp.transpose(params['fc2_w'], (0, 2, 1)).astype(cdtype)    # (L,4C,C)
    b_fc2 = params['fc2_b'].reshape(L, 1, C).astype(f32)
    lnf_w = params['lnf_w'].reshape(1, C).astype(f32)
    lnf_b = params['lnf_b'].reshape(1, C).astype(f32)

    x2 = x.reshape(rows_total, C)     # whole batch folded into lane-dense rows

    kernel = functools.partial(_transformer_kernel,
                               n_head=H, seq_len=T, n_seq=Bb)

    def wspec(d1, d2):
        # Per-layer weight slab, streamed/pipelined along the layer axis.
        return pl.BlockSpec((1, d1, d2), lambda bb, l: (l, 0, 0))

    vmem_limit = _vmem_limit_bytes(R, C, H, Bb, T, jnp.dtype(cdtype).itemsize)

    out = pl.pallas_call(
        kernel,
        out_shape=jax.ShapeDtypeStruct((rows_total, C), x.dtype),
        grid_spec=pltpu.PrefetchScalarGridSpec(
            num_scalar_prefetch=0,
            grid=(n_batch_blocks, L),
            in_specs=[
                # TODO(synk): x is only read at layer 0; memory_space=pl.ANY +
                # a one-time copy would free its double-buffered VMEM block.
                pl.BlockSpec((R, C), lambda bb, l: (bb, 0)),      # x
                wspec(1, C), wspec(1, C),                         # ln_1
                wspec(C, 3 * C), wspec(1, 3 * C),                 # c_attn
                wspec(C, C), wspec(1, C),                         # c_proj
                wspec(1, C), wspec(1, C),                         # ln_2
                wspec(C, 4 * C), wspec(1, 4 * C),                 # mlp c_fc
                wspec(4 * C, C), wspec(1, C),                     # mlp c_proj
                pl.BlockSpec((1, C), lambda bb, l: (0, 0)),       # ln_f w
                pl.BlockSpec((1, C), lambda bb, l: (0, 0)),       # ln_f b
            ],
            out_specs=pl.BlockSpec((R, C), lambda bb, l: (bb, 0)),
            scratch_shapes=[pltpu.VMEM((R, C), jnp.float32)],     # residual carry
        ),
        compiler_params=pltpu.CompilerParams(
            # TODO(synk): on v7x consider pltpu.CORE_PARALLEL for axis 0 and
            # splitting the layer step into attn/mlp sub-steps for VMEM.
            dimension_semantics=("parallel", "arbitrary"),
            vmem_limit_bytes=vmem_limit),
    )(x2, ln1_w, ln1_b, w_qkv, b_qkv, w_proj, b_proj,
      ln2_w, ln2_b, w_fc, b_fc, w_fc2, b_fc2, lnf_w, lnf_b)
    return out.reshape(B, T, C)


# --------------------------------- reference ---------------------------------

def reference_transformer(x, params, n_head):
    """Pure-JAX reference mirroring the PyTorch Transformer.forward (eval)."""
    B, T, C = x.shape
    H = n_head
    D = C // H

    def layer_norm(z, w, b):
        mu = z.mean(axis=-1, keepdims=True)
        var = ((z - mu) ** 2).mean(axis=-1, keepdims=True)
        return (z - mu) / jnp.sqrt(var + 1e-5) * w + b

    def attention(z, w_attn, b_attn, w_proj, b_proj):
        qkv = z @ w_attn.T + b_attn
        q, k, v = jnp.split(qkv, 3, axis=-1)

        def heads(t):
            return t.reshape(B, T, H, D).transpose(0, 2, 1, 3)

        q, k, v = heads(q), heads(k), heads(v)
        att = jnp.einsum('bhqd,bhkd->bhqk', q, k) / math.sqrt(D)
        mask = jnp.tril(jnp.ones((T, T), dtype=bool))
        att = jnp.where(mask, att, -jnp.inf)
        att = jax.nn.softmax(att, axis=-1)
        y = jnp.einsum('bhqk,bhkd->bhqd', att, v)
        y = y.transpose(0, 2, 1, 3).reshape(B, T, C)
        return y @ w_proj.T + b_proj

    def mlp(z, w_fc, b_fc, w_fc2, b_fc2):
        h = z @ w_fc.T + b_fc
        h = jax.nn.gelu(h, approximate=False)   # nn.GELU() exact (erf)
        return h @ w_fc2.T + b_fc2

    h = x
    n_layer = params['ln1_w'].shape[0]
    for l in range(n_layer):
        h = h + attention(
            layer_norm(h, params['ln1_w'][l], params['ln1_b'][l]),
            params['attn_w'][l], params['attn_b'][l],
            params['proj_w'][l], params['proj_b'][l])
        h = h + mlp(
            layer_norm(h, params['ln2_w'][l], params['ln2_b'][l]),
            params['fc_w'][l], params['fc_b'][l],
            params['fc2_w'][l], params['fc2_b'][l])
    return layer_norm(h, params['lnf_w'], params['lnf_b'])


if __name__ == "__main__":
    # Small GPT-style config: B=2, T=8, n_emb=32, n_head=4, n_layer=2.
    B, T = 2, 8
    n_emb, n_head, n_layer = 32, 4, 2
    C = n_emb

    key = jax.random.PRNGKey(0)
    ks = jax.random.split(key, 16)
    w = 0.05
    params = dict(
        ln1_w=jnp.ones((n_layer, C), jnp.float32)
              + 0.1 * jax.random.normal(ks[1], (n_layer, C)),
        ln1_b=0.05 * jax.random.normal(ks[2], (n_layer, C)),
        attn_w=w * jax.random.normal(ks[3], (n_layer, 3 * C, C)),
        attn_b=w * jax.random.normal(ks[4], (n_layer, 3 * C)),
        proj_w=w * jax.random.normal(ks[5], (n_layer, C, C)),
        proj_b=w * jax.random.normal(ks[6], (n_layer, C)),
        ln2_w=jnp.ones((n_layer, C), jnp.float32)
              + 0.1 * jax.random.normal(ks[7], (n_layer, C)),
        ln2_b=0.05 * jax.random.normal(ks[8], (n_layer, C)),
        fc_w=w * jax.random.normal(ks[9], (n_layer, 4 * C, C)),
        fc_b=w * jax.random.normal(ks[10], (n_layer, 4 * C)),
        fc2_w=w * jax.random.normal(ks[11], (n_layer, C, 4 * C)),
        fc2_b=w * jax.random.normal(ks[12], (n_layer, C)),
        lnf_w=jnp.ones((C,), jnp.float32)
              + 0.1 * jax.random.normal(ks[13], (C,)),
        lnf_b=0.05 * jax.random.normal(ks[14], (C,)),
    )
    x = jax.random.normal(ks[0], (B, T, n_emb), dtype=jnp.float32)

    ref = reference_transformer(x, params, n_head)

    # f32 compute path: tight check (tolerance covers tanh-GELU and the
    # approximate EUP reciprocal in the softmax, both << 1e-3 at these scales).
    out_f32 = transformer_forward(x, params, n_head, compute_dtype=jnp.float32)
    out_f32 = jax.block_until_ready(out_f32)
    assert out_f32.shape == (B, T, n_emb)
    err32 = jnp.max(jnp.abs(out_f32 - ref))
    assert jnp.allclose(out_f32, ref, atol=5e-3, rtol=5e-3), f"f32 max err {err32}"

    # Default bf16-MXU path (full MXU rate on v5e/v6e/v7x): looser check.
    out_bf16 = transformer_forward(x, params, n_head)  # compute_dtype=bf16
    out_bf16 = jax.block_until_ready(out_bf16)
    errbf = jnp.max(jnp.abs(out_bf16 - ref))
    assert jnp.allclose(out_bf16, ref, atol=5e-2, rtol=5e-2), f"bf16 max err {errbf}"

    print("KERNEL_OK")
</pallas_src>

<mosaic_0001>
module attributes {stable_mosaic.version = 11 : i64} {
  func.func @_transformer_kernel(%arg0: i32, %arg1: i32, %arg2: memref<16x32xf32, #tpu.memory_space<vmem>>, %arg3: memref<1x1x32xf32, #tpu.memory_space<vmem>>, %arg4: memref<1x1x32xf32, #tpu.memory_space<vmem>>, %arg5: memref<1x32x96xf32, #tpu.memory_space<vmem>>, %arg6: memref<1x1x96xf32, #tpu.memory_space<vmem>>, %arg7: memref<1x32x32xf32, #tpu.memory_space<vmem>>, %arg8: memref<1x1x32xf32, #tpu.memory_space<vmem>>, %arg9: memref<1x1x32xf32, #tpu.memory_space<vmem>>, %arg10: memref<1x1x32xf32, #tpu.memory_space<vmem>>, %arg11: memref<1x32x128xf32, #tpu.memory_space<vmem>>, %arg12: memref<1x1x128xf32, #tpu.memory_space<vmem>>, %arg13: memref<1x128x32xf32, #tpu.memory_space<vmem>>, %arg14: memref<1x1x32xf32, #tpu.memory_space<vmem>>, %arg15: memref<1x32xf32, #tpu.memory_space<vmem>>, %arg16: memref<1x32xf32, #tpu.memory_space<vmem>>, %arg17: memref<16x32xf32, #tpu.memory_space<vmem>>, %arg18: memref<16x32xf32, #tpu.memory_space<vmem>>) attributes {dimension_semantics = [#tpu.dimension_semantics<parallel>, #tpu.dimension_semantics<arbitrary>], iteration_bounds = array<i64: 1, 2>, scalar_prefetch = 0 : i64, scratch_operands = 1 : i64, tpu.core_type = #tpu.core_type<tc>, window_params = [{transform_indices = @transform_0, window_bounds = array<i64: 16, 32>}, {transform_indices = @transform_1, window_bounds = array<i64: 1, 1, 32>}, {transform_indices = @transform_2, window_bounds = array<i64: 1, 1, 32>}, {transform_indices = @transform_3, window_bounds = array<i64: 1, 32, 96>}, {transform_indices = @transform_4, window_bounds = array<i64: 1, 1, 96>}, {transform_indices = @transform_5, window_bounds = array<i64: 1, 32, 32>}, {transform_indices = @transform_6, window_bounds = array<i64: 1, 1, 32>}, {transform_indices = @transform_7, window_bounds = array<i64: 1, 1, 32>}, {transform_indices = @transform_8, window_bounds = array<i64: 1, 1, 32>}, {transform_indices = @transform_9, window_bounds = array<i64: 1, 32, 128>}, {transform_indices = @transform_10, window_bounds = array<i64: 1, 1, 128>}, {transform_indices = @transform_11, window_bounds = array<i64: 1, 128, 32>}, {transform_indices = @transform_12, window_bounds = array<i64: 1, 1, 32>}, {pipeline_mode = #tpu.pipeline_mode<synchronous>, transform_indices = @transform_13, window_bounds = array<i64: 1, 32>}, {pipeline_mode = #tpu.pipeline_mode<synchronous>, transform_indices = @transform_14, window_bounds = array<i64: 1, 32>}, {transform_indices = @transform_15, window_bounds = array<i64: 16, 32>}]} {
    %c0_i32 = arith.constant 0 : i32
    %0 = arith.cmpi eq, %arg1, %c0_i32 : i32
    %1 = arith.extui %0 : i1 to i32
    %c0_i32_0 = arith.constant 0 : i32
    %2 = arith.cmpi ne, %1, %c0_i32_0 : i32
    scf.if %2 {
      %c0_64 = arith.constant 0 : index
      %c0_65 = arith.constant 0 : index
      %162 = vector.load %arg2[%c0_64, %c0_65] : memref<16x32xf32, #tpu.memory_space<vmem>>, vector<16x32xf32>
      %c0_66 = arith.constant 0 : index
      %c0_67 = arith.constant 0 : index
      %163 = vector.load %arg18[%c0_66, %c0_67] : memref<16x32xf32, #tpu.memory_space<vmem>>, vector<16x32xf32>
      tpu.vector_store %arg18[%c0_66, %c0_67], %162 {strides = array<i32>} : memref<16x32xf32, #tpu.memory_space<vmem>>, vector<16x32xf32>,
    } else {
    }
    %c0 = arith.constant 0 : index
    %c0_1 = arith.constant 0 : index
    %3 = vector.load %arg18[%c0, %c0_1] : memref<16x32xf32, #tpu.memory_space<vmem>>, vector<16x32xf32>
    %c0_2 = arith.constant 0 : index
    %c0_3 = arith.constant 0 : index
    %c0_4 = arith.constant 0 : index
    %4 = vector.load %arg3[%c0_2, %c0_3, %c0_4] : memref<1x1x32xf32, #tpu.memory_space<vmem>>, vector<1x1x32xf32>
    %5 = vector.shape_cast %4 : vector<1x1x32xf32> to vector<1x32xf32>
    %c0_5 = arith.constant 0 : index
    %c0_6 = arith.constant 0 : index
    %c0_7 = arith.constant 0 : index
    %6 = vector.load %arg4[%c0_5, %c0_6, %c0_7] : memref<1x1x32xf32, #tpu.memory_space<vmem>>, vector<1x1x32xf32>
    %7 = vector.shape_cast %6 : vector<1x1x32xf32> to vector<1x32xf32>
    %cst = arith.constant dense<0.000000e+00> : vector<16xf32>
    %8 = vector.multi_reduction <add>, %3, %cst [1] : vector<16x32xf32> to vector<16xf32>
    %9 = vector.shape_cast %8 : vector<16xf32> to vector<16x1xf32>
    %cst_8 = arith.constant 3.200000e+01 : f32
    %10 = vector.broadcast %cst_8 : f32 to vector<16x1xf32>
    %11 = arith.divf %9, %10 : vector<16x1xf32>
    %12 = vector.broadcast %11 : vector<16x1xf32> to vector<16x32xf32>
    %13 = arith.subf %3, %12 : vector<16x32xf32>
    %14 = arith.mulf %13, %13 : vector<16x32xf32>
    %cst_9 = arith.constant dense<0.000000e+00> : vector<16xf32>
    %15 = vector.multi_reduction <add>, %14, %cst_9 [1] : vector<16x32xf32> to vector<16xf32>
    %16 = vector.shape_cast %15 : vector<16xf32> to vector<16x1xf32>
    %cst_10 = arith.constant 3.200000e+01 : f32
    %17 = vector.broadcast %cst_10 : f32 to vector<16x1xf32>
    %18 = arith.divf %16, %17 : vector<16x1xf32>
    %cst_11 = arith.constant 9.99999974E-6 : f32
    %19 = vector.broadcast %cst_11 : f32 to vector<16x1xf32>
    %20 = arith.addf %18, %19 : vector<16x1xf32>
    %21 = math.rsqrt %20 : vector<16x1xf32>
    %22 = vector.broadcast %21 : vector<16x1xf32> to vector<16x32xf32>
    %23 = arith.mulf %13, %22 : vector<16x32xf32>
    %24 = vector.broadcast %5 : vector<1x32xf32> to vector<16x32xf32>
    %25 = arith.mulf %23, %24 : vector<16x32xf32>
    %26 = vector.broadcast %7 : vector<1x32xf32> to vector<16x32xf32>
    %27 = arith.addf %25, %26 : vector<16x32xf32>
    %c0_12 = arith.constant 0 : index
    %c0_13 = arith.constant 0 : index
    %c0_14 = arith.constant 0 : index
    %28 = vector.load %arg5[%c0_12, %c0_13, %c0_14] : memref<1x32x96xf32, #tpu.memory_space<vmem>>, vector<1x32x96xf32>
    %29 = vector.shape_cast %28 : vector<1x32x96xf32> to vector<32x96xf32>
    %cst_15 = arith.constant dense<0.000000e+00> : vector<16x96xf32>
    %30 = tpu.matmul %27, %29, %cst_15 {dimension_numbers = #tpu.dot_dimension_numbers<[1], [0], [0], [1], [0, 0, 1, 1], [], []>} : vector<16x32xf32>, vector<32x96xf32>, vector<16x96xf32> -> vector<16x96xf32>
    %c0_16 = arith.constant 0 : index
    %c0_17 = arith.constant 0 : index
    %c0_18 = arith.constant 0 : index
    %31 = vector.load %arg6[%c0_16, %c0_17, %c0_18] : memref<1x1x96xf32, #tpu.memory_space<vmem>>, vector<1x1x96xf32>
    %32 = vector.shape_cast %31 : vector<1x1x96xf32> to vector<1x96xf32>
    %33 = vector.broadcast %32 : vector<1x96xf32> to vector<16x96xf32>
    %34 = arith.addf %30, %33 : vector<16x96xf32>
    %35 = vector.extract_strided_slice %34 {offsets = [0, 0], sizes = [16, 8], strides = [1, 1]} : vector<16x96xf32> to vector<16x8xf32>
    %36 = vector.shape_cast %35 : vector<16x8xf32> to vector<1x16x8xf32>
    %37 = vector.extract_strided_slice %34 {offsets = [0, 8], sizes = [16, 8], strides = [1, 1]} : vector<16x96xf32> to vector<16x8xf32>
    %38 = vector.shape_cast %37 : vector<16x8xf32> to vector<1x16x8xf32>
    %39 = vector.extract_strided_slice %34 {offsets = [0, 16], sizes = [16, 8], strides = [1, 1]} : vector<16x96xf32> to vector<16x8xf32>
    %40 = vector.shape_cast %39 : vector<16x8xf32> to vector<1x16x8xf32>
    %41 = vector.extract_strided_slice %34 {offsets = [0, 24], sizes = [16, 8], strides = [1, 1]} : vector<16x96xf32> to vector<16x8xf32>
    %42 = vector.shape_cast %41 : vector<16x8xf32> to vector<1x16x8xf32>
    %43 = tpu.concatenate %36, %38, %40, %42 in 0 : vector<1x16x8xf32>, vector<1x16x8xf32>, vector<1x16x8xf32>, vector<1x16x8xf32> -> vector<4x16x8xf32>
    %44 = vector.shape_cast %43 : vector<4x16x8xf32> to vector<8x8x8xf32>
    %45 = vector.extract_strided_slice %34 {offsets = [0, 32], sizes = [16, 8], strides = [1, 1]} : vector<16x96xf32> to vector<16x8xf32>
    %46 = vector.shape_cast %45 : vector<16x8xf32> to vector<1x16x8xf32>
    %47 = vector.extract_strided_slice %34 {offsets = [0, 40], sizes = [16, 8], strides = [1, 1]} : vector<16x96xf32> to vector<16x8xf32>
    %48 = vector.shape_cast %47 : vector<16x8xf32> to vector<1x16x8xf32>
    %49 = vector.extract_strided_slice %34 {offsets = [0, 48], sizes = [16, 8], strides = [1, 1]} : vector<16x96xf32> to vector<16x8xf32>
    %50 = vector.shape_cast %49 : vector<16x8xf32> to vector<1x16x8xf32>
    %51 = vector.extract_strided_slice %34 {offsets = [0, 56], sizes = [16, 8], strides = [1, 1]} : vector<16x96xf32> to vector<16x8xf32>
    %52 = vector.shape_cast %51 : vector<16x8xf32> to vector<1x16x8xf32>
    %53 = tpu.concatenate %46, %48, %50, %52 in 0 : vector<1x16x8xf32>, vector<1x16x8xf32>, vector<1x16x8xf32>, vector<1x16x8xf32> -> vector<4x16x8xf32>
    %54 = vector.shape_cast %53 : vector<4x16x8xf32> to vector<8x8x8xf32>
    %55 = vector.extract_strided_slice %34 {offsets = [0, 64], sizes = [16, 8], strides = [1, 1]} : vector<16x96xf32> to vector<16x8xf32>
    %56 = vector.shape_cast %55 : vector<16x8xf32> to vector<1x16x8xf32>
    %57 = vector.extract_strided_slice %34 {offsets = [0, 72], sizes = [16, 8], strides = [1, 1]} : vector<16x96xf32> to vector<16x8xf32>
    %58 = vector.shape_cast %57 : vector<16x8xf32> to vector<1x16x8xf32>
    %59 = vector.extract_strided_slice %34 {offsets = [0, 80], sizes = [16, 8], strides = [1, 1]} : vector<16x96xf32> to vector<16x8xf32>
    %60 = vector.shape_cast %59 : vector<16x8xf32> to vector<1x16x8xf32>
    %61 = vector.extract_strided_slice %34 {offsets = [0, 88], sizes = [16, 8], strides = [1, 1]} : vector<16x96xf32> to vector<16x8xf32>
    %62 = vector.shape_cast %61 : vector<16x8xf32> to vector<1x16x8xf32>
    %63 = tpu.concatenate %56, %58, %60, %62 in 0 : vector<1x16x8xf32>, vector<1x16x8xf32>, vector<1x16x8xf32>, vector<1x16x8xf32> -> vector<4x16x8xf32>
    %64 = vector.shape_cast %63 : vector<4x16x8xf32> to vector<8x8x8xf32>
    "tpu.trace_start"() <{level = 10 : i32, message = "ntd,nsd->nts"}> : () -> ()
    %cst_19 = arith.constant dense<0.000000e+00> : vector<8x8x8xf32>
    %65 = tpu.matmul %44, %54, %cst_19 {dimension_numbers = #tpu.dot_dimension_numbers<[2], [2], [1], [1], [0, 0, 0, 1, 1, 1], [0], [0]>} : vector<8x8x8xf32>, vector<8x8x8xf32>, vector<8x8x8xf32> -> vector<8x8x8xf32>
    "tpu.trace_stop"() : () -> ()
    %cst_20 = arith.constant 0.353553385 : f32
    %66 = vector.broadcast %cst_20 : f32 to vector<8x8x8xf32>
    %67 = arith.mulf %65, %66 : vector<8x8x8xf32>
    %68 = tpu.iota {dimensions = array<i32: 1>} : vector<1x8x8xi32>
    %69 = tpu.iota {dimensions = array<i32: 2>} : vector<1x8x8xi32>
    %70 = arith.cmpi sge, %68, %69 : vector<1x8x8xi32>
    %cst_21 = arith.constant -1.000000e+30 : f32
    %71 = vector.shape_cast %70 : vector<1x8x8xi1> to vector<1x8x8xi1>
    %72 = vector.broadcast %71 : vector<1x8x8xi1> to vector<8x8x8xi1>
    %73 = vector.broadcast %cst_21 : f32 to vector<8x8x8xf32>
    %74 = arith.select %72, %67, %73 : vector<8x8x8xi1>, vector<8x8x8xf32>
    %cst_22 = arith.constant dense<0xFF800000> : vector<8x8xf32>
    %75 = vector.multi_reduction <maximumf>, %74, %cst_22 [2] : vector<8x8x8xf32> to vector<8x8xf32>
    %76 = vector.shape_cast %75 : vector<8x8xf32> to vector<8x8x1xf32>
    %77 = vector.broadcast %76 : vector<8x8x1xf32> to vector<8x8x8xf32>
    %78 = arith.subf %74, %77 : vector<8x8x8xf32>
    %79 = math.exp %78 : vector<8x8x8xf32>
    %cst_23 = arith.constant dense<0.000000e+00> : vector<8x8xf32>
    %80 = vector.multi_reduction <add>, %79, %cst_23 [2] : vector<8x8x8xf32> to vector<8x8xf32>
    %81 = vector.shape_cast %80 : vector<8x8xf32> to vector<8x8x1xf32>
    %82 = tpu.reciprocal %81 {approx = true} : vector<8x8x1xf32> -> vector<8x8x1xf32>
    %83 = vector.broadcast %82 : vector<8x8x1xf32> to vector<8x8x8xf32>
    %84 = arith.mulf %79, %83 : vector<8x8x8xf32>
    "tpu.trace_start"() <{level = 10 : i32, message = "nts,nsd->ntd"}> : () -> ()
    %cst_24 = arith.constant dense<0.000000e+00> : vector<8x8x8xf32>
    %85 = tpu.matmul %84, %64, %cst_24 {dimension_numbers = #tpu.dot_dimension_numbers<[2], [1], [1], [2], [0, 0, 0, 1, 1, 2], [0], [0]>} : vector<8x8x8xf32>, vector<8x8x8xf32>, vector<8x8x8xf32> -> vector<8x8x8xf32>
    "tpu.trace_stop"() : () -> ()
    %86 = vector.shape_cast %85 : vector<8x8x8xf32> to vector<4x16x8xf32>
    %87 = vector.extract_strided_slice %86 {offsets = [0, 0, 0], sizes = [1, 16, 8], strides = [1, 1, 1]} : vector<4x16x8xf32> to vector<1x16x8xf32>
    %88 = vector.shape_cast %87 : vector<1x16x8xf32> to vector<16x8xf32>
    %89 = vector.extract_strided_slice %86 {offsets = [1, 0, 0], sizes = [1, 16, 8], strides = [1, 1, 1]} : vector<4x16x8xf32> to vector<1x16x8xf32>
    %90 = vector.shape_cast %89 : vector<1x16x8xf32> to vector<16x8xf32>
    %91 = vector.extract_strided_slice %86 {offsets = [2, 0, 0], sizes = [1, 16, 8], strides = [1, 1, 1]} : vector<4x16x8xf32> to vector<1x16x8xf32>
    %92 = vector.shape_cast %91 : vector<1x16x8xf32> to vector<16x8xf32>
    %93 = vector.extract_strided_slice %86 {offsets = [3, 0, 0], sizes = [1, 16, 8], strides = [1, 1, 1]} : vector<4x16x8xf32> to vector<1x16x8xf32>
    %94 = vector.shape_cast %93 : vector<1x16x8xf32> to vector<16x8xf32>
    %95 = tpu.concatenate %88, %90, %92, %94 in 1 : vector<16x8xf32>, vector<16x8xf32>, vector<16x8xf32>, vector<16x8xf32> -> vector<16x32xf32>
    %c0_25 = arith.constant 0 : index
    %c0_26 = arith.constant 0 : index
    %c0_27 = arith.constant 0 : index
    %96 = vector.load %arg7[%c0_25, %c0_26, %c0_27] : memref<1x32x32xf32, #tpu.memory_space<vmem>>, vector<1x32x32xf32>
    %97 = vector.shape_cast %96 : vector<1x32x32xf32> to vector<32x32xf32>
    %cst_28 = arith.constant dense<0.000000e+00> : vector<16x32xf32>
    %98 = tpu.matmul %95, %97, %cst_28 {dimension_numbers = #tpu.dot_dimension_numbers<[1], [0], [0], [1], [0, 0, 1, 1], [], []>} : vector<16x32xf32>, vector<32x32xf32>, vector<16x32xf32> -> vector<16x32xf32>
    %c0_29 = arith.constant 0 : index
    %c0_30 = arith.constant 0 : index
    %c0_31 = arith.constant 0 : index
    %99 = vector.load %arg8[%c0_29, %c0_30, %c0_31] : memref<1x1x32xf32, #tpu.memory_space<vmem>>, vector<1x1x32xf32>
    %100 = vector.shape_cast %99 : vector<1x1x32xf32> to vector<1x32xf32>
    %101 = vector.broadcast %100 : vector<1x32xf32> to vector<16x32xf32>
    %102 = arith.addf %98, %101 : vector<16x32xf32>
    %103 = arith.addf %3, %102 : vector<16x32xf32>
    %c0_32 = arith.constant 0 : index
    %c0_33 = arith.constant 0 : index
    %c0_34 = arith.constant 0 : index
    %104 = vector.load %arg9[%c0_32, %c0_33, %c0_34] : memref<1x1x32xf32, #tpu.memory_space<vmem>>, vector<1x1x32xf32>
    %105 = vector.shape_cast %104 : vector<1x1x32xf32> to vector<1x32xf32>
    %c0_35 = arith.constant 0 : index
    %c0_36 = arith.constant 0 : index
    %c0_37 = arith.constant 0 : index
    %106 = vector.load %arg10[%c0_35, %c0_36, %c0_37] : memref<1x1x32xf32, #tpu.memory_space<vmem>>, vector<1x1x32xf32>
    %107 = vector.shape_cast %106 : vector<1x1x32xf32> to vector<1x32xf32>
    %cst_38 = arith.constant dense<0.000000e+00> : vector<16xf32>
    %108 = vector.multi_reduction <add>, %103, %cst_38 [1] : vector<16x32xf32> to vector<16xf32>
    %109 = vector.shape_cast %108 : vector<16xf32> to vector<16x1xf32>
    %cst_39 = arith.constant 3.200000e+01 : f32
    %110 = vector.broadcast %cst_39 : f32 to vector<16x1xf32>
    %111 = arith.divf %109, %110 : vector<16x1xf32>
    %112 = vector.broadcast %111 : vector<16x1xf32> to vector<16x32xf32>
    %113 = arith.subf %103, %112 : vector<16x32xf32>
    %114 = arith.mulf %113, %113 : vector<16x32xf32>
    %cst_40 = arith.constant dense<0.000000e+00> : vector<16xf32>
    %115 = vector.multi_reduction <add>, %114, %cst_40 [1] : vector<16x32xf32> to vector<16xf32>
    %116 = vector.shape_cast %115 : vector<16xf32> to vector<16x1xf32>
    %cst_41 = arith.constant 3.200000e+01 : f32
    %117 = vector.broadcast %cst_41 : f32 to vector<16x1xf32>
    %118 = arith.divf %116, %117 : vector<16x1xf32>
    %cst_42 = arith.constant 9.99999974E-6 : f32
    %119 = vector.broadcast %cst_42 : f32 to vector<16x1xf32>
    %120 = arith.addf %118, %119 : vector<16x1xf32>
    %121 = math.rsqrt %120 : vector<16x1xf32>
    %122 = vector.broadcast %121 : vector<16x1xf32> to vector<16x32xf32>
    %123 = arith.mulf %113, %122 : vector<16x32xf32>
    %124 = vector.broadcast %105 : vector<1x32xf32> to vector<16x32xf32>
    %125 = arith.mulf %123, %124 : vector<16x32xf32>
    %126 = vector.broadcast %107 : vector<1x32xf32> to vector<16x32xf32>
    %127 = arith.addf %125, %126 : vector<16x32xf32>
    %c0_43 = arith.constant 0 : index
    %c0_44 = arith.constant 0 : index
    %c0_45 = arith.constant 0 : index
    %128 = vector.load %arg11[%c0_43, %c0_44, %c0_45] : memref<1x32x128xf32, #tpu.memory_space<vmem>>, vector<1x32x128xf32>
    %129 = vector.shape_cast %128 : vector<1x32x128xf32> to vector<32x128xf32>
    %cst_46 = arith.constant dense<0.000000e+00> : vector<16x128xf32>
    %130 = tpu.matmul %127, %129, %cst_46 {dimension_numbers = #tpu.dot_dimension_numbers<[1], [0], [0], [1], [0, 0, 1, 1], [], []>} : vector<16x32xf32>, vector<32x128xf32>, vector<16x128xf32> -> vector<16x128xf32>
    %c0_47 = arith.constant 0 : index
    %c0_48 = arith.constant 0 : index
    %c0_49 = arith.constant 0 : index
    %131 = vector.load %arg12[%c0_47, %c0_48, %c0_49] : memref<1x1x128xf32, #tpu.memory_space<vmem>>, vector<1x1x128xf32>
    %132 = vector.shape_cast %131 : vector<1x1x128xf32> to vector<1x128xf32>
    %133 = vector.broadcast %132 : vector<1x128xf32> to vector<16x128xf32>
    %134 = arith.addf %130, %133 : vector<16x128xf32>
    %cst_50 = arith.constant 5.000000e-01 : f32
    %135 = vector.broadcast %cst_50 : f32 to vector<16x128xf32>
    %136 = arith.mulf %135, %134 : vector<16x128xf32>
    %cst_51 = arith.constant 4.471500e-02 : f32
    %137 = vector.broadcast %cst_51 : f32 to vector<16x128xf32>
    %138 = arith.mulf %137, %134 : vector<16x128xf32>
    %139 = arith.mulf %138, %134 : vector<16x128xf32>
    %140 = arith.mulf %139, %134 : vector<16x128xf32>
    %141 = arith.addf %134, %140 : vector<16x128xf32>
    %cst_52 = arith.constant 0.797884583 : f32
    %142 = vector.broadcast %cst_52 : f32 to vector<16x128xf32>
    %143 = arith.mulf %142, %141 : vector<16x128xf32>
    %144 = math.tanh %143 : vector<16x128xf32>
    %cst_53 = arith.constant 1.000000e+00 : f32
    %145 = vector.broadcast %cst_53 : f32 to vector<16x128xf32>
    %146 = arith.addf %145, %144 : vector<16x128xf32>
    %147 = arith.mulf %136, %146 : vector<16x128xf32>
    %c0_54 = arith.constant 0 : index
    %c0_55 = arith.constant 0 : index
    %c0_56 = arith.constant 0 : index
    %148 = vector.load %arg13[%c0_54, %c0_55, %c0_56] : memref<1x128x32xf32, #tpu.memory_space<vmem>>, vector<1x128x32xf32>
    %149 = vector.shape_cast %148 : vector<1x128x32xf32> to vector<128x32xf32>
    %cst_57 = arith.constant dense<0.000000e+00> : vector<16x32xf32>
    %150 = tpu.matmul %147, %149, %cst_57 {dimension_numbers = #tpu.dot_dimension_numbers<[1], [0], [0], [1], [0, 0, 1, 1], [], []>} : vector<16x128xf32>, vector<128x32xf32>, vector<16x32xf32> -> vector<16x32xf32>
    %c0_58 = arith.constant 0 : index
    %c0_59 = arith.constant 0 : index
    %c0_60 = arith.constant 0 : index
    %151 = vector.load %arg14[%c0_58, %c0_59, %c0_60] : memref<1x1x32xf32, #tpu.memory_space<vmem>>, vector<1x1x32xf32>
    %152 = vector.shape_cast %151 : vector<1x1x32xf32> to vector<1x32xf32>
    %153 = vector.broadcast %152 : vector<1x32xf32> to vector<16x32xf32>
    %154 = arith.addf %150, %153 : vector<16x32xf32>
    %155 = arith.addf %103, %154 : vector<16x32xf32>
    %c1_i32 = arith.constant 1 : i32
    %156 = arith.cmpi slt, %arg1, %c1_i32 : i32
    %157 = arith.extui %156 : i1 to i32
    %c0_i32_61 = arith.constant 0 : i32
    %158 = arith.cmpi ne, %157, %c0_i32_61 : i32
    scf.if %158 {
      %c0_64 = arith.constant 0 : index
      %c0_65 = arith.constant 0 : index
      %162 = vector.load %arg18[%c0_64, %c0_65] : memref<16x32xf32, #tpu.memory_space<vmem>>, vector<16x32xf32>
      tpu.vector_store %arg18[%c0_64, %c0_65], %155 {strides = array<i32>} : memref<16x32xf32, #tpu.memory_space<vmem>>, vector<16x32xf32>,
    } else {
    }
    %c1_i32_62 = arith.constant 1 : i32
    %159 = arith.cmpi eq, %arg1, %c1_i32_62 : i32
    %160 = arith.extui %159 : i1 to i32
    %c0_i32_63 = arith.constant 0 : i32
    %161 = arith.cmpi ne, %160, %c0_i32_63 : i32
    scf.if %161 {
      %c0_64 = arith.constant 0 : index
      %c0_65 = arith.constant 0 : index
      %162 = vector.load %arg15[%c0_64, %c0_65] : memref<1x32xf32, #tpu.memory_space<vmem>>, vector<1x32xf32>
      %c0_66 = arith.constant 0 : index
      %c0_67 = arith.constant 0 : index
      %163 = vector.load %arg16[%c0_66, %c0_67] : memref<1x32xf32, #tpu.memory_space<vmem>>, vector<1x32xf32>
      %cst_68 = arith.constant dense<0.000000e+00> : vector<16xf32>
      %164 = vector.multi_reduction <add>, %155, %cst_68 [1] : vector<16x32xf32> to vector<16xf32>
      %165 = vector.shape_cast %164 : vector<16xf32> to vector<16x1xf32>
      %cst_69 = arith.constant 3.200000e+01 : f32
      %166 = vector.broadcast %cst_69 : f32 to vector<16x1xf32>
      %167 = arith.divf %165, %166 : vector<16x1xf32>
      %168 = vector.broadcast %167 : vector<16x1xf32> to vector<16x32xf32>
      %169 = arith.subf %155, %168 : vector<16x32xf32>
      %170 = arith.mulf %169, %169 : vector<16x32xf32>
      %cst_70 = arith.constant dense<0.000000e+00> : vector<16xf32>
      %171 = vector.multi_reduction <add>, %170, %cst_70 [1] : vector<16x32xf32> to vector<16xf32>
      %172 = vector.shape_cast %171 : vector<16xf32> to vector<16x1xf32>
      %cst_71 = arith.constant 3.200000e+01 : f32
      %173 = vector.broadcast %cst_71 : f32 to vector<16x1xf32>
      %174 = arith.divf %172, %173 : vector<16x1xf32>
      %cst_72 = arith.constant 9.99999974E-6 : f32
      %175 = vector.broadcast %cst_72 : f32 to vector<16x1xf32>
      %176 = arith.addf %174, %175 : vector<16x1xf32>
      %177 = math.rsqrt %176 : vector<16x1xf32>
      %178 = vector.broadcast %177 : vector<16x1xf32> to vector<16x32xf32>
      %179 = arith.mulf %169, %178 : vector<16x32xf32>
      %180 = vector.broadcast %162 : vector<1x32xf32> to vector<16x32xf32>
      %181 = arith.mulf %179, %180 : vector<16x32xf32>
      %182 = vector.broadcast %163 : vector<1x32xf32> to vector<16x32xf32>
      %183 = arith.addf %181, %182 : vector<16x32xf32>
      %c0_73 = arith.constant 0 : index
      %c0_74 = arith.constant 0 : index
      %184 = vector.load %arg17[%c0_73, %c0_74] : memref<16x32xf32, #tpu.memory_space<vmem>>, vector<16x32xf32>
      tpu.vector_store %arg17[%c0_73, %c0_74], %183 {strides = array<i32>} : memref<16x32xf32, #tpu.memory_space<vmem>>, vector<16x32xf32>,
    } else {
    }
    return
  }
  func.func @transform_0(%arg0: i32, %arg1: i32) -> (i32, i32) {
    %c0_i32 = arith.constant 0 : i32
    %c0_i32_0 = arith.constant 0 : i32
    return %arg0, %c0_i32 : i32, i32
  }
  func.func @transform_1(%arg0: i32, %arg1: i32) -> (i32, i32, i32) {
    %c0_i32 = arith.constant 0 : i32
    %c0_i32_0 = arith.constant 0 : i32
    %c0_i32_1 = arith.constant 0 : i32
    return %arg1, %c0_i32, %c0_i32_0 : i32, i32, i32
  }
  func.func @transform_2(%arg0: i32, %arg1: i32) -> (i32, i32, i32) {
    %c0_i32 = arith.constant 0 : i32
    %c0_i32_0 = arith.constant 0 : i32
    %c0_i32_1 = arith.constant 0 : i32
    return %arg1, %c0_i32, %c0_i32_0 : i32, i32, i32
  }
  func.func @transform_3(%arg0: i32, %arg1: i32) -> (i32, i32, i32) {
    %c0_i32 = arith.constant 0 : i32
    %c0_i32_0 = arith.constant 0 : i32
    %c0_i32_1 = arith.constant 0 : i32
    return %arg1, %c0_i32, %c0_i32_0 : i32, i32, i32
  }
  func.func @transform_4(%arg0: i32, %arg1: i32) -> (i32, i32, i32) {
    %c0_i32 = arith.constant 0 : i32
    %c0_i32_0 = arith.constant 0 : i32
    %c0_i32_1 = arith.constant 0 : i32
    return %arg1, %c0_i32, %c0_i32_0 : i32, i32, i32
  }
  func.func @transform_5(%arg0: i32, %arg1: i32) -> (i32, i32, i32) {
    %c0_i32 = arith.constant 0 : i32
    %c0_i32_0 = arith.constant 0 : i32
    %c0_i32_1 = arith.constant 0 : i32
    return %arg1, %c0_i32, %c0_i32_0 : i32, i32, i32
  }
  func.func @transform_6(%arg0: i32, %arg1: i32) -> (i32, i32, i32) {
    %c0_i32 = arith.constant 0 : i32
    %c0_i32_0 = arith.constant 0 : i32
    %c0_i32_1 = arith.constant 0 : i32
    return %arg1, %c0_i32, %c0_i32_0 : i32, i32, i32
  }
  func.func @transform_7(%arg0: i32, %arg1: i32) -> (i32, i32, i32) {
    %c0_i32 = arith.constant 0 : i32
    %c0_i32_0 = arith.constant 0 : i32
    %c0_i32_1 = arith.constant 0 : i32
    return %arg1, %c0_i32, %c0_i32_0 : i32, i32, i32
  }
  func.func @transform_8(%arg0: i32, %arg1: i32) -> (i32, i32, i32) {
    %c0_i32 = arith.constant 0 : i32
    %c0_i32_0 = arith.constant 0 : i32
    %c0_i32_1 = arith.constant 0 : i32
    return %arg1, %c0_i32, %c0_i32_0 : i32, i32, i32
  }
  func.func @transform_9(%arg0: i32, %arg1: i32) -> (i32, i32, i32) {
    %c0_i32 = arith.constant 0 : i32
    %c0_i32_0 = arith.constant 0 : i32
    %c0_i32_1 = arith.constant 0 : i32
    return %arg1, %c0_i32, %c0_i32_0 : i32, i32, i32
  }
  func.func @transform_10(%arg0: i32, %arg1: i32) -> (i32, i32, i32) {
    %c0_i32 = arith.constant 0 : i32
    %c0_i32_0 = arith.constant 0 : i32
    %c0_i32_1 = arith.constant 0 : i32
    return %arg1, %c0_i32, %c0_i32_0 : i32, i32, i32
  }
  func.func @transform_11(%arg0: i32, %arg1: i32) -> (i32, i32, i32) {
    %c0_i32 = arith.constant 0 : i32
    %c0_i32_0 = arith.constant 0 : i32
    %c0_i32_1 = arith.constant 0 : i32
    return %arg1, %c0_i32, %c0_i32_0 : i32, i32, i32
  }
  func.func @transform_12(%arg0: i32, %arg1: i32) -> (i32, i32, i32) {
    %c0_i32 = arith.constant 0 : i32
    %c0_i32_0 = arith.constant 0 : i32
    %c0_i32_1 = arith.constant 0 : i32
    return %arg1, %c0_i32, %c0_i32_0 : i32, i32, i32
  }
  func.func @transform_13(%arg0: i32, %arg1: i32) -> (i32, i32) {
    %c0_i32 = arith.constant 0 : i32
    %c0_i32_0 = arith.constant 0 : i32
    %c0_i32_1 = arith.constant 0 : i32
    return %c0_i32, %c0_i32_0 : i32, i32
  }
  func.func @transform_14(%arg0: i32, %arg1: i32) -> (i32, i32) {
    %c0_i32 = arith.constant 0 : i32
    %c0_i32_0 = arith.constant 0 : i32
    %c0_i32_1 = arith.constant 0 : i32
    return %c0_i32, %c0_i32_0 : i32, i32
  }
  func.func @transform_15(%arg0: i32, %arg1: i32) -> (i32, i32) {
    %c0_i32 = arith.constant 0 : i32
    %c0_i32_0 = arith.constant 0 : i32
    return %arg0, %c0_i32 : i32, i32
  }
}

</mosaic_0001>

<llo_original>
// kernel: tpu_custom_call.1
$region0: #{tpu_custom_call.1}
  #allocation0 [shape = 'u32[]', space=smem, size = 0x4, offset = 0x4, fixed_abs, tag = 'smem constant byte address 0x4 - core index']
  #allocation1 [shape = 'u32[144,128]{1,0:T(1,128)}', space=vmem, size = 0x12000, scoped, tag = 'internal scratch']
  #allocation2 [shape = 'f32[16,32]{1,0:T(8,128)}', space=vmem, size = 0x2000, scoped, tag = 'scratch operand']
  %s0 = inlined_call_operand.vmem [shape: f32[16,32], index: 0, kind: input, shape index: {}]
  %s1 = inlined_call_operand.vmem [shape: f32[2,1,32], index: 1, kind: input, shape index: {}]
  %s2 = inlined_call_operand.vmem [shape: f32[2,1,32], index: 2, kind: input, shape index: {}]
  %s3 = inlined_call_operand.vmem [shape: f32[2,32,96], index: 3, kind: input, shape index: {}]
  %s4 = inlined_call_operand.vmem [shape: f32[2,1,96], index: 4, kind: input, shape index: {}]
  %s5 = inlined_call_operand.vmem [shape: f32[2,32,32], index: 5, kind: input, shape index: {}]
  %s6 = inlined_call_operand.vmem [shape: f32[2,1,32], index: 6, kind: input, shape index: {}]
  %s7 = inlined_call_operand.vmem [shape: f32[2,1,32], index: 7, kind: input, shape index: {}]
  %s8 = inlined_call_operand.vmem [shape: f32[2,1,32], index: 8, kind: input, shape index: {}]
  %s9 = inlined_call_operand.vmem [shape: f32[2,32,128], index: 9, kind: input, shape index: {}]
  %s10 = inlined_call_operand.vmem [shape: f32[2,1,128], index: 10, kind: input, shape index: {}]
  %s11 = inlined_call_operand.vmem [shape: f32[2,128,32], index: 11, kind: input, shape index: {}]
  %s12 = inlined_call_operand.vmem [shape: f32[2,1,32], index: 12, kind: input, shape index: {}]
  %s13 = inlined_call_operand.vmem [shape: f32[1,32], index: 13, kind: input, shape index: {}]
  %s14 = inlined_call_operand.vmem [shape: f32[1,32], index: 14, kind: input, shape index: {}]
  %s15 = inlined_call_operand.hbm [shape: f32[16,32], index: 15, kind: output, shape index: {}]
  %s16 = sld [smem:[#allocation0]]
  $region105: #{tpu_custom_call.1} parent=0
    _
  %s18 = ssub.s32 1, %s16
  %s19 = scalar_select 0, %s18, %s16
  $region1: #{tpu_custom_call.1} parent=0
    #allocation3 [shape = 'u8[8192]{0}', space=vmem, size = 0x2000, scoped, tag = 'output window, operand 0, single buffered']
    #allocation4 [shape = 's32[2]{0}', space=sflag, size = 0x8, scoped, tag = 'scoped memory for tpu_custom_call.1']
    %20 = vsyncpa [#allocation4], 0
    loop: start=0, step=1, limit=4
    $region2: #{tpu_custom_call.1} parent=1 // loop_pre_header
      _
    $region3: #{tpu_custom_call.1} parent=1 // loop_header
      %s22 = sphi 0, %s26
      %p23 = scmp.ge.s32.totalorder %s22, 4
      %s29 = sphi 0, %s41
      %s30 = sphi 0, %s37
      %s31 = sphi 0, %s29
      %s32 = sphi 0, %s30
      %s33 = sphi 0, %s31
      %s34 = sphi 0, %s32
      %s44 = sphi 0, %s46
      %s47 = sphi 0, %s44
      %s48 = sphi 0, %s47
      %s64 = sphi 0, %s48
      %s70 = sphi 0, %s72
      %s73 = sphi 0, %s70
      %s74 = sphi 0, %s73
      %s90 = sphi 0, %s74
      %s96 = sphi 0, %s98
      %s99 = sphi 0, %s96
      %s100 = sphi 0, %s99
      %s116 = sphi 0, %s100
      %s122 = sphi 0, %s124
      %s125 = sphi 0, %s122
      %s126 = sphi 0, %s125
      %s142 = sphi 0, %s126
      %s148 = sphi 0, %s150
      %s151 = sphi 0, %s148
      %s152 = sphi 0, %s151
      %s168 = sphi 0, %s152
      %s174 = sphi 0, %s176
      %s177 = sphi 0, %s174
      %s178 = sphi 0, %s177
      %s194 = sphi 0, %s178
      %s200 = sphi 0, %s202
      %s203 = sphi 0, %s200
      %s204 = sphi 0, %s203
      %s220 = sphi 0, %s204
      %s226 = sphi 0, %s228
      %s229 = sphi 0, %s226
      %s230 = sphi 0, %s229
      %s246 = sphi 0, %s230
      %s252 = sphi 0, %s254
      %s255 = sphi 0, %s252
      %s256 = sphi 0, %s255
      %s272 = sphi 0, %s256
      %s278 = sphi 0, %s280
      %s281 = sphi 0, %s278
      %s282 = sphi 0, %s281
      %s298 = sphi 0, %s282
      %s304 = sphi 0, %s306
      %s307 = sphi 0, %s304
      %s308 = sphi 0, %s307
      %s324 = sphi 0, %s308
      %s330 = sphi 0, %s332
      %s333 = sphi 0, %s330
      %s334 = sphi 0, %s333
      %s350 = sphi 0, %s334
      %s356 = sphi 0, %s358
      %s359 = sphi 0, %s356
      %s360 = sphi 0, %s359
      %s376 = sphi 0, %s360
      %s380 = sphi 0, %s380
      %s382 = sphi 0, %s380
      %s383 = sphi 0, %s382
      %s397 = sphi 0, %s383
      %s401 = sphi 0, %s401
      %s403 = sphi 0, %s401
      %s404 = sphi 0, %s403
      %s418 = sphi 0, %s404
      %s424 = sphi 0, %s426
      %s427 = sphi 0, %s424
      %s428 = sphi 0, %s427
      %s444 = sphi 0, %s428
    $region4: #{tpu_custom_call.1} parent=1 // loop_header_branch
      %25 = sbr.rel (%p23) target = $region8
    $region5: #{tpu_custom_call.1} parent=1 // loop_body
      %s27 = ssub.s32 %s22, 1
      %s28 = ssub.s32 %s22, 2
      %s35 = sadd.s32 1, %s30
      %p36 = scmp.ge.s32.totalorder %s35, 2
      %s37 = scalar_select %p36, 0, %s35
      %s38 = sadd.s32 1, %s29
      %s39 = scalar_select %p36, %s38, %s29
      %p40 = scmp.ge.s32.totalorder %s39, 1
      %s41 = scalar_select %p40, 0, %s39
      %s42 = ssub.s32 %s29, %s41
      %p43 = scmp.eq.s32.totalorder %s42, 0
      %s45 = sadd.s32 %s44, 1
      %s46 = scalar_select %p43, %s44, %s45
      %p49 = pneg %p43
      %p50 = scmp.eq.s32.totalorder %s22, 1
      %p51 = por %p49, %p50
      %p52 = scmp.ne.s32.totalorder %s44, %s47
      %p53 = scmp.eq.s32.totalorder %s22, 0
      %p54 = por %p52, %p53
      %p55 = scmp.ne.s32.totalorder %s44, %s47
      %p56 = scmp.eq.s32.totalorder %s27, 1
      %p57 = por %p55, %p56
      %p58 = scmp.ne.s32.totalorder %s47, %s48
      %p59 = scmp.eq.s32.totalorder %s27, 0
      %p60 = por %p58, %p59
      %p61 = scmp.ne.s32.totalorder %s47, %s48
      %p62 = scmp.eq.s32.totalorder %s28, 1
      %p63 = por %p61, %p62
      %p65 = scmp.ne.s32.totalorder %s48, %s64
      %p66 = scmp.eq.s32.totalorder %s28, 0
      %p67 = por %p65, %p66
      %s68 = ssub.s32 %s30, %s37
      %p69 = scmp.eq.s32.totalorder %s68, 0
      %s71 = sadd.s32 %s70, 1
      %s72 = scalar_select %p69, %s70, %s71
      %p75 = pneg %p69
      %p76 = scmp.eq.s32.totalorder %s22, 1
      %p77 = por %p75, %p76
      %p78 = scmp.ne.s32.totalorder %s70, %s73
      %p79 = scmp.eq.s32.totalorder %s22, 0
      %p80 = por %p78, %p79
      %p81 = scmp.ne.s32.totalorder %s70, %s73
      %p82 = scmp.eq.s32.totalorder %s27, 1
      %p83 = por %p81, %p82
      %p84 = scmp.ne.s32.totalorder %s73, %s74
      %p85 = scmp.eq.s32.totalorder %s27, 0
      %p86 = por %p84, %p85
      %p87 = scmp.ne.s32.totalorder %s73, %s74
      %p88 = scmp.eq.s32.totalorder %s28, 1
      %p89 = por %p87, %p88
      %p91 = scmp.ne.s32.totalorder %s74, %s90
      %p92 = scmp.eq.s32.totalorder %s28, 0
      %p93 = por %p91, %p92
      %s94 = ssub.s32 %s30, %s37
      %p95 = scmp.eq.s32.totalorder %s94, 0
      %s97 = sadd.s32 %s96, 1
      %s98 = scalar_select %p95, %s96, %s97
      %p101 = pneg %p95
      %p102 = scmp.eq.s32.totalorder %s22, 1
      %p103 = por %p101, %p102
      %p104 = scmp.ne.s32.totalorder %s96, %s99
      %p105 = scmp.eq.s32.totalorder %s22, 0
      %p106 = por %p104, %p105
      %p107 = scmp.ne.s32.totalorder %s96, %s99
      %p108 = scmp.eq.s32.totalorder %s27, 1
      %p109 = por %p107, %p108
      %p110 = scmp.ne.s32.totalorder %s99, %s100
      %p111 = scmp.eq.s32.totalorder %s27, 0
      %p112 = por %p110, %p111
      %p113 = scmp.ne.s32.totalorder %s99, %s100
      %p114 = scmp.eq.s32.totalorder %s28, 1
      %p115 = por %p113, %p114
      %p117 = scmp.ne.s32.totalorder %s100, %s116
      %p118 = scmp.eq.s32.totalorder %s28, 0
      %p119 = por %p117, %p118
      %s120 = ssub.s32 %s30, %s37
      %p121 = scmp.eq.s32.totalorder %s120, 0
      %s123 = sadd.s32 %s122, 1
      %s124 = scalar_select %p121, %s122, %s123
      %p127 = pneg %p121
      %p128 = scmp.eq.s32.totalorder %s22, 1
      %p129 = por %p127, %p128
      %p130 = scmp.ne.s32.totalorder %s122, %s125
      %p131 = scmp.eq.s32.totalorder %s22, 0
      %p132 = por %p130, %p131
      %p133 = scmp.ne.s32.totalorder %s122, %s125
      %p134 = scmp.eq.s32.totalorder %s27, 1
      %p135 = por %p133, %p134
      %p136 = scmp.ne.s32.totalorder %s125, %s126
      %p137 = scmp.eq.s32.totalorder %s27, 0
      %p138 = por %p136, %p137
      %p139 = scmp.ne.s32.totalorder %s125, %s126
      %p140 = scmp.eq.s32.totalorder %s28, 1
      %p141 = por %p139, %p140
      %p143 = scmp.ne.s32.totalorder %s126, %s142
      %p144 = scmp.eq.s32.totalorder %s28, 0
      %p145 = por %p143, %p144
      %s146 = ssub.s32 %s30, %s37
      %p147 = scmp.eq.s32.totalorder %s146, 0
      %s149 = sadd.s32 %s148, 1
      %s150 = scalar_select %p147, %s148, %s149
      %p153 = pneg %p147
      %p154 = scmp.eq.s32.totalorder %s22, 1
      %p155 = por %p153, %p154
      %p156 = scmp.ne.s32.totalorder %s148, %s151
      %p157 = scmp.eq.s32.totalorder %s22, 0
      %p158 = por %p156, %p157
      %p159 = scmp.ne.s32.totalorder %s148, %s151
      %p160 = scmp.eq.s32.totalorder %s27, 1
      %p161 = por %p159, %p160
      %p162 = scmp.ne.s32.totalorder %s151, %s152
      %p163 = scmp.eq.s32.totalorder %s27, 0
      %p164 = por %p162, %p163
      %p165 = scmp.ne.s32.totalorder %s151, %s152
      %p166 = scmp.eq.s32.totalorder %s28, 1
      %p167 = por %p165, %p166
      %p169 = scmp.ne.s32.totalorder %s152, %s168
      %p170 = scmp.eq.s32.totalorder %s28, 0
      %p171 = por %p169, %p170
      %s172 = ssub.s32 %s30, %s37
      %p173 = scmp.eq.s32.totalorder %s172, 0
      %s175 = sadd.s32 %s174, 1
      %s176 = scalar_select %p173, %s174, %s175
      %p179 = pneg %p173
      %p180 = scmp.eq.s32.totalorder %s22, 1
      %p181 = por %p179, %p180
      %p182 = scmp.ne.s32.totalorder %s174, %s177
      %p183 = scmp.eq.s32.totalorder %s22, 0
      %p184 = por %p182, %p183
      %p185 = scmp.ne.s32.totalorder %s174, %s177
      %p186 = scmp.eq.s32.totalorder %s27, 1
      %p187 = por %p185, %p186
      %p188 = scmp.ne.s32.totalorder %s177, %s178
      %p189 = scmp.eq.s32.totalorder %s27, 0
      %p190 = por %p188, %p189
      %p191 = scmp.ne.s32.totalorder %s177, %s178
      %p192 = scmp.eq.s32.totalorder %s28, 1
      %p193 = por %p191, %p192
      %p195 = scmp.ne.s32.totalorder %s178, %s194
      %p196 = scmp.eq.s32.totalorder %s28, 0
      %p197 = por %p195, %p196
      %s198 = ssub.s32 %s30, %s37
      %p199 = scmp.eq.s32.totalorder %s198, 0
      %s201 = sadd.s32 %s200, 1
      %s202 = scalar_select %p199, %s200, %s201
      %p205 = pneg %p199
      %p206 = scmp.eq.s32.totalorder %s22, 1
      %p207 = por %p205, %p206
      %p208 = scmp.ne.s32.totalorder %s200, %s203
      %p209 = scmp.eq.s32.totalorder %s22, 0
      %p210 = por %p208, %p209
      %p211 = scmp.ne.s32.totalorder %s200, %s203
      %p212 = scmp.eq.s32.totalorder %s27, 1
      %p213 = por %p211, %p212
      %p214 = scmp.ne.s32.totalorder %s203, %s204
      %p215 = scmp.eq.s32.totalorder %s27, 0
      %p216 = por %p214, %p215
      %p217 = scmp.ne.s32.totalorder %s203, %s204
      %p218 = scmp.eq.s32.totalorder %s28, 1
      %p219 = por %p217, %p218
      %p221 = scmp.ne.s32.totalorder %s204, %s220
      %p222 = scmp.eq.s32.totalorder %s28, 0
      %p223 = por %p221, %p222
      %s224 = ssub.s32 %s30, %s37
      %p225 = scmp.eq.s32.totalorder %s224, 0
      %s227 = sadd.s32 %s226, 1
      %s228 = scalar_select %p225, %s226, %s227
      %p231 = pneg %p225
      %p232 = scmp.eq.s32.totalorder %s22, 1
      %p233 = por %p231, %p232
      %p234 = scmp.ne.s32.totalorder %s226, %s229
      %p235 = scmp.eq.s32.totalorder %s22, 0
      %p236 = por %p234, %p235
      %p237 = scmp.ne.s32.totalorder %s226, %s229
      %p238 = scmp.eq.s32.totalorder %s27, 1
      %p239 = por %p237, %p238
      %p240 = scmp.ne.s32.totalorder %s229, %s230
      %p241 = scmp.eq.s32.totalorder %s27, 0
      %p242 = por %p240, %p241
      %p243 = scmp.ne.s32.totalorder %s229, %s230
      %p244 = scmp.eq.s32.totalorder %s28, 1
      %p245 = por %p243, %p244
      %p247 = scmp.ne.s32.totalorder %s230, %s246
      %p248 = scmp.eq.s32.totalorder %s28, 0
      %p249 = por %p247, %p248
      %s250 = ssub.s32 %s30, %s37
      %p251 = scmp.eq.s32.totalorder %s250, 0
      %s253 = sadd.s32 %s252, 1
      %s254 = scalar_select %p251, %s252, %s253
      %p257 = pneg %p251
      %p258 = scmp.eq.s32.totalorder %s22, 1
      %p259 = por %p257, %p258
      %p260 = scmp.ne.s32.totalorder %s252, %s255
      %p261 = scmp.eq.s32.totalorder %s22, 0
      %p262 = por %p260, %p261
      %p263 = scmp.ne.s32.totalorder %s252, %s255
      %p264 = scmp.eq.s32.totalorder %s27, 1
      %p265 = por %p263, %p264
      %p266 = scmp.ne.s32.totalorder %s255, %s256
      %p267 = scmp.eq.s32.totalorder %s27, 0
      %p268 = por %p266, %p267
      %p269 = scmp.ne.s32.totalorder %s255, %s256
      %p270 = scmp.eq.s32.totalorder %s28, 1
      %p271 = por %p269, %p270
      %p273 = scmp.ne.s32.totalorder %s256, %s272
      %p274 = scmp.eq.s32.totalorder %s28, 0
      %p275 = por %p273, %p274
      %s276 = ssub.s32 %s30, %s37
      %p277 = scmp.eq.s32.totalorder %s276, 0
      %s279 = sadd.s32 %s278, 1
      %s280 = scalar_select %p277, %s278, %s279
      %p283 = pneg %p277
      %p284 = scmp.eq.s32.totalorder %s22, 1
      %p285 = por %p283, %p284
      %p286 = scmp.ne.s32.totalorder %s278, %s281
      %p287 = scmp.eq.s32.totalorder %s22, 0
      %p288 = por %p286, %p287
      %p289 = scmp.ne.s32.totalorder %s278, %s281
      %p290 = scmp.eq.s32.totalorder %s27, 1
      %p291 = por %p289, %p290
      %p292 = scmp.ne.s32.totalorder %s281, %s282
      %p293 = scmp.eq.s32.totalorder %s27, 0
      %p294 = por %p292, %p293
      %p295 = scmp.ne.s32.totalorder %s281, %s282
      %p296 = scmp.eq.s32.totalorder %s28, 1
      %p297 = por %p295, %p296
      %p299 = scmp.ne.s32.totalorder %s282, %s298
      %p300 = scmp.eq.s32.totalorder %s28, 0
      %p301 = por %p299, %p300
      %s302 = ssub.s32 %s30, %s37
      %p303 = scmp.eq.s32.totalorder %s302, 0
      %s305 = sadd.s32 %s304, 1
      %s306 = scalar_select %p303, %s304, %s305
      %p309 = pneg %p303
      %p310 = scmp.eq.s32.totalorder %s22, 1
      %p311 = por %p309, %p310
      %p312 = scmp.ne.s32.totalorder %s304, %s307
      %p313 = scmp.eq.s32.totalorder %s22, 0
      %p314 = por %p312, %p313
      %p315 = scmp.ne.s32.totalorder %s304, %s307
      %p316 = scmp.eq.s32.totalorder %s27, 1
      %p317 = por %p315, %p316
      %p318 = scmp.ne.s32.totalorder %s307, %s308
      %p319 = scmp.eq.s32.totalorder %s27, 0
      %p320 = por %p318, %p319
      %p321 = scmp.ne.s32.totalorder %s307, %s308
      %p322 = scmp.eq.s32.totalorder %s28, 1
      %p323 = por %p321, %p322
      %p325 = scmp.ne.s32.totalorder %s308, %s324
      %p326 = scmp.eq.s32.totalorder %s28, 0
      %p327 = por %p325, %p326
      %s328 = ssub.s32 %s30, %s37
      %p329 = scmp.eq.s32.totalorder %s328, 0
      %s331 = sadd.s32 %s330, 1
      %s332 = scalar_select %p329, %s330, %s331
      %p335 = pneg %p329
      %p336 = scmp.eq.s32.totalorder %s22, 1
      %p337 = por %p335, %p336
      %p338 = scmp.ne.s32.totalorder %s330, %s333
      %p339 = scmp.eq.s32.totalorder %s22, 0
      %p340 = por %p338, %p339
      %p341 = scmp.ne.s32.totalorder %s330, %s333
      %p342 = scmp.eq.s32.totalorder %s27, 1
      %p343 = por %p341, %p342
      %p344 = scmp.ne.s32.totalorder %s333, %s334
      %p345 = scmp.eq.s32.totalorder %s27, 0
      %p346 = por %p344, %p345
      %p347 = scmp.ne.s32.totalorder %s333, %s334
      %p348 = scmp.eq.s32.totalorder %s28, 1
      %p349 = por %p347, %p348
      %p351 = scmp.ne.s32.totalorder %s334, %s350
      %p352 = scmp.eq.s32.totalorder %s28, 0
      %p353 = por %p351, %p352
      %s354 = ssub.s32 %s30, %s37
      %p355 = scmp.eq.s32.totalorder %s354, 0
      %s357 = sadd.s32 %s356, 1
      %s358 = scalar_select %p355, %s356, %s357
      %p361 = pneg %p355
      %p362 = scmp.eq.s32.totalorder %s22, 1
      %p363 = por %p361, %p362
      %p364 = scmp.ne.s32.totalorder %s356, %s359
      %p365 = scmp.eq.s32.totalorder %s22, 0
      %p366 = por %p364, %p365
      %p367 = scmp.ne.s32.totalorder %s356, %s359
      %p368 = scmp.eq.s32.totalorder %s27, 1
      %p369 = por %p367, %p368
      %p370 = scmp.ne.s32.totalorder %s359, %s360
      %p371 = scmp.eq.s32.totalorder %s27, 0
      %p372 = por %p370, %p371
      %p373 = scmp.ne.s32.totalorder %s359, %s360
      %p374 = scmp.eq.s32.totalorder %s28, 1
      %p375 = por %p373, %p374
      %p377 = scmp.ne.s32.totalorder %s360, %s376
      %p378 = scmp.eq.s32.totalorder %s28, 0
      %p379 = por %p377, %p378
      %s381 = sadd.s32 %s380, 1
      %p384 = scmp.eq.s32.totalorder %s22, 1
      %p385 = scmp.ne.s32.totalorder %s380, %s382
      %p386 = scmp.eq.s32.totalorder %s22, 0
      %p387 = por %p385, %p386
      %p388 = scmp.ne.s32.totalorder %s380, %s382
      %p389 = scmp.eq.s32.totalorder %s27, 1
      %p390 = por %p388, %p389
      %p391 = scmp.ne.s32.totalorder %s382, %s383
      %p392 = scmp.eq.s32.totalorder %s27, 0
      %p393 = por %p391, %p392
      %p394 = scmp.ne.s32.totalorder %s382, %s383
      %p395 = scmp.eq.s32.totalorder %s28, 1
      %p396 = por %p394, %p395
      %p398 = scmp.ne.s32.totalorder %s383, %s397
      %p399 = scmp.eq.s32.totalorder %s28, 0
      %p400 = por %p398, %p399
      %s402 = sadd.s32 %s401, 1
      %p405 = scmp.eq.s32.totalorder %s22, 1
      %p406 = scmp.ne.s32.totalorder %s401, %s403
      %p407 = scmp.eq.s32.totalorder %s22, 0
      %p408 = por %p406, %p407
      %p409 = scmp.ne.s32.totalorder %s401, %s403
      %p410 = scmp.eq.s32.totalorder %s27, 1
      %p411 = por %p409, %p410
      %p412 = scmp.ne.s32.totalorder %s403, %s404
      %p413 = scmp.eq.s32.totalorder %s27, 0
      %p414 = por %p412, %p413
      %p415 = scmp.ne.s32.totalorder %s403, %s404
      %p416 = scmp.eq.s32.totalorder %s28, 1
      %p417 = por %p415, %p416
      %p419 = scmp.ne.s32.totalorder %s404, %s418
      %p420 = scmp.eq.s32.totalorder %s28, 0
      %p421 = por %p419, %p420
      %s422 = ssub.s32 %s29, %s41
      %p423 = scmp.eq.s32.totalorder %s422, 0
      %s425 = sadd.s32 %s424, 1
      %s426 = scalar_select %p423, %s424, %s425
      %p429 = pneg %p423
      %p430 = scmp.eq.s32.totalorder %s22, 1
      %p431 = por %p429, %p430
      %p432 = scmp.ne.s32.totalorder %s424, %s427
      %p433 = scmp.eq.s32.totalorder %s22, 0
      %p434 = por %p432, %p433
      %p435 = scmp.ne.s32.totalorder %s424, %s427
      %p436 = scmp.eq.s32.totalorder %s27, 1
      %p437 = por %p435, %p436
      %p438 = scmp.ne.s32.totalorder %s427, %s428
      %p439 = scmp.eq.s32.totalorder %s27, 0
      %p440 = por %p438, %p439
      %p441 = scmp.ne.s32.totalorder %s427, %s428
      %p442 = scmp.eq.s32.totalorder %s28, 1
      %p443 = por %p441, %p442
      %p445 = scmp.ne.s32.totalorder %s428, %s444
      %p446 = scmp.eq.s32.totalorder %s28, 0
      %p447 = por %p445, %p446
      %p448 = scmp.le.s32.totalorder 1, %s22
      %p449 = scmp.lt.s32.totalorder %s22, 3
      %p450 = pnand %p448, %p449
      %p451 = pneg %p450
      // Predicated region
      $region9: #{tpu_custom_call.1} parent=5 // pred_check
        _
      $region10: #{tpu_custom_call.1} parent=5 // pred_check_branch
        %453 = sbr.rel (%p450) target = $region12
      $region11: #{tpu_custom_call.1} parent=5 // pred_region
        %s454 = ssub.s32 %s22, 1
        // Predicated region
        $region13: #{tpu_custom_call.1} parent=11 // pred_check
          %p455 = pneg %p60
        $region14: #{tpu_custom_call.1} parent=11 // pred_check_branch
          %457 = sbr.rel (%p455) target = $region16
        $region15: #{tpu_custom_call.1} parent=11 // pred_region
          %s458 = smul.u32 2, %s31
          %p459 = scmp.lt.s32.totalorder %s458, 1
          %s460 = scalar_select %p459, %s458, 1
          %s461 = smul.addr %s460, 8
          %s462 = scalar_lea.vmem %s0, %s461
          %s463 = smul.u32 2, %s31
        $region16: #{tpu_custom_call.1} parent=11 // pred_fallthru
          _
        // Predicated region
        $region17: #{tpu_custom_call.1} parent=11 // pred_check
          %p464 = pneg %p393
        $region18: #{tpu_custom_call.1} parent=11 // pred_check_branch
          %466 = sbr.rel (%p464) target = $region20
        $region19: #{tpu_custom_call.1} parent=11 // pred_region
          _
        $region20: #{tpu_custom_call.1} parent=11 // pred_fallthru
          _
        // Predicated region
        $region21: #{tpu_custom_call.1} parent=11 // pred_check
          %p467 = pneg %p414
        $region22: #{tpu_custom_call.1} parent=11 // pred_check_branch
          %469 = sbr.rel (%p467) target = $region24
        $region23: #{tpu_custom_call.1} parent=11 // pred_region
          _
        $region24: #{tpu_custom_call.1} parent=11 // pred_fallthru
          _
      $region12: #{tpu_custom_call.1} parent=5 // pred_fallthru
        _
      %p470 = scmp.lt.s32.totalorder %s22, 2
      // Predicated region
      $region25: #{tpu_custom_call.1} parent=5 // pred_check
        %p471 = pneg %p470
      $region26: #{tpu_custom_call.1} parent=5 // pred_check_branch
        %473 = sbr.rel (%p471) target = $region28
      $region27: #{tpu_custom_call.1} parent=5 // pred_region
        // Predicated region
        $region29: #{tpu_custom_call.1} parent=27 // pred_check
          %p474 = pneg %p80
        $region30: #{tpu_custom_call.1} parent=27 // pred_check_branch
          %476 = sbr.rel (%p474) target = $region32
        $region31: #{tpu_custom_call.1} parent=27 // pred_region
          %p477 = scmp.lt.s32.totalorder %s30, 1
          %s478 = scalar_select %p477, %s30, 1
          %s479 = scalar_lea.vmem %s1, %s478
        $region32: #{tpu_custom_call.1} parent=27 // pred_fallthru
          _
        // Predicated region
        $region33: #{tpu_custom_call.1} parent=27 // pred_check
          %p480 = pneg %p106
        $region34: #{tpu_custom_call.1} parent=27 // pred_check_branch
          %482 = sbr.rel (%p480) target = $region36
        $region35: #{tpu_custom_call.1} parent=27 // pred_region
          %p483 = scmp.lt.s32.totalorder %s30, 1
          %s484 = scalar_select %p483, %s30, 1
          %s485 = scalar_lea.vmem %s2, %s484
        $region36: #{tpu_custom_call.1} parent=27 // pred_fallthru
          _
        // Predicated region
        $region37: #{tpu_custom_call.1} parent=27 // pred_check
          %p486 = pneg %p132
        $region38: #{tpu_custom_call.1} parent=27 // pred_check_branch
          %488 = sbr.rel (%p486) target = $region40
        $region39: #{tpu_custom_call.1} parent=27 // pred_region
          %p489 = scmp.lt.s32.totalorder %s30, 1
          %s490 = scalar_select %p489, %s30, 1
          %s491 = smul.addr %s490, 4
          %s492 = smul.addr %s491, 8
          %s493 = scalar_lea.vmem %s3, %s492
        $region40: #{tpu_custom_call.1} parent=27 // pred_fallthru
          _
        // Predicated region
        $region41: #{tpu_custom_call.1} parent=27 // pred_check
          %p494 = pneg %p158
        $region42: #{tpu_custom_call.1} parent=27 // pred_check_branch
          %496 = sbr.rel (%p494) target = $region44
        $region43: #{tpu_custom_call.1} parent=27 // pred_region
          %p497 = scmp.lt.s32.totalorder %s30, 1
          %s498 = scalar_select %p497, %s30, 1
          %s499 = scalar_lea.vmem %s4, %s498
        $region44: #{tpu_custom_call.1} parent=27 // pred_fallthru
          _
        // Predicated region
        $region45: #{tpu_custom_call.1} parent=27 // pred_check
          %p500 = pneg %p184
        $region46: #{tpu_custom_call.1} parent=27 // pred_check_branch
          %502 = sbr.rel (%p500) target = $region48
        $region47: #{tpu_custom_call.1} parent=27 // pred_region
          %p503 = scmp.lt.s32.totalorder %s30, 1
          %s504 = scalar_select %p503, %s30, 1
          %s505 = smul.addr %s504, 4
          %s506 = smul.addr %s505, 8
          %s507 = scalar_lea.vmem %s5, %s506
        $region48: #{tpu_custom_call.1} parent=27 // pred_fallthru
          _
        // Predicated region
        $region49: #{tpu_custom_call.1} parent=27 // pred_check
          %p508 = pneg %p210
        $region50: #{tpu_custom_call.1} parent=27 // pred_check_branch
          %510 = sbr.rel (%p508) target = $region52
        $region51: #{tpu_custom_call.1} parent=27 // pred_region
          %p511 = scmp.lt.s32.totalorder %s30, 1
          %s512 = scalar_select %p511, %s30, 1
          %s513 = scalar_lea.vmem %s6, %s512
        $region52: #{tpu_custom_call.1} parent=27 // pred_fallthru
          _
        // Predicated region
        $region53: #{tpu_custom_call.1} parent=27 // pred_check
          %p514 = pneg %p236
        $region54: #{tpu_custom_call.1} parent=27 // pred_check_branch
          %516 = sbr.rel (%p514) target = $region56
        $region55: #{tpu_custom_call.1} parent=27 // pred_region
          %p517 = scmp.lt.s32.totalorder %s30, 1
          %s518 = scalar_select %p517, %s30, 1
          %s519 = scalar_lea.vmem %s7, %s518
        $region56: #{tpu_custom_call.1} parent=27 // pred_fallthru
          _
        // Predicated region
        $region57: #{tpu_custom_call.1} parent=27 // pred_check
          %p520 = pneg %p262
        $region58: #{tpu_custom_call.1} parent=27 // pred_check_branch
          %522 = sbr.rel (%p520) target = $region60
        $region59: #{tpu_custom_call.1} parent=27 // pred_region
          %p523 = scmp.lt.s32.totalorder %s30, 1
          %s524 = scalar_select %p523, %s30, 1
          %s525 = scalar_lea.vmem %s8, %s524
        $region60: #{tpu_custom_call.1} parent=27 // pred_fallthru
          _
        // Predicated region
        $region61: #{tpu_custom_call.1} parent=27 // pred_check
          %p526 = pneg %p288
        $region62: #{tpu_custom_call.1} parent=27 // pred_check_branch
          %528 = sbr.rel (%p526) target = $region64
        $region63: #{tpu_custom_call.1} parent=27 // pred_region
          %p529 = scmp.lt.s32.totalorder %s30, 1
          %s530 = scalar_select %p529, %s30, 1
          %s531 = smul.addr %s530, 4
          %s532 = smul.addr %s531, 8
          %s533 = scalar_lea.vmem %s9, %s532
        $region64: #{tpu_custom_call.1} parent=27 // pred_fallthru
          _
        // Predicated region
        $region65: #{tpu_custom_call.1} parent=27 // pred_check
          %p534 = pneg %p314
        $region66: #{tpu_custom_call.1} parent=27 // pred_check_branch
          %536 = sbr.rel (%p534) target = $region68
        $region67: #{tpu_custom_call.1} parent=27 // pred_region
          %p537 = scmp.lt.s32.totalorder %s30, 1
          %s538 = scalar_select %p537, %s30, 1
          %s539 = scalar_lea.vmem %s10, %s538
        $region68: #{tpu_custom_call.1} parent=27 // pred_fallthru
          _
        // Predicated region
        $region69: #{tpu_custom_call.1} parent=27 // pred_check
          %p540 = pneg %p340
        $region70: #{tpu_custom_call.1} parent=27 // pred_check_branch
          %542 = sbr.rel (%p540) target = $region72
        $region71: #{tpu_custom_call.1} parent=27 // pred_region
          %p543 = scmp.lt.s32.totalorder %s30, 1
          %s544 = scalar_select %p543, %s30, 1
          %s545 = smul.addr %s544, 16
          %s546 = smul.addr %s545, 8
          %s547 = scalar_lea.vmem %s11, %s546
        $region72: #{tpu_custom_call.1} parent=27 // pred_fallthru
          _
        // Predicated region
        $region73: #{tpu_custom_call.1} parent=27 // pred_check
          %p548 = pneg %p366
        $region74: #{tpu_custom_call.1} parent=27 // pred_check_branch
          %550 = sbr.rel (%p548) target = $region76
        $region75: #{tpu_custom_call.1} parent=27 // pred_region
          %p551 = scmp.lt.s32.totalorder %s30, 1
          %s552 = scalar_select %p551, %s30, 1
          %s553 = scalar_lea.vmem %s12, %s552
        $region76: #{tpu_custom_call.1} parent=27 // pred_fallthru
          _
      $region28: #{tpu_custom_call.1} parent=5 // pred_fallthru
        _
      %p554 = scmp.le.s32.totalorder 1, %s22
      %p555 = scmp.lt.s32.totalorder %s22, 3
      %p556 = pnand %p554, %p555
      %p557 = pneg %p556
      // Predicated region
      $region77: #{tpu_custom_call.1} parent=5 // pred_check
        _
      $region78: #{tpu_custom_call.1} parent=5 // pred_check_branch
        %559 = sbr.rel (%p556) target = $region80
      $region79: #{tpu_custom_call.1} parent=5 // pred_region
        %s560 = ssub.s32 %s22, 1
        %s561 = smul.u32 2, %s31
        %p562 = scmp.lt.s32.totalorder %s561, 1
        %s563 = scalar_select %p562, %s561, 1
        %s564 = smul.addr %s563, 8
        %s565 = scalar_lea.vmem %s0, %s564
        %p566 = pneg %p60
        %p567 = pneg %p57
        %p568 = scmp.lt.s32.totalorder %s32, 1
        %s569 = scalar_select %p568, %s32, 1
        %s570 = scalar_lea.vmem %s1, %s569
        %p571 = pneg %p86
        %p572 = pneg %p83
        %p573 = scmp.lt.s32.totalorder %s32, 1
        %s574 = scalar_select %p573, %s32, 1
        %s575 = scalar_lea.vmem %s2, %s574
        %p576 = pneg %p112
        %p577 = pneg %p109
        %p578 = scmp.lt.s32.totalorder %s32, 1
        %s579 = scalar_select %p578, %s32, 1
        %s580 = smul.addr %s579, 4
        %s581 = smul.addr %s580, 8
        %s582 = scalar_lea.vmem %s3, %s581
        %p583 = pneg %p138
        %p584 = pneg %p135
        %p585 = scmp.lt.s32.totalorder %s32, 1
        %s586 = scalar_select %p585, %s32, 1
        %s587 = scalar_lea.vmem %s4, %s586
        %p588 = pneg %p164
        %p589 = pneg %p161
        %p590 = scmp.lt.s32.totalorder %s32, 1
        %s591 = scalar_select %p590, %s32, 1
        %s592 = smul.addr %s591, 4
        %s593 = smul.addr %s592, 8
        %s594 = scalar_lea.vmem %s5, %s593
        %p595 = pneg %p190
        %p596 = pneg %p187
        %p597 = scmp.lt.s32.totalorder %s32, 1
        %s598 = scalar_select %p597, %s32, 1
        %s599 = scalar_lea.vmem %s6, %s598
        %p600 = pneg %p216
        %p601 = pneg %p213
        %p602 = scmp.lt.s32.totalorder %s32, 1
        %s603 = scalar_select %p602, %s32, 1
        %s604 = scalar_lea.vmem %s7, %s603
        %p605 = pneg %p242
        %p606 = pneg %p239
        %p607 = scmp.lt.s32.totalorder %s32, 1
        %s608 = scalar_select %p607, %s32, 1
        %s609 = scalar_lea.vmem %s8, %s608
        %p610 = pneg %p268
        %p611 = pneg %p265
        %p612 = scmp.lt.s32.totalorder %s32, 1
        %s613 = scalar_select %p612, %s32, 1
        %s614 = smul.addr %s613, 4
        %s615 = smul.addr %s614, 8
        %s616 = scalar_lea.vmem %s9, %s615
        %p617 = pneg %p294
        %p618 = pneg %p291
        %p619 = scmp.lt.s32.totalorder %s32, 1
        %s620 = scalar_select %p619, %s32, 1
        %s621 = scalar_lea.vmem %s10, %s620
        %p622 = pneg %p320
        %p623 = pneg %p317
        %p624 = scmp.lt.s32.totalorder %s32, 1
        %s625 = scalar_select %p624, %s32, 1
        %s626 = smul.addr %s625, 16
        %s627 = smul.addr %s626, 8
        %s628 = scalar_lea.vmem %s11, %s627
        %p629 = pneg %p346
        %p630 = pneg %p343
        %p631 = scmp.lt.s32.totalorder %s32, 1
        %s632 = scalar_select %p631, %s32, 1
        %s633 = scalar_lea.vmem %s12, %s632
        %p634 = pneg %p372
        %p635 = pneg %p369
        %p636 = pneg %p393
        %p637 = pneg %p390
        %p638 = pneg %p414
        %p639 = pneg %p411
        %p640 = pneg %p440
        %p641 = pneg %p437
        %s642 = smul.u32 2, %s31
        %p643 = scmp.lt.s32.totalorder %s642, 1
        %s644 = scalar_select %p643, %s642, 1
        %s645 = smul.addr %s644, 8
        %s646 = scalar_lea.vmem %s0, %s645
        %s647 = smul.u32 2, %s31
        %p648 = scmp.lt.s32.totalorder %s32, 1
        %s649 = scalar_select %p648, %s32, 1
        %s650 = scalar_lea.vmem %s1, %s649
        %p651 = scmp.lt.s32.totalorder %s32, 1
        %s652 = scalar_select %p651, %s32, 1
        %s653 = scalar_lea.vmem %s2, %s652
        %p654 = scmp.lt.s32.totalorder %s32, 1
        %s655 = scalar_select %p654, %s32, 1
        %s656 = smul.addr %s655, 4
        %s657 = smul.addr %s656, 8
        %s658 = scalar_lea.vmem %s3, %s657
        %p659 = scmp.lt.s32.totalorder %s32, 1
        %s660 = scalar_select %p659, %s32, 1
        %s661 = scalar_lea.vmem %s4, %s660
        %p662 = scmp.lt.s32.totalorder %s32, 1
        %s663 = scalar_select %p662, %s32, 1
        %s664 = smul.addr %s663, 4
        %s665 = smul.addr %s664, 8
        %s666 = scalar_lea.vmem %s5, %s665
        %p667 = scmp.lt.s32.totalorder %s32, 1
        %s668 = scalar_select %p667, %s32, 1
        %s669 = scalar_lea.vmem %s6, %s668
        %p670 = scmp.lt.s32.totalorder %s32, 1
        %s671 = scalar_select %p670, %s32, 1
        %s672 = scalar_lea.vmem %s7, %s671
        %p673 = scmp.lt.s32.totalorder %s32, 1
        %s674 = scalar_select %p673, %s32, 1
        %s675 = scalar_lea.vmem %s8, %s674
        %p676 = scmp.lt.s32.totalorder %s32, 1
        %s677 = scalar_select %p676, %s32, 1
        %s678 = smul.addr %s677, 4
        %s679 = smul.addr %s678, 8
        %s680 = scalar_lea.vmem %s9, %s679
        %p681 = scmp.lt.s32.totalorder %s32, 1
        %s682 = scalar_select %p681, %s32, 1
        %s683 = scalar_lea.vmem %s10, %s682
        %p684 = scmp.lt.s32.totalorder %s32, 1
        %s685 = scalar_select %p684, %s32, 1
        %s686 = smul.addr %s685, 16
        %s687 = smul.addr %s686, 8
        %s688 = scalar_lea.vmem %s11, %s687
        %p689 = scmp.lt.s32.totalorder %s32, 1
        %s690 = scalar_select %p689, %s32, 1
        %s691 = scalar_lea.vmem %s12, %s690
        %s692 = smul.u32 2, %s31
        %p693 = scmp.eq.s32.totalorder %s32, 0
        // Predicated region
        $region81: #{tpu_custom_call.1} parent=79 // pred_check
          %p694 = pneg %p693
        $region82: #{tpu_custom_call.1} parent=79 // pred_check_branch
          %696 = sbr.rel (%p694) target = $region84
        $region83: #{tpu_custom_call.1} parent=79 // pred_region
          %v697 = vld [vmem:[%s646] sm:$0xff]
          %v698 = vld [vmem:[%s646 + $0x8] sm:$0xff]
          %vm699 = vcmask 261120
          %700 = vst.msk [vmem:[#allocation2] sm:$0xff] %vm699, %v697
          %701 = vst.msk [vmem:[#allocation2 + $0x8] sm:$0xff] %vm699, %v698
        $region84: #{tpu_custom_call.1} parent=79 // pred_fallthru
          _
        %v702 = vld [vmem:[#allocation2] sm:$0xff]
        %v703 = vld [vmem:[#allocation2 + $0x8] sm:$0xff]
        %v704 = vld [vmem:[%s650] sm:$0x1]
        %v705 = vld [vmem:[%s653] sm:$0x1]
        %vm706 = vcmask 261120
        %v707 = vsel %vm706, %v702, 0.0
        %708 = vadd.xlane.f32.xlu0 %v707
        %v709 = vpop.xlane.xlu0 %708
        %v710 = vsel %vm706, %v703, 0.0
        %711 = vadd.xlane.f32.xlu0 %v710
        %v712 = vpop.xlane.xlu0 %711
        %v713 = vrcp.pop 32.0
        %v714 = vmul.f32 %v709, %v713
        %v715 = vmul.f32 %v712, %v713
        %v716 = vsub.f32 %v702, %v714
        %v717 = vsub.f32 %v703, %v715
        %v718 = vmul.f32 %v716, %v716
        %v719 = vmul.f32 %v717, %v717
        %v720 = vsel %vm706, %v718, 0.0
        %721 = vadd.xlane.f32.xlu0 %v720
        %v722 = vpop.xlane.xlu0 %721
        %v723 = vsel %vm706, %v719, 0.0
        %724 = vadd.xlane.f32.xlu0 %v723
        %v725 = vpop.xlane.xlu0 %724
        %v726 = vmul.f32 %v722, %v713
        %v727 = vmul.f32 %v725, %v713
        %v728 = vadd.f32 %v726, 1e-05
        %v729 = vadd.f32 %v727, 1e-05
        %v730 = vrsqrt.pop %v728
        %v731 = vrsqrt.pop %v729
        %v732 = vmul.f32 %v716, %v730
        %v733 = vmul.f32 %v717, %v731
        %v735 = vlaneseq
        %v736 = vshrl.u32 %v735, 7
        %v737 = vsub.s32 0, %v736
        %v738 = vrot.slane %v704, %v737
        %v740 = vmul.f32 %v732, %v738
        %v741 = vmul.f32 %v733, %v738
        %v743 = vlaneseq
        %v744 = vshrl.u32 %v743, 7
        %v745 = vsub.s32 0, %v744
        %v746 = vrot.slane %v705, %v745
        %v748 = vadd.f32 %v740, %v746
        %v749 = vadd.f32 %v741, %v746
        %v750 = vld [vmem:[%s658] sm:$0xff]
        %v751 = vld [vmem:[%s658 + $0x8] sm:$0xff]
        %v752 = vld [vmem:[%s658 + $0x10] sm:$0xff]
        %v753 = vld [vmem:[%s658 + $0x18] sm:$0xff]
        %v754 = vld [vmem:[%s661] sm:$0x1]
        %v756 = vlaneseq
        %v757 = vshrl.u32 %v756, 7
        %v758 = vsub.s32 0, %v757
        %v759 = vrot.slane %v754, %v758
        %v762 = vsel %vm706, %v748, 0
        %v765 = vsel %vm706, %v749, 0
        %767 = vmatprep.subr.mxu0 0.0
        %768 = vmatpush1.msra.mxu0 %v750
        %769 = vmatprep.subr.mxu0 0.0
        %770 = vmatpush1.msra.mxu0 %v751
        %771 = vmatprep.subr.mxu0 0.0
        %772 = vmatpush1.msra.mxu0 %v752
        %773 = vmatprep.subr.mxu0 0.0
        %774 = vmatpush1.msra.mxu0 %v753
        %775 = vmatprep.subr.mxu0 0.0
        %776 = vmatpush1.msra.mxu0 0.0
        %777 = vmatprep.subr.mxu0 0.0
        %778 = vmatpush1.msra.mxu0 0.0
        %779 = vmatprep.subr.mxu0 0.0
        %780 = vmatpush1.msra.mxu0 0.0
        %781 = vmatprep.subr.mxu0 0.0
        %782 = vmatpush1.msra.mxu0 0.0
        %783 = vmatprep.subr.mxu0 0.0
        %784 = vmatpush1.msra.mxu0 0.0
        %785 = vmatprep.subr.mxu0 0.0
        %786 = vmatpush1.msra.mxu0 0.0
        %787 = vmatprep.subr.mxu0 0.0
        %788 = vmatpush1.msra.mxu0 0.0
        %789 = vmatprep.subr.mxu0 0.0
        %790 = vmatpush1.msra.mxu0 0.0
        %791 = vmatprep.subr.mxu0 0.0
        %792 = vmatpush1.msra.mxu0 0.0
        %793 = vmatprep.subr.mxu0 0.0
        %794 = vmatpush1.msra.mxu0 0.0
        %795 = vmatprep.subr.mxu0 0.0
        %796 = vmatpush1.msra.mxu0 0.0
        %797 = vmatprep.subr.mxu0 0.0
        %798 = vmatpush1.msra.mxu0 0.0
        %799 = vmatprep.subr.mxu0 0.0
        %800 = vmatpush1.msra.mxu0 0.0
        %801 = vmatprep.subr.mxu0 0.0
        %802 = vmatpush1.msra.mxu0 0.0
        %803 = vmatprep.subr.mxu0 0.0
        %804 = vmatpush1.msra.mxu0 0.0
        %805 = vmatprep.subr.mxu0 0.0
        %806 = vmatpush1.msra.mxu0 0.0
        %807 = vmatprep.subr.mxu0 0.0
        %808 = vmatpush1.msra.mxu0 0.0
        %809 = vmatprep.subr.mxu0 0.0
        %810 = vmatpush1.msra.mxu0 0.0
        %811 = vmatprep.subr.mxu0 0.0
        %812 = vmatpush1.msra.mxu0 0.0
        %813 = vmatprep.subr.mxu0 0.0
        %814 = vmatpush1.msra.mxu0 0.0
        %815 = vmatprep.subr.mxu0 0.0
        %816 = vmatpush1.msra.mxu0 0.0
        %817 = vmatprep.subr.mxu0 0.0
        %818 = vmatpush1.msra.mxu0 0.0
        %819 = vmatprep.subr.mxu0 0.0
        %820 = vmatpush1.msra.mxu0 0.0
        %821 = vmatprep.subr.mxu0 0.0
        %822 = vmatpush1.msra.mxu0 0.0
        %823 = vmatprep.subr.mxu0 0.0
        %824 = vmatpush1.msra.mxu0 0.0
        %825 = vmatprep.subr.mxu0 0.0
        %826 = vmatpush1.msra.mxu0 0.0
        %827 = vmatprep.subr.mxu0 0.0
        %828 = vmatpush1.msra.mxu0 0.0
        %829 = vmatprep.subr.mxu0 0.0
        %830 = vmatpush1.msra.mxu0 0.0
        %831 = vmatprep.mubr.f32.mxu0 0.0
        %832 = vmatmul.mubr.f32.gmra.mrb[0].mxu0 %v762
        %v833 = vpop.f32.mrb[0].mxu0
        %v834 = vadd.f32 %v759, %v833
        %v835 = vpop.f32.mrb[0].mxu0
        %836 = vmatprep.mubr.f32.mxu0 0.0
        %837 = vmatmul.mubr.f32.gmra.mrb[0].mxu0 %v765
        %v838 = vpop.f32.mrb[0].mxu0
        %v839 = vadd.f32 %v759, %v838
        %v840 = vpop.f32.mrb[0].mxu0
        %841 = vdwg.mxu0
        %844 = vrot.lane.b32.xlu0 %v834, 120
        %v845 = vpop.permute.xlu0 %844
        %846 = vrot.lane.b32.xlu0 %v839, 120
        %v847 = vpop.permute.xlu0 %846
        %848 = vrot.lane.b32.xlu0 %v834, 112
        %v849 = vpop.permute.xlu0 %848
        %850 = vrot.lane.b32.xlu0 %v839, 112
        %v851 = vpop.permute.xlu0 %850
        %852 = vrot.lane.b32.xlu0 %v834, 104
        %v853 = vpop.permute.xlu0 %852
        %854 = vrot.lane.b32.xlu0 %v839, 104
        %v855 = vpop.permute.xlu0 %854
        %856 = vrot.lane.b32.xlu0 %v834, 96
        %v857 = vpop.permute.xlu0 %856
        %vm858 = vcmask 64512
        %v859 = vsel %vm858, %v834, 0
        %v861 = vsel %vm858, %v857, 0
        %863 = vmatprep.subr.mxu0 0.0
        %864 = vmatpush1.xpose.msra.mxu0 %v861
        %865 = vmatprep.subr.mxu0 0.0
        %866 = vmatpush1.xpose.msra.mxu0 0.0
        %867 = vmatprep.subr.mxu0 0.0
        %868 = vmatpush1.xpose.msra.mxu0 0.0
        %869 = vmatprep.subr.mxu0 0.0
        %870 = vmatpush1.xpose.msra.mxu0 0.0
        %871 = vmatprep.subr.mxu0 0.0
        %872 = vmatpush1.xpose.msra.mxu0 0.0
        %873 = vmatprep.subr.mxu0 0.0
        %874 = vmatpush1.xpose.msra.mxu0 0.0
        %875 = vmatprep.subr.mxu0 0.0
        %876 = vmatpush1.xpose.msra.mxu0 0.0
        %877 = vmatprep.subr.mxu0 0.0
        %878 = vmatpush1.xpose.msra.mxu0 0.0
        %879 = vmatprep.subr.mxu0 0.0
        %880 = vmatpush1.xpose.msra.mxu0 0.0
        %881 = vmatprep.subr.mxu0 0.0
        %882 = vmatpush1.xpose.msra.mxu0 0.0
        %883 = vmatprep.subr.mxu0 0.0
        %884 = vmatpush1.xpose.msra.mxu0 0.0
        %885 = vmatprep.subr.mxu0 0.0
        %886 = vmatpush1.xpose.msra.mxu0 0.0
        %887 = vmatprep.subr.mxu0 0.0
        %888 = vmatpush1.xpose.msra.mxu0 0.0
        %889 = vmatprep.subr.mxu0 0.0
        %890 = vmatpush1.xpose.msra.mxu0 0.0
        %891 = vmatprep.subr.mxu0 0.0
        %892 = vmatpush1.xpose.msra.mxu0 0.0
        %893 = vmatprep.subr.mxu0 0.0
        %894 = vmatpush1.xpose.msra.mxu0 0.0
        %895 = vmatprep.subr.mxu0 0.0
        %896 = vmatpush1.xpose.msra.mxu0 0.0
        %897 = vmatprep.subr.mxu0 0.0
        %898 = vmatpush1.xpose.msra.mxu0 0.0
        %899 = vmatprep.subr.mxu0 0.0
        %900 = vmatpush1.xpose.msra.mxu0 0.0
        %901 = vmatprep.subr.mxu0 0.0
        %902 = vmatpush1.xpose.msra.mxu0 0.0
        %903 = vmatprep.subr.mxu0 0.0
        %904 = vmatpush1.xpose.msra.mxu0 0.0
        %905 = vmatprep.subr.mxu0 0.0
        %906 = vmatpush1.xpose.msra.mxu0 0.0
        %907 = vmatprep.subr.mxu0 0.0
        %908 = vmatpush1.xpose.msra.mxu0 0.0
        %909 = vmatprep.subr.mxu0 0.0
        %910 = vmatpush1.xpose.msra.mxu0 0.0
        %911 = vmatprep.subr.mxu0 0.0
        %912 = vmatpush1.xpose.msra.mxu0 0.0
        %913 = vmatprep.subr.mxu0 0.0
        %914 = vmatpush1.xpose.msra.mxu0 0.0
        %915 = vmatprep.subr.mxu0 0.0
        %916 = vmatpush1.xpose.msra.mxu0 0.0
        %917 = vmatprep.subr.mxu0 0.0
        %918 = vmatpush1.xpose.msra.mxu0 0.0
        %919 = vmatprep.subr.mxu0 0.0
        %920 = vmatpush1.xpose.msra.mxu0 0.0
        %921 = vmatprep.subr.mxu0 0.0
        %922 = vmatpush1.xpose.msra.mxu0 0.0
        %923 = vmatprep.subr.mxu0 0.0
        %924 = vmatpush1.xpose.msra.mxu0 0.0
        %925 = vmatprep.subr.mxu0 0.0
        %926 = vmatpush1.xpose.msra.mxu0 0.0
        %927 = vmatprep.mubr.f32.mxu0 0.0
        %928 = vmatmul.mubr.f32.gmra.mrb[0].mxu0 %v859
        %v929 = vpop.f32.mrb[0].mxu0
        %v930 = vadd.f32 0.0, %v929
        %v931 = vpop.f32.mrb[0].mxu0
        %932 = vdwg.mxu0
        %933 = vrot.lane.b32.xlu0 %v839, 96
        %v934 = vpop.permute.xlu0 %933
        %v935 = vsel %vm858, %v839, 0
        %v937 = vsel %vm858, %v934, 0
        %939 = vmatprep.subr.mxu0 0.0
        %940 = vmatpush1.xpose.msra.mxu0 %v937
        %941 = vmatprep.subr.mxu0 0.0
        %942 = vmatpush1.xpose.msra.mxu0 0.0
        %943 = vmatprep.subr.mxu0 0.0
        %944 = vmatpush1.xpose.msra.mxu0 0.0
        %945 = vmatprep.subr.mxu0 0.0
        %946 = vmatpush1.xpose.msra.mxu0 0.0
        %947 = vmatprep.subr.mxu0 0.0
        %948 = vmatpush1.xpose.msra.mxu0 0.0
        %949 = vmatprep.subr.mxu0 0.0
        %950 = vmatpush1.xpose.msra.mxu0 0.0
        %951 = vmatprep.subr.mxu0 0.0
        %952 = vmatpush1.xpose.msra.mxu0 0.0
        %953 = vmatprep.subr.mxu0 0.0
        %954 = vmatpush1.xpose.msra.mxu0 0.0
        %955 = vmatprep.subr.mxu0 0.0
        %956 = vmatpush1.xpose.msra.mxu0 0.0
        %957 = vmatprep.subr.mxu0 0.0
        %958 = vmatpush1.xpose.msra.mxu0 0.0
        %959 = vmatprep.subr.mxu0 0.0
        %960 = vmatpush1.xpose.msra.mxu0 0.0
        %961 = vmatprep.subr.mxu0 0.0
        %962 = vmatpush1.xpose.msra.mxu0 0.0
        %963 = vmatprep.subr.mxu0 0.0
        %964 = vmatpush1.xpose.msra.mxu0 0.0
        %965 = vmatprep.subr.mxu0 0.0
        %966 = vmatpush1.xpose.msra.mxu0 0.0
        %967 = vmatprep.subr.mxu0 0.0
        %968 = vmatpush1.xpose.msra.mxu0 0.0
        %969 = vmatprep.subr.mxu0 0.0
        %970 = vmatpush1.xpose.msra.mxu0 0.0
        %971 = vmatprep.subr.mxu0 0.0
        %972 = vmatpush1.xpose.msra.mxu0 0.0
        %973 = vmatprep.subr.mxu0 0.0
        %974 = vmatpush1.xpose.msra.mxu0 0.0
        %975 = vmatprep.subr.mxu0 0.0
        %976 = vmatpush1.xpose.msra.mxu0 0.0
        %977 = vmatprep.subr.mxu0 0.0
        %978 = vmatpush1.xpose.msra.mxu0 0.0
        %979 = vmatprep.subr.mxu0 0.0
        %980 = vmatpush1.xpose.msra.mxu0 0.0
        %981 = vmatprep.subr.mxu0 0.0
        %982 = vmatpush1.xpose.msra.mxu0 0.0
        %983 = vmatprep.subr.mxu0 0.0
        %984 = vmatpush1.xpose.msra.mxu0 0.0
        %985 = vmatprep.subr.mxu0 0.0
        %986 = vmatpush1.xpose.msra.mxu0 0.0
        %987 = vmatprep.subr.mxu0 0.0
        %988 = vmatpush1.xpose.msra.mxu0 0.0
        %989 = vmatprep.subr.mxu0 0.0
        %990 = vmatpush1.xpose.msra.mxu0 0.0
        %991 = vmatprep.subr.mxu0 0.0
        %992 = vmatpush1.xpose.msra.mxu0 0.0
        %993 = vmatprep.subr.mxu0 0.0
        %994 = vmatpush1.xpose.msra.mxu0 0.0
        %995 = vmatprep.subr.mxu0 0.0
        %996 = vmatpush1.xpose.msra.mxu0 0.0
        %997 = vmatprep.subr.mxu0 0.0
        %998 = vmatpush1.xpose.msra.mxu0 0.0
        %999 = vmatprep.subr.mxu0 0.0
        %1000 = vmatpush1.xpose.msra.mxu0 0.0
        %1001 = vmatprep.subr.mxu0 0.0
        %1002 = vmatpush1.xpose.msra.mxu0 0.0
        %1003 = vmatprep.mubr.f32.mxu0 0.0
        %1004 = vmatmul.mubr.f32.gmra.mrb[0].mxu0 %v935
        %v1005 = vpop.f32.mrb[0].mxu0
        %v1006 = vadd.f32 0.0, %v1005
        %v1007 = vpop.f32.mrb[0].mxu0
        %1008 = vdwg.mxu0
        %1009 = vrot.lane.b32.xlu0 %v845, 96
        %v1010 = vpop.permute.xlu0 %1009
        %v1011 = vsel %vm858, %v845, 0
        %v1013 = vsel %vm858, %v1010, 0
        %1015 = vmatprep.subr.mxu0 0.0
        %1016 = vmatpush1.xpose.msra.mxu0 %v1013
        %1017 = vmatprep.subr.mxu0 0.0
        %1018 = vmatpush1.xpose.msra.mxu0 0.0
        %1019 = vmatprep.subr.mxu0 0.0
        %1020 = vmatpush1.xpose.msra.mxu0 0.0
        %1021 = vmatprep.subr.mxu0 0.0
        %1022 = vmatpush1.xpose.msra.mxu0 0.0
        %1023 = vmatprep.subr.mxu0 0.0
        %1024 = vmatpush1.xpose.msra.mxu0 0.0
        %1025 = vmatprep.subr.mxu0 0.0
        %1026 = vmatpush1.xpose.msra.mxu0 0.0
        %1027 = vmatprep.subr.mxu0 0.0
        %1028 = vmatpush1.xpose.msra.mxu0 0.0
        %1029 = vmatprep.subr.mxu0 0.0
        %1030 = vmatpush1.xpose.msra.mxu0 0.0
        %1031 = vmatprep.subr.mxu0 0.0
        %1032 = vmatpush1.xpose.msra.mxu0 0.0
        %1033 = vmatprep.subr.mxu0 0.0
        %1034 = vmatpush1.xpose.msra.mxu0 0.0
        %1035 = vmatprep.subr.mxu0 0.0
        %1036 = vmatpush1.xpose.msra.mxu0 0.0
        %1037 = vmatprep.subr.mxu0 0.0
        %1038 = vmatpush1.xpose.msra.mxu0 0.0
        %1039 = vmatprep.subr.mxu0 0.0
        %1040 = vmatpush1.xpose.msra.mxu0 0.0
        %1041 = vmatprep.subr.mxu0 0.0
        %1042 = vmatpush1.xpose.msra.mxu0 0.0
        %1043 = vmatprep.subr.mxu0 0.0
        %1044 = vmatpush1.xpose.msra.mxu0 0.0
        %1045 = vmatprep.subr.mxu0 0.0
        %1046 = vmatpush1.xpose.msra.mxu0 0.0
        %1047 = vmatprep.subr.mxu0 0.0
        %1048 = vmatpush1.xpose.msra.mxu0 0.0
        %1049 = vmatprep.subr.mxu0 0.0
        %1050 = vmatpush1.xpose.msra.mxu0 0.0
        %1051 = vmatprep.subr.mxu0 0.0
        %1052 = vmatpush1.xpose.msra.mxu0 0.0
        %1053 = vmatprep.subr.mxu0 0.0
        %1054 = vmatpush1.xpose.msra.mxu0 0.0
        %1055 = vmatprep.subr.mxu0 0.0
        %1056 = vmatpush1.xpose.msra.mxu0 0.0
        %1057 = vmatprep.subr.mxu0 0.0
        %1058 = vmatpush1.xpose.msra.mxu0 0.0
        %1059 = vmatprep.subr.mxu0 0.0
        %1060 = vmatpush1.xpose.msra.mxu0 0.0
        %1061 = vmatprep.subr.mxu0 0.0
        %1062 = vmatpush1.xpose.msra.mxu0 0.0
        %1063 = vmatprep.subr.mxu0 0.0
        %1064 = vmatpush1.xpose.msra.mxu0 0.0
        %1065 = vmatprep.subr.mxu0 0.0
        %1066 = vmatpush1.xpose.msra.mxu0 0.0
        %1067 = vmatprep.subr.mxu0 0.0
        %1068 = vmatpush1.xpose.msra.mxu0 0.0
        %1069 = vmatprep.subr.mxu0 0.0
        %1070 = vmatpush1.xpose.msra.mxu0 0.0
        %1071 = vmatprep.subr.mxu0 0.0
        %1072 = vmatpush1.xpose.msra.mxu0 0.0
        %1073 = vmatprep.subr.mxu0 0.0
        %1074 = vmatpush1.xpose.msra.mxu0 0.0
        %1075 = vmatprep.subr.mxu0 0.0
        %1076 = vmatpush1.xpose.msra.mxu0 0.0
        %1077 = vmatprep.subr.mxu0 0.0
        %1078 = vmatpush1.xpose.msra.mxu0 0.0
        %1079 = vmatprep.mubr.f32.mxu0 0.0
        %1080 = vmatmul.mubr.f32.gmra.mrb[0].mxu0 %v1011
        %v1081 = vpop.f32.mrb[0].mxu0
        %v1082 = vadd.f32 0.0, %v1081
        %v1083 = vpop.f32.mrb[0].mxu0
        %1084 = vdwg.mxu0
        %1085 = vrot.lane.b32.xlu0 %v847, 96
        %v1086 = vpop.permute.xlu0 %1085
        %v1087 = vsel %vm858, %v847, 0
        %v1089 = vsel %vm858, %v1086, 0
        %1091 = vmatprep.subr.mxu0 0.0
        %1092 = vmatpush1.xpose.msra.mxu0 %v1089
        %1093 = vmatprep.subr.mxu0 0.0
        %1094 = vmatpush1.xpose.msra.mxu0 0.0
        %1095 = vmatprep.subr.mxu0 0.0
        %1096 = vmatpush1.xpose.msra.mxu0 0.0
        %1097 = vmatprep.subr.mxu0 0.0
        %1098 = vmatpush1.xpose.msra.mxu0 0.0
        %1099 = vmatprep.subr.mxu0 0.0
        %1100 = vmatpush1.xpose.msra.mxu0 0.0
        %1101 = vmatprep.subr.mxu0 0.0
        %1102 = vmatpush1.xpose.msra.mxu0 0.0
        %1103 = vmatprep.subr.mxu0 0.0
        %1104 = vmatpush1.xpose.msra.mxu0 0.0
        %1105 = vmatprep.subr.mxu0 0.0
        %1106 = vmatpush1.xpose.msra.mxu0 0.0
        %1107 = vmatprep.subr.mxu0 0.0
        %1108 = vmatpush1.xpose.msra.mxu0 0.0
        %1109 = vmatprep.subr.mxu0 0.0
        %1110 = vmatpush1.xpose.msra.mxu0 0.0
        %1111 = vmatprep.subr.mxu0 0.0
        %1112 = vmatpush1.xpose.msra.mxu0 0.0
        %1113 = vmatprep.subr.mxu0 0.0
        %1114 = vmatpush1.xpose.msra.mxu0 0.0
        %1115 = vmatprep.subr.mxu0 0.0
        %1116 = vmatpush1.xpose.msra.mxu0 0.0
        %1117 = vmatprep.subr.mxu0 0.0
        %1118 = vmatpush1.xpose.msra.mxu0 0.0
        %1119 = vmatprep.subr.mxu0 0.0
        %1120 = vmatpush1.xpose.msra.mxu0 0.0
        %1121 = vmatprep.subr.mxu0 0.0
        %1122 = vmatpush1.xpose.msra.mxu0 0.0
        %1123 = vmatprep.subr.mxu0 0.0
        %1124 = vmatpush1.xpose.msra.mxu0 0.0
        %1125 = vmatprep.subr.mxu0 0.0
        %1126 = vmatpush1.xpose.msra.mxu0 0.0
        %1127 = vmatprep.subr.mxu0 0.0
        %1128 = vmatpush1.xpose.msra.mxu0 0.0
        %1129 = vmatprep.subr.mxu0 0.0
        %1130 = vmatpush1.xpose.msra.mxu0 0.0
        %1131 = vmatprep.subr.mxu0 0.0
        %1132 = vmatpush1.xpose.msra.mxu0 0.0
        %1133 = vmatprep.subr.mxu0 0.0
        %1134 = vmatpush1.xpose.msra.mxu0 0.0
        %1135 = vmatprep.subr.mxu0 0.0
        %1136 = vmatpush1.xpose.msra.mxu0 0.0
        %1137 = vmatprep.subr.mxu0 0.0
        %1138 = vmatpush1.xpose.msra.mxu0 0.0
        %1139 = vmatprep.subr.mxu0 0.0
        %1140 = vmatpush1.xpose.msra.mxu0 0.0
        %1141 = vmatprep.subr.mxu0 0.0
        %1142 = vmatpush1.xpose.msra.mxu0 0.0
        %1143 = vmatprep.subr.mxu0 0.0
        %1144 = vmatpush1.xpose.msra.mxu0 0.0
        %1145 = vmatprep.subr.mxu0 0.0
        %1146 = vmatpush1.xpose.msra.mxu0 0.0
        %1147 = vmatprep.subr.mxu0 0.0
        %1148 = vmatpush1.xpose.msra.mxu0 0.0
        %1149 = vmatprep.subr.mxu0 0.0
        %1150 = vmatpush1.xpose.msra.mxu0 0.0
        %1151 = vmatprep.subr.mxu0 0.0
        %1152 = vmatpush1.xpose.msra.mxu0 0.0
        %1153 = vmatprep.subr.mxu0 0.0
        %1154 = vmatpush1.xpose.msra.mxu0 0.0
        %1155 = vmatprep.mubr.f32.mxu0 0.0
        %1156 = vmatmul.mubr.f32.gmra.mrb[0].mxu0 %v1087
        %v1157 = vpop.f32.mrb[0].mxu0
        %v1158 = vadd.f32 0.0, %v1157
        %v1159 = vpop.f32.mrb[0].mxu0
        %1160 = vdwg.mxu0
        %1161 = vrot.lane.b32.xlu0 %v849, 96
        %v1162 = vpop.permute.xlu0 %1161
        %v1163 = vsel %vm858, %v849, 0
        %v1165 = vsel %vm858, %v1162, 0
        %1167 = vmatprep.subr.mxu0 0.0
        %1168 = vmatpush1.xpose.msra.mxu0 %v1165
        %1169 = vmatprep.subr.mxu0 0.0
        %1170 = vmatpush1.xpose.msra.mxu0 0.0
        %1171 = vmatprep.subr.mxu0 0.0
        %1172 = vmatpush1.xpose.msra.mxu0 0.0
        %1173 = vmatprep.subr.mxu0 0.0
        %1174 = vmatpush1.xpose.msra.mxu0 0.0
        %1175 = vmatprep.subr.mxu0 0.0
        %1176 = vmatpush1.xpose.msra.mxu0 0.0
        %1177 = vmatprep.subr.mxu0 0.0
        %1178 = vmatpush1.xpose.msra.mxu0 0.0
        %1179 = vmatprep.subr.mxu0 0.0
        %1180 = vmatpush1.xpose.msra.mxu0 0.0
        %1181 = vmatprep.subr.mxu0 0.0
        %1182 = vmatpush1.xpose.msra.mxu0 0.0
        %1183 = vmatprep.subr.mxu0 0.0
        %1184 = vmatpush1.xpose.msra.mxu0 0.0
        %1185 = vmatprep.subr.mxu0 0.0
        %1186 = vmatpush1.xpose.msra.mxu0 0.0
        %1187 = vmatprep.subr.mxu0 0.0
        %1188 = vmatpush1.xpose.msra.mxu0 0.0
        %1189 = vmatprep.subr.mxu0 0.0
        %1190 = vmatpush1.xpose.msra.mxu0 0.0
        %1191 = vmatprep.subr.mxu0 0.0
        %1192 = vmatpush1.xpose.msra.mxu0 0.0
        %1193 = vmatprep.subr.mxu0 0.0
        %1194 = vmatpush1.xpose.msra.mxu0 0.0
        %1195 = vmatprep.subr.mxu0 0.0
        %1196 = vmatpush1.xpose.msra.mxu0 0.0
        %1197 = vmatprep.subr.mxu0 0.0
        %1198 = vmatpush1.xpose.msra.mxu0 0.0
        %1199 = vmatprep.subr.mxu0 0.0
        %1200 = vmatpush1.xpose.msra.mxu0 0.0
        %1201 = vmatprep.subr.mxu0 0.0
        %1202 = vmatpush1.xpose.msra.mxu0 0.0
        %1203 = vmatprep.subr.mxu0 0.0
        %1204 = vmatpush1.xpose.msra.mxu0 0.0
        %1205 = vmatprep.subr.mxu0 0.0
        %1206 = vmatpush1.xpose.msra.mxu0 0.0
        %1207 = vmatprep.subr.mxu0 0.0
        %1208 = vmatpush1.xpose.msra.mxu0 0.0
        %1209 = vmatprep.subr.mxu0 0.0
        %1210 = vmatpush1.xpose.msra.mxu0 0.0
        %1211 = vmatprep.subr.mxu0 0.0
        %1212 = vmatpush1.xpose.msra.mxu0 0.0
        %1213 = vmatprep.subr.mxu0 0.0
        %1214 = vmatpush1.xpose.msra.mxu0 0.0
        %1215 = vmatprep.subr.mxu0 0.0
        %1216 = vmatpush1.xpose.msra.mxu0 0.0
        %1217 = vmatprep.subr.mxu0 0.0
        %1218 = vmatpush1.xpose.msra.mxu0 0.0
        %1219 = vmatprep.subr.mxu0 0.0
        %1220 = vmatpush1.xpose.msra.mxu0 0.0
        %1221 = vmatprep.subr.mxu0 0.0
        %1222 = vmatpush1.xpose.msra.mxu0 0.0
        %1223 = vmatprep.subr.mxu0 0.0
        %1224 = vmatpush1.xpose.msra.mxu0 0.0
        %1225 = vmatprep.subr.mxu0 0.0
        %1226 = vmatpush1.xpose.msra.mxu0 0.0
        %1227 = vmatprep.subr.mxu0 0.0
        %1228 = vmatpush1.xpose.msra.mxu0 0.0
        %1229 = vmatprep.subr.mxu0 0.0
        %1230 = vmatpush1.xpose.msra.mxu0 0.0
        %1231 = vmatprep.mubr.f32.mxu0 0.0
        %1232 = vmatmul.mubr.f32.gmra.mrb[0].mxu0 %v1163
        %v1233 = vpop.f32.mrb[0].mxu0
        %v1234 = vadd.f32 0.0, %v1233
        %v1235 = vpop.f32.mrb[0].mxu0
        %1236 = vdwg.mxu0
        %1237 = vrot.lane.b32.xlu0 %v851, 96
        %v1238 = vpop.permute.xlu0 %1237
        %v1239 = vsel %vm858, %v851, 0
        %v1241 = vsel %vm858, %v1238, 0
        %1243 = vmatprep.subr.mxu0 0.0
        %1244 = vmatpush1.xpose.msra.mxu0 %v1241
        %1245 = vmatprep.subr.mxu0 0.0
        %1246 = vmatpush1.xpose.msra.mxu0 0.0
        %1247 = vmatprep.subr.mxu0 0.0
        %1248 = vmatpush1.xpose.msra.mxu0 0.0
        %1249 = vmatprep.subr.mxu0 0.0
        %1250 = vmatpush1.xpose.msra.mxu0 0.0
        %1251 = vmatprep.subr.mxu0 0.0
        %1252 = vmatpush1.xpose.msra.mxu0 0.0
        %1253 = vmatprep.subr.mxu0 0.0
        %1254 = vmatpush1.xpose.msra.mxu0 0.0
        %1255 = vmatprep.subr.mxu0 0.0
        %1256 = vmatpush1.xpose.msra.mxu0 0.0
        %1257 = vmatprep.subr.mxu0 0.0
        %1258 = vmatpush1.xpose.msra.mxu0 0.0
        %1259 = vmatprep.subr.mxu0 0.0
        %1260 = vmatpush1.xpose.msra.mxu0 0.0
        %1261 = vmatprep.subr.mxu0 0.0
        %1262 = vmatpush1.xpose.msra.mxu0 0.0
        %1263 = vmatprep.subr.mxu0 0.0
        %1264 = vmatpush1.xpose.msra.mxu0 0.0
        %1265 = vmatprep.subr.mxu0 0.0
        %1266 = vmatpush1.xpose.msra.mxu0 0.0
        %1267 = vmatprep.subr.mxu0 0.0
        %1268 = vmatpush1.xpose.msra.mxu0 0.0
        %1269 = vmatprep.subr.mxu0 0.0
        %1270 = vmatpush1.xpose.msra.mxu0 0.0
        %1271 = vmatprep.subr.mxu0 0.0
        %1272 = vmatpush1.xpose.msra.mxu0 0.0
        %1273 = vmatprep.subr.mxu0 0.0
        %1274 = vmatpush1.xpose.msra.mxu0 0.0
        %1275 = vmatprep.subr.mxu0 0.0
        %1276 = vmatpush1.xpose.msra.mxu0 0.0
        %1277 = vmatprep.subr.mxu0 0.0
        %1278 = vmatpush1.xpose.msra.mxu0 0.0
        %1279 = vmatprep.subr.mxu0 0.0
        %1280 = vmatpush1.xpose.msra.mxu0 0.0
        %1281 = vmatprep.subr.mxu0 0.0
        %1282 = vmatpush1.xpose.msra.mxu0 0.0
        %1283 = vmatprep.subr.mxu0 0.0
        %1284 = vmatpush1.xpose.msra.mxu0 0.0
        %1285 = vmatprep.subr.mxu0 0.0
        %1286 = vmatpush1.xpose.msra.mxu0 0.0
        %1287 = vmatprep.subr.mxu0 0.0
        %1288 = vmatpush1.xpose.msra.mxu0 0.0
        %1289 = vmatprep.subr.mxu0 0.0
        %1290 = vmatpush1.xpose.msra.mxu0 0.0
        %1291 = vmatprep.subr.mxu0 0.0
        %1292 = vmatpush1.xpose.msra.mxu0 0.0
        %1293 = vmatprep.subr.mxu0 0.0
        %1294 = vmatpush1.xpose.msra.mxu0 0.0
        %1295 = vmatprep.subr.mxu0 0.0
        %1296 = vmatpush1.xpose.msra.mxu0 0.0
        %1297 = vmatprep.subr.mxu0 0.0
        %1298 = vmatpush1.xpose.msra.mxu0 0.0
        %1299 = vmatprep.subr.mxu0 0.0
        %1300 = vmatpush1.xpose.msra.mxu0 0.0
        %1301 = vmatprep.subr.mxu0 0.0
        %1302 = vmatpush1.xpose.msra.mxu0 0.0
        %1303 = vmatprep.subr.mxu0 0.0
        %1304 = vmatpush1.xpose.msra.mxu0 0.0
        %1305 = vmatprep.subr.mxu0 0.0
        %1306 = vmatpush1.xpose.msra.mxu0 0.0
        %1307 = vmatprep.mubr.f32.mxu0 0.0
        %1308 = vmatmul.mubr.f32.gmra.mrb[0].mxu0 %v1239
        %v1309 = vpop.f32.mrb[0].mxu0
        %v1310 = vadd.f32 0.0, %v1309
        %v1311 = vpop.f32.mrb[0].mxu0
        %1312 = vdwg.mxu0
        %1313 = vrot.lane.b32.xlu0 %v853, 96
        %v1314 = vpop.permute.xlu0 %1313
        %v1315 = vsel %vm858, %v853, 0
        %v1317 = vsel %vm858, %v1314, 0
        %1319 = vmatprep.subr.mxu0 0.0
        %1320 = vmatpush1.xpose.msra.mxu0 %v1317
        %1321 = vmatprep.subr.mxu0 0.0
        %1322 = vmatpush1.xpose.msra.mxu0 0.0
        %1323 = vmatprep.subr.mxu0 0.0
        %1324 = vmatpush1.xpose.msra.mxu0 0.0
        %1325 = vmatprep.subr.mxu0 0.0
        %1326 = vmatpush1.xpose.msra.mxu0 0.0
        %1327 = vmatprep.subr.mxu0 0.0
        %1328 = vmatpush1.xpose.msra.mxu0 0.0
        %1329 = vmatprep.subr.mxu0 0.0
        %1330 = vmatpush1.xpose.msra.mxu0 0.0
        %1331 = vmatprep.subr.mxu0 0.0
        %1332 = vmatpush1.xpose.msra.mxu0 0.0
        %1333 = vmatprep.subr.mxu0 0.0
        %1334 = vmatpush1.xpose.msra.mxu0 0.0
        %1335 = vmatprep.subr.mxu0 0.0
        %1336 = vmatpush1.xpose.msra.mxu0 0.0
        %1337 = vmatprep.subr.mxu0 0.0
        %1338 = vmatpush1.xpose.msra.mxu0 0.0
        %1339 = vmatprep.subr.mxu0 0.0
        %1340 = vmatpush1.xpose.msra.mxu0 0.0
        %1341 = vmatprep.subr.mxu0 0.0
        %1342 = vmatpush1.xpose.msra.mxu0 0.0
        %1343 = vmatprep.subr.mxu0 0.0
        %1344 = vmatpush1.xpose.msra.mxu0 0.0
        %1345 = vmatprep.subr.mxu0 0.0
        %1346 = vmatpush1.xpose.msra.mxu0 0.0
        %1347 = vmatprep.subr.mxu0 0.0
        %1348 = vmatpush1.xpose.msra.mxu0 0.0
        %1349 = vmatprep.subr.mxu0 0.0
        %1350 = vmatpush1.xpose.msra.mxu0 0.0
        %1351 = vmatprep.subr.mxu0 0.0
        %1352 = vmatpush1.xpose.msra.mxu0 0.0
        %1353 = vmatprep.subr.mxu0 0.0
        %1354 = vmatpush1.xpose.msra.mxu0 0.0
        %1355 = vmatprep.subr.mxu0 0.0
        %1356 = vmatpush1.xpose.msra.mxu0 0.0
        %1357 = vmatprep.subr.mxu0 0.0
        %1358 = vmatpush1.xpose.msra.mxu0 0.0
        %1359 = vmatprep.subr.mxu0 0.0
        %1360 = vmatpush1.xpose.msra.mxu0 0.0
        %1361 = vmatprep.subr.mxu0 0.0
        %1362 = vmatpush1.xpose.msra.mxu0 0.0
        %1363 = vmatprep.subr.mxu0 0.0
        %1364 = vmatpush1.xpose.msra.mxu0 0.0
        %1365 = vmatprep.subr.mxu0 0.0
        %1366 = vmatpush1.xpose.msra.mxu0 0.0
        %1367 = vmatprep.subr.mxu0 0.0
        %1368 = vmatpush1.xpose.msra.mxu0 0.0
        %1369 = vmatprep.subr.mxu0 0.0
        %1370 = vmatpush1.xpose.msra.mxu0 0.0
        %1371 = vmatprep.subr.mxu0 0.0
        %1372 = vmatpush1.xpose.msra.mxu0 0.0
        %1373 = vmatprep.subr.mxu0 0.0
        %1374 = vmatpush1.xpose.msra.mxu0 0.0
        %1375 = vmatprep.subr.mxu0 0.0
        %1376 = vmatpush1.xpose.msra.mxu0 0.0
        %1377 = vmatprep.subr.mxu0 0.0
        %1378 = vmatpush1.xpose.msra.mxu0 0.0
        %1379 = vmatprep.subr.mxu0 0.0
        %1380 = vmatpush1.xpose.msra.mxu0 0.0
        %1381 = vmatprep.subr.mxu0 0.0
        %1382 = vmatpush1.xpose.msra.mxu0 0.0
        %1383 = vmatprep.mubr.f32.mxu0 0.0
        %1384 = vmatmul.mubr.f32.gmra.mrb[0].mxu0 %v1315
        %v1385 = vpop.f32.mrb[0].mxu0
        %v1386 = vadd.f32 0.0, %v1385
        %v1387 = vpop.f32.mrb[0].mxu0
        %1388 = vdwg.mxu0
        %1389 = vrot.lane.b32.xlu0 %v855, 96
        %v1390 = vpop.permute.xlu0 %1389
        %v1391 = vsel %vm858, %v855, 0
        %v1393 = vsel %vm858, %v1390, 0
        %1395 = vmatprep.subr.mxu0 0.0
        %1396 = vmatpush1.xpose.msra.mxu0 %v1393
        %1397 = vmatprep.subr.mxu0 0.0
        %1398 = vmatpush1.xpose.msra.mxu0 0.0
        %1399 = vmatprep.subr.mxu0 0.0
        %1400 = vmatpush1.xpose.msra.mxu0 0.0
        %1401 = vmatprep.subr.mxu0 0.0
        %1402 = vmatpush1.xpose.msra.mxu0 0.0
        %1403 = vmatprep.subr.mxu0 0.0
        %1404 = vmatpush1.xpose.msra.mxu0 0.0
        %1405 = vmatprep.subr.mxu0 0.0
        %1406 = vmatpush1.xpose.msra.mxu0 0.0
        %1407 = vmatprep.subr.mxu0 0.0
        %1408 = vmatpush1.xpose.msra.mxu0 0.0
        %1409 = vmatprep.subr.mxu0 0.0
        %1410 = vmatpush1.xpose.msra.mxu0 0.0
        %1411 = vmatprep.subr.mxu0 0.0
        %1412 = vmatpush1.xpose.msra.mxu0 0.0
        %1413 = vmatprep.subr.mxu0 0.0
        %1414 = vmatpush1.xpose.msra.mxu0 0.0
        %1415 = vmatprep.subr.mxu0 0.0
        %1416 = vmatpush1.xpose.msra.mxu0 0.0
        %1417 = vmatprep.subr.mxu0 0.0
        %1418 = vmatpush1.xpose.msra.mxu0 0.0
        %1419 = vmatprep.subr.mxu0 0.0
        %1420 = vmatpush1.xpose.msra.mxu0 0.0
        %1421 = vmatprep.subr.mxu0 0.0
        %1422 = vmatpush1.xpose.msra.mxu0 0.0
        %1423 = vmatprep.subr.mxu0 0.0
        %1424 = vmatpush1.xpose.msra.mxu0 0.0
        %1425 = vmatprep.subr.mxu0 0.0
        %1426 = vmatpush1.xpose.msra.mxu0 0.0
        %1427 = vmatprep.subr.mxu0 0.0
        %1428 = vmatpush1.xpose.msra.mxu0 0.0
        %1429 = vmatprep.subr.mxu0 0.0
        %1430 = vmatpush1.xpose.msra.mxu0 0.0
        %1431 = vmatprep.subr.mxu0 0.0
        %1432 = vmatpush1.xpose.msra.mxu0 0.0
        %1433 = vmatprep.subr.mxu0 0.0
        %1434 = vmatpush1.xpose.msra.mxu0 0.0
        %1435 = vmatprep.subr.mxu0 0.0
        %1436 = vmatpush1.xpose.msra.mxu0 0.0
        %1437 = vmatprep.subr.mxu0 0.0
        %1438 = vmatpush1.xpose.msra.mxu0 0.0
        %1439 = vmatprep.subr.mxu0 0.0
        %1440 = vmatpush1.xpose.msra.mxu0 0.0
        %1441 = vmatprep.subr.mxu0 0.0
        %1442 = vmatpush1.xpose.msra.mxu0 0.0
        %1443 = vmatprep.subr.mxu0 0.0
        %1444 = vmatpush1.xpose.msra.mxu0 0.0
        %1445 = vmatprep.subr.mxu0 0.0
        %1446 = vmatpush1.xpose.msra.mxu0 0.0
        %1447 = vmatprep.subr.mxu0 0.0
        %1448 = vmatpush1.xpose.msra.mxu0 0.0
        %1449 = vmatprep.subr.mxu0 0.0
        %1450 = vmatpush1.xpose.msra.mxu0 0.0
        %1451 = vmatprep.subr.mxu0 0.0
        %1452 = vmatpush1.xpose.msra.mxu0 0.0
        %1453 = vmatprep.subr.mxu0 0.0
        %1454 = vmatpush1.xpose.msra.mxu0 0.0
        %1455 = vmatprep.subr.mxu0 0.0
        %1456 = vmatpush1.xpose.msra.mxu0 0.0
        %1457 = vmatprep.subr.mxu0 0.0
        %1458 = vmatpush1.xpose.msra.mxu0 0.0
        %1459 = vmatprep.mubr.f32.mxu0 0.0
        %1460 = vmatmul.mubr.f32.gmra.mrb[0].mxu0 %v1391
        %v1461 = vpop.f32.mrb[0].mxu0
        %v1462 = vadd.f32 0.0, %v1461
        %v1463 = vpop.f32.mrb[0].mxu0
        %1464 = vdwg.mxu0
        %v1465 = vmul.f32 %v930, 0.35355338
        %v1466 = vmul.f32 %v1006, 0.35355338
        %v1467 = vmul.f32 %v1082, 0.35355338
        %v1468 = vmul.f32 %v1158, 0.35355338
        %v1469 = vmul.f32 %v1234, 0.35355338
        %v1470 = vmul.f32 %v1310, 0.35355338
        %v1471 = vmul.f32 %v1386, 0.35355338
        %v1472 = vmul.f32 %v1462, 0.35355338
        %v1473 = vlaneseq
        %v1474 = vshrl.u32 %v1473, 7
        %v1475 = vlaneseq
        %v1476 = vand.u32 %v1475, 127
        %vm1477 = vcmp.ge.s32.totalorder %v1474, %v1476
        %v1478 = vsel %vm1477, 1, 0
        %vm1479 = vcmp.eq.s32.totalorder %v1478, 1
        %v1480 = vsel %vm1479, %v1465, -1e+30
        %v1481 = vsel %vm1479, %v1466, -1e+30
        %v1482 = vsel %vm1479, %v1467, -1e+30
        %v1483 = vsel %vm1479, %v1468, -1e+30
        %v1484 = vsel %vm1479, %v1469, -1e+30
        %v1485 = vsel %vm1479, %v1470, -1e+30
        %v1486 = vsel %vm1479, %v1471, -1e+30
        %v1487 = vsel %vm1479, %v1472, -1e+30
        %v1488 = vsel %vm858, %v1480, -inf
        %1489 = vmax.xlane.f32.xlu0 %v1488
        %v1490 = vpop.xlane.xlu0 %1489
        %v1491 = vsel %vm858, %v1481, -inf
        %1492 = vmax.xlane.f32.xlu0 %v1491
        %v1493 = vpop.xlane.xlu0 %1492
        %v1494 = vsel %vm858, %v1482, -inf
        %1495 = vmax.xlane.f32.xlu0 %v1494
        %v1496 = vpop.xlane.xlu0 %1495
        %v1497 = vsel %vm858, %v1483, -inf
        %1498 = vmax.xlane.f32.xlu0 %v1497
        %v1499 = vpop.xlane.xlu0 %1498
        %v1500 = vsel %vm858, %v1484, -inf
        %1501 = vmax.xlane.f32.xlu0 %v1500
        %v1502 = vpop.xlane.xlu0 %1501
        %v1503 = vsel %vm858, %v1485, -inf
        %1504 = vmax.xlane.f32.xlu0 %v1503
        %v1505 = vpop.xlane.xlu0 %1504
        %v1506 = vsel %vm858, %v1486, -inf
        %1507 = vmax.xlane.f32.xlu0 %v1506
        %v1508 = vpop.xlane.xlu0 %1507
        %v1509 = vsel %vm858, %v1487, -inf
        %1510 = vmax.xlane.f32.xlu0 %v1509
        %v1511 = vpop.xlane.xlu0 %1510
        %v1512 = vsub.f32 %v1480, %v1490
        %v1513 = vsub.f32 %v1481, %v1493
        %v1514 = vsub.f32 %v1482, %v1496
        %v1515 = vsub.f32 %v1483, %v1499
        %v1516 = vsub.f32 %v1484, %v1502
        %v1517 = vsub.f32 %v1485, %v1505
        %v1518 = vsub.f32 %v1486, %v1508
        %v1519 = vsub.f32 %v1487, %v1511
        %v1520 = vmul.f32 %v1512, 1.442695
        %v1521 = vpow.pop %v1520
        %v1522 = vmul.f32 %v1513, 1.442695
        %v1523 = vpow.pop %v1522
        %v1524 = vmul.f32 %v1514, 1.442695
        %v1525 = vpow.pop %v1524
        %v1526 = vmul.f32 %v1515, 1.442695
        %v1527 = vpow.pop %v1526
        %v1528 = vmul.f32 %v1516, 1.442695
        %v1529 = vpow.pop %v1528
        %v1530 = vmul.f32 %v1517, 1.442695
        %v1531 = vpow.pop %v1530
        %v1532 = vmul.f32 %v1518, 1.442695
        %v1533 = vpow.pop %v1532
        %v1534 = vmul.f32 %v1519, 1.442695
        %v1535 = vpow.pop %v1534
        %v1536 = vsel %vm858, %v1521, 0.0
        %1537 = vadd.xlane.f32.xlu0 %v1536
        %v1538 = vpop.xlane.xlu0 %1537
        %v1539 = vsel %vm858, %v1523, 0.0
        %1540 = vadd.xlane.f32.xlu0 %v1539
        %v1541 = vpop.xlane.xlu0 %1540
        %v1542 = vsel %vm858, %v1525, 0.0
        %1543 = vadd.xlane.f32.xlu0 %v1542
        %v1544 = vpop.xlane.xlu0 %1543
        %v1545 = vsel %vm858, %v1527, 0.0
        %1546 = vadd.xlane.f32.xlu0 %v1545
        %v1547 = vpop.xlane.xlu0 %1546
        %v1548 = vsel %vm858, %v1529, 0.0
        %1549 = vadd.xlane.f32.xlu0 %v1548
        %v1550 = vpop.xlane.xlu0 %1549
        %v1551 = vsel %vm858, %v1531, 0.0
        %1552 = vadd.xlane.f32.xlu0 %v1551
        %v1553 = vpop.xlane.xlu0 %1552
        %v1554 = vsel %vm858, %v1533, 0.0
        %1555 = vadd.xlane.f32.xlu0 %v1554
        %v1556 = vpop.xlane.xlu0 %1555
        %v1557 = vsel %vm858, %v1535, 0.0
        %1558 = vadd.xlane.f32.xlu0 %v1557
        %v1559 = vpop.xlane.xlu0 %1558
        %v1560 = vrcp.pop %v1538
        %v1561 = vrcp.pop %v1541
        %v1562 = vrcp.pop %v1544
        %v1563 = vrcp.pop %v1547
        %v1564 = vrcp.pop %v1550
        %v1565 = vrcp.pop %v1553
        %v1566 = vrcp.pop %v1556
        %v1567 = vrcp.pop %v1559
        %v1568 = vmul.f32 %v1521, %v1560
        %v1569 = vmul.f32 %v1523, %v1561
        %v1570 = vmul.f32 %v1525, %v1562
        %v1571 = vmul.f32 %v1527, %v1563
        %v1572 = vmul.f32 %v1529, %v1564
        %v1573 = vmul.f32 %v1531, %v1565
        %v1574 = vmul.f32 %v1533, %v1566
        %v1575 = vmul.f32 %v1535, %v1567
        %1576 = vrot.lane.b32.xlu0 %v834, 64
        %v1577 = vpop.permute.xlu0 %1576
        %v1580 = vsel %vm858, %v1568, 0
        %1582 = vmatprep.subr.mxu0 0.0
        %1583 = vmatpush1.msra.mxu0 %v1577
        %1584 = vmatprep.subr.mxu0 0.0
        %1585 = vmatpush1.msra.mxu0 0.0
        %1586 = vmatprep.subr.mxu0 0.0
        %1587 = vmatpush1.msra.mxu0 0.0
        %1588 = vmatprep.subr.mxu0 0.0
        %1589 = vmatpush1.msra.mxu0 0.0
        %1590 = vmatprep.subr.mxu0 0.0
        %1591 = vmatpush1.msra.mxu0 0.0
        %1592 = vmatprep.subr.mxu0 0.0
        %1593 = vmatpush1.msra.mxu0 0.0
        %1594 = vmatprep.subr.mxu0 0.0
        %1595 = vmatpush1.msra.mxu0 0.0
        %1596 = vmatprep.subr.mxu0 0.0
        %1597 = vmatpush1.msra.mxu0 0.0
        %1598 = vmatprep.subr.mxu0 0.0
        %1599 = vmatpush1.msra.mxu0 0.0
        %1600 = vmatprep.subr.mxu0 0.0
        %1601 = vmatpush1.msra.mxu0 0.0
        %1602 = vmatprep.subr.mxu0 0.0
        %1603 = vmatpush1.msra.mxu0 0.0
        %1604 = vmatprep.subr.mxu0 0.0
        %1605 = vmatpush1.msra.mxu0 0.0
        %1606 = vmatprep.subr.mxu0 0.0
        %1607 = vmatpush1.msra.mxu0 0.0
        %1608 = vmatprep.subr.mxu0 0.0
        %1609 = vmatpush1.msra.mxu0 0.0
        %1610 = vmatprep.subr.mxu0 0.0
        %1611 = vmatpush1.msra.mxu0 0.0
        %1612 = vmatprep.subr.mxu0 0.0
        %1613 = vmatpush1.msra.mxu0 0.0
        %1614 = vmatprep.subr.mxu0 0.0
        %1615 = vmatpush1.msra.mxu0 0.0
        %1616 = vmatprep.subr.mxu0 0.0
        %1617 = vmatpush1.msra.mxu0 0.0
        %1618 = vmatprep.subr.mxu0 0.0
        %1619 = vmatpush1.msra.mxu0 0.0
        %1620 = vmatprep.subr.mxu0 0.0
        %1621 = vmatpush1.msra.mxu0 0.0
        %1622 = vmatprep.subr.mxu0 0.0
        %1623 = vmatpush1.msra.mxu0 0.0
        %1624 = vmatprep.subr.mxu0 0.0
        %1625 = vmatpush1.msra.mxu0 0.0
        %1626 = vmatprep.subr.mxu0 0.0
        %1627 = vmatpush1.msra.mxu0 0.0
        %1628 = vmatprep.subr.mxu0 0.0
        %1629 = vmatpush1.msra.mxu0 0.0
        %1630 = vmatprep.subr.mxu0 0.0
        %1631 = vmatpush1.msra.mxu0 0.0
        %1632 = vmatprep.subr.mxu0 0.0
        %1633 = vmatpush1.msra.mxu0 0.0
        %1634 = vmatprep.subr.mxu0 0.0
        %1635 = vmatpush1.msra.mxu0 0.0
        %1636 = vmatprep.subr.mxu0 0.0
        %1637 = vmatpush1.msra.mxu0 0.0
        %1638 = vmatprep.subr.mxu0 0.0
        %1639 = vmatpush1.msra.mxu0 0.0
        %1640 = vmatprep.subr.mxu0 0.0
        %1641 = vmatpush1.msra.mxu0 0.0
        %1642 = vmatprep.subr.mxu0 0.0
        %1643 = vmatpush1.msra.mxu0 0.0
        %1644 = vmatprep.subr.mxu0 0.0
        %1645 = vmatpush1.msra.mxu0 0.0
        %1646 = vmatprep.mubr.f32.mxu0 0.0
        %1647 = vmatmul.mubr.f32.gmra.mrb[0].mxu0 %v1580
        %v1648 = vpop.f32.mrb[0].mxu0
        %v1649 = vadd.f32 0.0, %v1648
        %v1650 = vpop.f32.mrb[0].mxu0
        %1651 = vdwg.mxu0
        %1652 = vrot.lane.b32.xlu0 %v839, 64
        %v1653 = vpop.permute.xlu0 %1652
        %v1656 = vsel %vm858, %v1569, 0
        %1658 = vmatprep.subr.mxu0 0.0
        %1659 = vmatpush1.msra.mxu0 %v1653
        %1660 = vmatprep.subr.mxu0 0.0
        %1661 = vmatpush1.msra.mxu0 0.0
        %1662 = vmatprep.subr.mxu0 0.0
        %1663 = vmatpush1.msra.mxu0 0.0
        %1664 = vmatprep.subr.mxu0 0.0
        %1665 = vmatpush1.msra.mxu0 0.0
        %1666 = vmatprep.subr.mxu0 0.0
        %1667 = vmatpush1.msra.mxu0 0.0
        %1668 = vmatprep.subr.mxu0 0.0
        %1669 = vmatpush1.msra.mxu0 0.0
        %1670 = vmatprep.subr.mxu0 0.0
        %1671 = vmatpush1.msra.mxu0 0.0
        %1672 = vmatprep.subr.mxu0 0.0
        %1673 = vmatpush1.msra.mxu0 0.0
        %1674 = vmatprep.subr.mxu0 0.0
        %1675 = vmatpush1.msra.mxu0 0.0
        %1676 = vmatprep.subr.mxu0 0.0
        %1677 = vmatpush1.msra.mxu0 0.0
        %1678 = vmatprep.subr.mxu0 0.0
        %1679 = vmatpush1.msra.mxu0 0.0
        %1680 = vmatprep.subr.mxu0 0.0
        %1681 = vmatpush1.msra.mxu0 0.0
        %1682 = vmatprep.subr.mxu0 0.0
        %1683 = vmatpush1.msra.mxu0 0.0
        %1684 = vmatprep.subr.mxu0 0.0
        %1685 = vmatpush1.msra.mxu0 0.0
        %1686 = vmatprep.subr.mxu0 0.0
        %1687 = vmatpush1.msra.mxu0 0.0
        %1688 = vmatprep.subr.mxu0 0.0
        %1689 = vmatpush1.msra.mxu0 0.0
        %1690 = vmatprep.subr.mxu0 0.0
        %1691 = vmatpush1.msra.mxu0 0.0
        %1692 = vmatprep.subr.mxu0 0.0
        %1693 = vmatpush1.msra.mxu0 0.0
        %1694 = vmatprep.subr.mxu0 0.0
        %1695 = vmatpush1.msra.mxu0 0.0
        %1696 = vmatprep.subr.mxu0 0.0
        %1697 = vmatpush1.msra.mxu0 0.0
        %1698 = vmatprep.subr.mxu0 0.0
        %1699 = vmatpush1.msra.mxu0 0.0
        %1700 = vmatprep.subr.mxu0 0.0
        %1701 = vmatpush1.msra.mxu0 0.0
        %1702 = vmatprep.subr.mxu0 0.0
        %1703 = vmatpush1.msra.mxu0 0.0
        %1704 = vmatprep.subr.mxu0 0.0
        %1705 = vmatpush1.msra.mxu0 0.0
        %1706 = vmatprep.subr.mxu0 0.0
        %1707 = vmatpush1.msra.mxu0 0.0
        %1708 = vmatprep.subr.mxu0 0.0
        %1709 = vmatpush1.msra.mxu0 0.0
        %1710 = vmatprep.subr.mxu0 0.0
        %1711 = vmatpush1.msra.mxu0 0.0
        %1712 = vmatprep.subr.mxu0 0.0
        %1713 = vmatpush1.msra.mxu0 0.0
        %1714 = vmatprep.subr.mxu0 0.0
        %1715 = vmatpush1.msra.mxu0 0.0
        %1716 = vmatprep.subr.mxu0 0.0
        %1717 = vmatpush1.msra.mxu0 0.0
        %1718 = vmatprep.subr.mxu0 0.0
        %1719 = vmatpush1.msra.mxu0 0.0
        %1720 = vmatprep.subr.mxu0 0.0
        %1721 = vmatpush1.msra.mxu0 0.0
        %1722 = vmatprep.mubr.f32.mxu0 0.0
        %1723 = vmatmul.mubr.f32.gmra.mrb[0].mxu0 %v1656
        %v1724 = vpop.f32.mrb[0].mxu0
        %v1725 = vadd.f32 0.0, %v1724
        %v1726 = vpop.f32.mrb[0].mxu0
        %1727 = vdwg.mxu0
        %1728 = vrot.lane.b32.xlu0 %v845, 64
        %v1729 = vpop.permute.xlu0 %1728
        %v1732 = vsel %vm858, %v1570, 0
        %1734 = vmatprep.subr.mxu0 0.0
        %1735 = vmatpush1.msra.mxu0 %v1729
        %1736 = vmatprep.subr.mxu0 0.0
        %1737 = vmatpush1.msra.mxu0 0.0
        %1738 = vmatprep.subr.mxu0 0.0
        %1739 = vmatpush1.msra.mxu0 0.0
        %1740 = vmatprep.subr.mxu0 0.0
        %1741 = vmatpush1.msra.mxu0 0.0
        %1742 = vmatprep.subr.mxu0 0.0
        %1743 = vmatpush1.msra.mxu0 0.0
        %1744 = vmatprep.subr.mxu0 0.0
        %1745 = vmatpush1.msra.mxu0 0.0
        %1746 = vmatprep.subr.mxu0 0.0
        %1747 = vmatpush1.msra.mxu0 0.0
        %1748 = vmatprep.subr.mxu0 0.0
        %1749 = vmatpush1.msra.mxu0 0.0
        %1750 = vmatprep.subr.mxu0 0.0
        %1751 = vmatpush1.msra.mxu0 0.0
        %1752 = vmatprep.subr.mxu0 0.0
        %1753 = vmatpush1.msra.mxu0 0.0
        %1754 = vmatprep.subr.mxu0 0.0
        %1755 = vmatpush1.msra.mxu0 0.0
        %1756 = vmatprep.subr.mxu0 0.0
        %1757 = vmatpush1.msra.mxu0 0.0
        %1758 = vmatprep.subr.mxu0 0.0
        %1759 = vmatpush1.msra.mxu0 0.0
        %1760 = vmatprep.subr.mxu0 0.0
        %1761 = vmatpush1.msra.mxu0 0.0
        %1762 = vmatprep.subr.mxu0 0.0
        %1763 = vmatpush1.msra.mxu0 0.0
        %1764 = vmatprep.subr.mxu0 0.0
        %1765 = vmatpush1.msra.mxu0 0.0
        %1766 = vmatprep.subr.mxu0 0.0
        %1767 = vmatpush1.msra.mxu0 0.0
        %1768 = vmatprep.subr.mxu0 0.0
        %1769 = vmatpush1.msra.mxu0 0.0
        %1770 = vmatprep.subr.mxu0 0.0
        %1771 = vmatpush1.msra.mxu0 0.0
        %1772 = vmatprep.subr.mxu0 0.0
        %1773 = vmatpush1.msra.mxu0 0.0
        %1774 = vmatprep.subr.mxu0 0.0
        %1775 = vmatpush1.msra.mxu0 0.0
        %1776 = vmatprep.subr.mxu0 0.0
        %1777 = vmatpush1.msra.mxu0 0.0
        %1778 = vmatprep.subr.mxu0 0.0
        %1779 = vmatpush1.msra.mxu0 0.0
        %1780 = vmatprep.subr.mxu0 0.0
        %1781 = vmatpush1.msra.mxu0 0.0
        %1782 = vmatprep.subr.mxu0 0.0
        %1783 = vmatpush1.msra.mxu0 0.0
        %1784 = vmatprep.subr.mxu0 0.0
        %1785 = vmatpush1.msra.mxu0 0.0
        %1786 = vmatprep.subr.mxu0 0.0
        %1787 = vmatpush1.msra.mxu0 0.0
        %1788 = vmatprep.subr.mxu0 0.0
        %1789 = vmatpush1.msra.mxu0 0.0
        %1790 = vmatprep.subr.mxu0 0.0
        %1791 = vmatpush1.msra.mxu0 0.0
        %1792 = vmatprep.subr.mxu0 0.0
        %1793 = vmatpush1.msra.mxu0 0.0
        %1794 = vmatprep.subr.mxu0 0.0
        %1795 = vmatpush1.msra.mxu0 0.0
        %1796 = vmatprep.subr.mxu0 0.0
        %1797 = vmatpush1.msra.mxu0 0.0
        %1798 = vmatprep.mubr.f32.mxu0 0.0
        %1799 = vmatmul.mubr.f32.gmra.mrb[0].mxu0 %v1732
        %v1800 = vpop.f32.mrb[0].mxu0
        %v1801 = vadd.f32 0.0, %v1800
        %v1802 = vpop.f32.mrb[0].mxu0
        %1803 = vdwg.mxu0
        %1804 = vrot.lane.b32.xlu0 %v847, 64
        %v1805 = vpop.permute.xlu0 %1804
        %v1808 = vsel %vm858, %v1571, 0
        %1810 = vmatprep.subr.mxu0 0.0
        %1811 = vmatpush1.msra.mxu0 %v1805
        %1812 = vmatprep.subr.mxu0 0.0
        %1813 = vmatpush1.msra.mxu0 0.0
        %1814 = vmatprep.subr.mxu0 0.0
        %1815 = vmatpush1.msra.mxu0 0.0
        %1816 = vmatprep.subr.mxu0 0.0
        %1817 = vmatpush1.msra.mxu0 0.0
        %1818 = vmatprep.subr.mxu0 0.0
        %1819 = vmatpush1.msra.mxu0 0.0
        %1820 = vmatprep.subr.mxu0 0.0
        %1821 = vmatpush1.msra.mxu0 0.0
        %1822 = vmatprep.subr.mxu0 0.0
        %1823 = vmatpush1.msra.mxu0 0.0
        %1824 = vmatprep.subr.mxu0 0.0
        %1825 = vmatpush1.msra.mxu0 0.0
        %1826 = vmatprep.subr.mxu0 0.0
        %1827 = vmatpush1.msra.mxu0 0.0
        %1828 = vmatprep.subr.mxu0 0.0
        %1829 = vmatpush1.msra.mxu0 0.0
        %1830 = vmatprep.subr.mxu0 0.0
        %1831 = vmatpush1.msra.mxu0 0.0
        %1832 = vmatprep.subr.mxu0 0.0
        %1833 = vmatpush1.msra.mxu0 0.0
        %1834 = vmatprep.subr.mxu0 0.0
        %1835 = vmatpush1.msra.mxu0 0.0
        %1836 = vmatprep.subr.mxu0 0.0
        %1837 = vmatpush1.msra.mxu0 0.0
        %1838 = vmatprep.subr.mxu0 0.0
        %1839 = vmatpush1.msra.mxu0 0.0
        %1840 = vmatprep.subr.mxu0 0.0
        %1841 = vmatpush1.msra.mxu0 0.0
        %1842 = vmatprep.subr.mxu0 0.0
        %1843 = vmatpush1.msra.mxu0 0.0
        %1844 = vmatprep.subr.mxu0 0.0
        %1845 = vmatpush1.msra.mxu0 0.0
        %1846 = vmatprep.subr.mxu0 0.0
        %1847 = vmatpush1.msra.mxu0 0.0
        %1848 = vmatprep.subr.mxu0 0.0
        %1849 = vmatpush1.msra.mxu0 0.0
        %1850 = vmatprep.subr.mxu0 0.0
        %1851 = vmatpush1.msra.mxu0 0.0
        %1852 = vmatprep.subr.mxu0 0.0
        %1853 = vmatpush1.msra.mxu0 0.0
        %1854 = vmatprep.subr.mxu0 0.0
        %1855 = vmatpush1.msra.mxu0 0.0
        %1856 = vmatprep.subr.mxu0 0.0
        %1857 = vmatpush1.msra.mxu0 0.0
        %1858 = vmatprep.subr.mxu0 0.0
        %1859 = vmatpush1.msra.mxu0 0.0
        %1860 = vmatprep.subr.mxu0 0.0
        %1861 = vmatpush1.msra.mxu0 0.0
        %1862 = vmatprep.subr.mxu0 0.0
        %1863 = vmatpush1.msra.mxu0 0.0
        %1864 = vmatprep.subr.mxu0 0.0
        %1865 = vmatpush1.msra.mxu0 0.0
        %1866 = vmatprep.subr.mxu0 0.0
        %1867 = vmatpush1.msra.mxu0 0.0
        %1868 = vmatprep.subr.mxu0 0.0
        %1869 = vmatpush1.msra.mxu0 0.0
        %1870 = vmatprep.subr.mxu0 0.0
        %1871 = vmatpush1.msra.mxu0 0.0
        %1872 = vmatprep.subr.mxu0 0.0
        %1873 = vmatpush1.msra.mxu0 0.0
        %1874 = vmatprep.mubr.f32.mxu0 0.0
        %1875 = vmatmul.mubr.f32.gmra.mrb[0].mxu0 %v1808
        %v1876 = vpop.f32.mrb[0].mxu0
        %v1877 = vadd.f32 0.0, %v1876
        %v1878 = vpop.f32.mrb[0].mxu0
        %1879 = vdwg.mxu0
        %1880 = vrot.lane.b32.xlu0 %v849, 64
        %v1881 = vpop.permute.xlu0 %1880
        %v1884 = vsel %vm858, %v1572, 0
        %1886 = vmatprep.subr.mxu0 0.0
        %1887 = vmatpush1.msra.mxu0 %v1881
        %1888 = vmatprep.subr.mxu0 0.0
        %1889 = vmatpush1.msra.mxu0 0.0
        %1890 = vmatprep.subr.mxu0 0.0
        %1891 = vmatpush1.msra.mxu0 0.0
        %1892 = vmatprep.subr.mxu0 0.0
        %1893 = vmatpush1.msra.mxu0 0.0
        %1894 = vmatprep.subr.mxu0 0.0
        %1895 = vmatpush1.msra.mxu0 0.0
        %1896 = vmatprep.subr.mxu0 0.0
        %1897 = vmatpush1.msra.mxu0 0.0
        %1898 = vmatprep.subr.mxu0 0.0
        %1899 = vmatpush1.msra.mxu0 0.0
        %1900 = vmatprep.subr.mxu0 0.0
        %1901 = vmatpush1.msra.mxu0 0.0
        %1902 = vmatprep.subr.mxu0 0.0
        %1903 = vmatpush1.msra.mxu0 0.0
        %1904 = vmatprep.subr.mxu0 0.0
        %1905 = vmatpush1.msra.mxu0 0.0
        %1906 = vmatprep.subr.mxu0 0.0
        %1907 = vmatpush1.msra.mxu0 0.0
        %1908 = vmatprep.subr.mxu0 0.0
        %1909 = vmatpush1.msra.mxu0 0.0
        %1910 = vmatprep.subr.mxu0 0.0
        %1911 = vmatpush1.msra.mxu0 0.0
        %1912 = vmatprep.subr.mxu0 0.0
        %1913 = vmatpush1.msra.mxu0 0.0
        %1914 = vmatprep.subr.mxu0 0.0
        %1915 = vmatpush1.msra.mxu0 0.0
        %1916 = vmatprep.subr.mxu0 0.0
        %1917 = vmatpush1.msra.mxu0 0.0
        %1918 = vmatprep.subr.mxu0 0.0
        %1919 = vmatpush1.msra.mxu0 0.0
        %1920 = vmatprep.subr.mxu0 0.0
        %1921 = vmatpush1.msra.mxu0 0.0
        %1922 = vmatprep.subr.mxu0 0.0
        %1923 = vmatpush1.msra.mxu0 0.0
        %1924 = vmatprep.subr.mxu0 0.0
        %1925 = vmatpush1.msra.mxu0 0.0
        %1926 = vmatprep.subr.mxu0 0.0
        %1927 = vmatpush1.msra.mxu0 0.0
        %1928 = vmatprep.subr.mxu0 0.0
        %1929 = vmatpush1.msra.mxu0 0.0
        %1930 = vmatprep.subr.mxu0 0.0
        %1931 = vmatpush1.msra.mxu0 0.0
        %1932 = vmatprep.subr.mxu0 0.0
        %1933 = vmatpush1.msra.mxu0 0.0
        %1934 = vmatprep.subr.mxu0 0.0
        %1935 = vmatpush1.msra.mxu0 0.0
        %1936 = vmatprep.subr.mxu0 0.0
        %1937 = vmatpush1.msra.mxu0 0.0
        %1938 = vmatprep.subr.mxu0 0.0
        %1939 = vmatpush1.msra.mxu0 0.0
        %1940 = vmatprep.subr.mxu0 0.0
        %1941 = vmatpush1.msra.mxu0 0.0
        %1942 = vmatprep.subr.mxu0 0.0
        %1943 = vmatpush1.msra.mxu0 0.0
        %1944 = vmatprep.subr.mxu0 0.0
        %1945 = vmatpush1.msra.mxu0 0.0
        %1946 = vmatprep.subr.mxu0 0.0
        %1947 = vmatpush1.msra.mxu0 0.0
        %1948 = vmatprep.subr.mxu0 0.0
        %1949 = vmatpush1.msra.mxu0 0.0
        %1950 = vmatprep.mubr.f32.mxu0 0.0
        %1951 = vmatmul.mubr.f32.gmra.mrb[0].mxu0 %v1884
        %v1952 = vpop.f32.mrb[0].mxu0
        %v1953 = vadd.f32 0.0, %v1952
        %v1954 = vpop.f32.mrb[0].mxu0
        %1955 = vdwg.mxu0
        %1956 = vrot.lane.b32.xlu0 %v851, 64
        %v1957 = vpop.permute.xlu0 %1956
        %v1960 = vsel %vm858, %v1573, 0
        %1962 = vmatprep.subr.mxu0 0.0
        %1963 = vmatpush1.msra.mxu0 %v1957
        %1964 = vmatprep.subr.mxu0 0.0
        %1965 = vmatpush1.msra.mxu0 0.0
        %1966 = vmatprep.subr.mxu0 0.0
        %1967 = vmatpush1.msra.mxu0 0.0
        %1968 = vmatprep.subr.mxu0 0.0
        %1969 = vmatpush1.msra.mxu0 0.0
        %1970 = vmatprep.subr.mxu0 0.0
        %1971 = vmatpush1.msra.mxu0 0.0
        %1972 = vmatprep.subr.mxu0 0.0
        %1973 = vmatpush1.msra.mxu0 0.0
        %1974 = vmatprep.subr.mxu0 0.0
        %1975 = vmatpush1.msra.mxu0 0.0
        %1976 = vmatprep.subr.mxu0 0.0
        %1977 = vmatpush1.msra.mxu0 0.0
        %1978 = vmatprep.subr.mxu0 0.0
        %1979 = vmatpush1.msra.mxu0 0.0
        %1980 = vmatprep.subr.mxu0 0.0
        %1981 = vmatpush1.msra.mxu0 0.0
        %1982 = vmatprep.subr.mxu0 0.0
        %1983 = vmatpush1.msra.mxu0 0.0
        %1984 = vmatprep.subr.mxu0 0.0
        %1985 = vmatpush1.msra.mxu0 0.0
        %1986 = vmatprep.subr.mxu0 0.0
        %1987 = vmatpush1.msra.mxu0 0.0
        %1988 = vmatprep.subr.mxu0 0.0
        %1989 = vmatpush1.msra.mxu0 0.0
        %1990 = vmatprep.subr.mxu0 0.0
        %1991 = vmatpush1.msra.mxu0 0.0
        %1992 = vmatprep.subr.mxu0 0.0
        %1993 = vmatpush1.msra.mxu0 0.0
        %1994 = vmatprep.subr.mxu0 0.0
        %1995 = vmatpush1.msra.mxu0 0.0
        %1996 = vmatprep.subr.mxu0 0.0
        %1997 = vmatpush1.msra.mxu0 0.0
        %1998 = vmatprep.subr.mxu0 0.0
        %1999 = vmatpush1.msra.mxu0 0.0
        %2000 = vmatprep.subr.mxu0 0.0
        %2001 = vmatpush1.msra.mxu0 0.0
        %2002 = vmatprep.subr.mxu0 0.0
        %2003 = vmatpush1.msra.mxu0 0.0
        %2004 = vmatprep.subr.mxu0 0.0
        %2005 = vmatpush1.msra.mxu0 0.0
        %2006 = vmatprep.subr.mxu0 0.0
        %2007 = vmatpush1.msra.mxu0 0.0
        %2008 = vmatprep.subr.mxu0 0.0
        %2009 = vmatpush1.msra.mxu0 0.0
        %2010 = vmatprep.subr.mxu0 0.0
        %2011 = vmatpush1.msra.mxu0 0.0
        %2012 = vmatprep.subr.mxu0 0.0
        %2013 = vmatpush1.msra.mxu0 0.0
        %2014 = vmatprep.subr.mxu0 0.0
        %2015 = vmatpush1.msra.mxu0 0.0
        %2016 = vmatprep.subr.mxu0 0.0
        %2017 = vmatpush1.msra.mxu0 0.0
        %2018 = vmatprep.subr.mxu0 0.0
        %2019 = vmatpush1.msra.mxu0 0.0
        %2020 = vmatprep.subr.mxu0 0.0
        %2021 = vmatpush1.msra.mxu0 0.0
        %2022 = vmatprep.subr.mxu0 0.0
        %2023 = vmatpush1.msra.mxu0 0.0
        %2024 = vmatprep.subr.mxu0 0.0
        %2025 = vmatpush1.msra.mxu0 0.0
        %2026 = vmatprep.mubr.f32.mxu0 0.0
        %2027 = vmatmul.mubr.f32.gmra.mrb[0].mxu0 %v1960
        %v2028 = vpop.f32.mrb[0].mxu0
        %v2029 = vadd.f32 0.0, %v2028
        %v2030 = vpop.f32.mrb[0].mxu0
        %2031 = vdwg.mxu0
        %2032 = vrot.lane.b32.xlu0 %v853, 64
        %v2033 = vpop.permute.xlu0 %2032
        %v2036 = vsel %vm858, %v1574, 0
        %2038 = vmatprep.subr.mxu0 0.0
        %2039 = vmatpush1.msra.mxu0 %v2033
        %2040 = vmatprep.subr.mxu0 0.0
        %2041 = vmatpush1.msra.mxu0 0.0
        %2042 = vmatprep.subr.mxu0 0.0
        %2043 = vmatpush1.msra.mxu0 0.0
        %2044 = vmatprep.subr.mxu0 0.0
        %2045 = vmatpush1.msra.mxu0 0.0
        %2046 = vmatprep.subr.mxu0 0.0
        %2047 = vmatpush1.msra.mxu0 0.0
        %2048 = vmatprep.subr.mxu0 0.0
        %2049 = vmatpush1.msra.mxu0 0.0
        %2050 = vmatprep.subr.mxu0 0.0
        %2051 = vmatpush1.msra.mxu0 0.0
        %2052 = vmatprep.subr.mxu0 0.0
        %2053 = vmatpush1.msra.mxu0 0.0
        %2054 = vmatprep.subr.mxu0 0.0
        %2055 = vmatpush1.msra.mxu0 0.0
        %2056 = vmatprep.subr.mxu0 0.0
        %2057 = vmatpush1.msra.mxu0 0.0
        %2058 = vmatprep.subr.mxu0 0.0
        %2059 = vmatpush1.msra.mxu0 0.0
        %2060 = vmatprep.subr.mxu0 0.0
        %2061 = vmatpush1.msra.mxu0 0.0
        %2062 = vmatprep.subr.mxu0 0.0
        %2063 = vmatpush1.msra.mxu0 0.0
        %2064 = vmatprep.subr.mxu0 0.0
        %2065 = vmatpush1.msra.mxu0 0.0
        %2066 = vmatprep.subr.mxu0 0.0
        %2067 = vmatpush1.msra.mxu0 0.0
        %2068 = vmatprep.subr.mxu0 0.0
        %2069 = vmatpush1.msra.mxu0 0.0
        %2070 = vmatprep.subr.mxu0 0.0
        %2071 = vmatpush1.msra.mxu0 0.0
        %2072 = vmatprep.subr.mxu0 0.0
        %2073 = vmatpush1.msra.mxu0 0.0
        %2074 = vmatprep.subr.mxu0 0.0
        %2075 = vmatpush1.msra.mxu0 0.0
        %2076 = vmatprep.subr.mxu0 0.0
        %2077 = vmatpush1.msra.mxu0 0.0
        %2078 = vmatprep.subr.mxu0 0.0
        %2079 = vmatpush1.msra.mxu0 0.0
        %2080 = vmatprep.subr.mxu0 0.0
        %2081 = vmatpush1.msra.mxu0 0.0
        %2082 = vmatprep.subr.mxu0 0.0
        %2083 = vmatpush1.msra.mxu0 0.0
        %2084 = vmatprep.subr.mxu0 0.0
        %2085 = vmatpush1.msra.mxu0 0.0
        %2086 = vmatprep.subr.mxu0 0.0
        %2087 = vmatpush1.msra.mxu0 0.0
        %2088 = vmatprep.subr.mxu0 0.0
        %2089 = vmatpush1.msra.mxu0 0.0
        %2090 = vmatprep.subr.mxu0 0.0
        %2091 = vmatpush1.msra.mxu0 0.0
        %2092 = vmatprep.subr.mxu0 0.0
        %2093 = vmatpush1.msra.mxu0 0.0
        %2094 = vmatprep.subr.mxu0 0.0
        %2095 = vmatpush1.msra.mxu0 0.0
        %2096 = vmatprep.subr.mxu0 0.0
        %2097 = vmatpush1.msra.mxu0 0.0
        %2098 = vmatprep.subr.mxu0 0.0
        %2099 = vmatpush1.msra.mxu0 0.0
        %2100 = vmatprep.subr.mxu0 0.0
        %2101 = vmatpush1.msra.mxu0 0.0
        %2102 = vmatprep.mubr.f32.mxu0 0.0
        %2103 = vmatmul.mubr.f32.gmra.mrb[0].mxu0 %v2036
        %v2104 = vpop.f32.mrb[0].mxu0
        %v2105 = vadd.f32 0.0, %v2104
        %v2106 = vpop.f32.mrb[0].mxu0
        %2107 = vdwg.mxu0
        %2108 = vrot.lane.b32.xlu0 %v855, 64
        %v2109 = vpop.permute.xlu0 %2108
        %v2112 = vsel %vm858, %v1575, 0
        %2114 = vmatprep.subr.mxu0 0.0
        %2115 = vmatpush1.msra.mxu0 %v2109
        %2116 = vmatprep.subr.mxu0 0.0
        %2117 = vmatpush1.msra.mxu0 0.0
        %2118 = vmatprep.subr.mxu0 0.0
        %2119 = vmatpush1.msra.mxu0 0.0
        %2120 = vmatprep.subr.mxu0 0.0
        %2121 = vmatpush1.msra.mxu0 0.0
        %2122 = vmatprep.subr.mxu0 0.0
        %2123 = vmatpush1.msra.mxu0 0.0
        %2124 = vmatprep.subr.mxu0 0.0
        %2125 = vmatpush1.msra.mxu0 0.0
        %2126 = vmatprep.subr.mxu0 0.0
        %2127 = vmatpush1.msra.mxu0 0.0
        %2128 = vmatprep.subr.mxu0 0.0
        %2129 = vmatpush1.msra.mxu0 0.0
        %2130 = vmatprep.subr.mxu0 0.0
        %2131 = vmatpush1.msra.mxu0 0.0
        %2132 = vmatprep.subr.mxu0 0.0
        %2133 = vmatpush1.msra.mxu0 0.0
        %2134 = vmatprep.subr.mxu0 0.0
        %2135 = vmatpush1.msra.mxu0 0.0
        %2136 = vmatprep.subr.mxu0 0.0
        %2137 = vmatpush1.msra.mxu0 0.0
        %2138 = vmatprep.subr.mxu0 0.0
        %2139 = vmatpush1.msra.mxu0 0.0
        %2140 = vmatprep.subr.mxu0 0.0
        %2141 = vmatpush1.msra.mxu0 0.0
        %2142 = vmatprep.subr.mxu0 0.0
        %2143 = vmatpush1.msra.mxu0 0.0
        %2144 = vmatprep.subr.mxu0 0.0
        %2145 = vmatpush1.msra.mxu0 0.0
        %2146 = vmatprep.subr.mxu0 0.0
        %2147 = vmatpush1.msra.mxu0 0.0
        %2148 = vmatprep.subr.mxu0 0.0
        %2149 = vmatpush1.msra.mxu0 0.0
        %2150 = vmatprep.subr.mxu0 0.0
        %2151 = vmatpush1.msra.mxu0 0.0
        %2152 = vmatprep.subr.mxu0 0.0
        %2153 = vmatpush1.msra.mxu0 0.0
        %2154 = vmatprep.subr.mxu0 0.0
        %2155 = vmatpush1.msra.mxu0 0.0
        %2156 = vmatprep.subr.mxu0 0.0
        %2157 = vmatpush1.msra.mxu0 0.0
        %2158 = vmatprep.subr.mxu0 0.0
        %2159 = vmatpush1.msra.mxu0 0.0
        %2160 = vmatprep.subr.mxu0 0.0
        %2161 = vmatpush1.msra.mxu0 0.0
        %2162 = vmatprep.subr.mxu0 0.0
        %2163 = vmatpush1.msra.mxu0 0.0
        %2164 = vmatprep.subr.mxu0 0.0
        %2165 = vmatpush1.msra.mxu0 0.0
        %2166 = vmatprep.subr.mxu0 0.0
        %2167 = vmatpush1.msra.mxu0 0.0
        %2168 = vmatprep.subr.mxu0 0.0
        %2169 = vmatpush1.msra.mxu0 0.0
        %2170 = vmatprep.subr.mxu0 0.0
        %2171 = vmatpush1.msra.mxu0 0.0
        %2172 = vmatprep.subr.mxu0 0.0
        %2173 = vmatpush1.msra.mxu0 0.0
        %2174 = vmatprep.subr.mxu0 0.0
        %2175 = vmatpush1.msra.mxu0 0.0
        %2176 = vmatprep.subr.mxu0 0.0
        %2177 = vmatpush1.msra.mxu0 0.0
        %2178 = vmatprep.mubr.f32.mxu0 0.0
        %2179 = vmatmul.mubr.f32.gmra.mrb[0].mxu0 %v2112
        %v2180 = vpop.f32.mrb[0].mxu0
        %v2181 = vadd.f32 0.0, %v2180
        %v2182 = vpop.f32.mrb[0].mxu0
        %2183 = vdwg.mxu0
        %2186 = vrot.lane.b32.xlu0 %v1801, 8
        %v2187 = vpop.permute.xlu0 %2186
        %2188 = vrot.lane.b32.xlu0 %v1877, 8
        %v2189 = vpop.permute.xlu0 %2188
        %2194 = vrot.lane.b32.xlu0 %v1953, 16
        %v2195 = vpop.permute.xlu0 %2194
        %2196 = vrot.lane.b32.xlu0 %v2029, 16
        %v2197 = vpop.permute.xlu0 %2196
        %2202 = vrot.lane.b32.xlu0 %v2105, 24
        %v2203 = vpop.permute.xlu0 %2202
        %2204 = vrot.lane.b32.xlu0 %v2181, 24
        %v2205 = vpop.permute.xlu0 %2204
        %v2208 = vsel %vm858, %v1649, %v2187
        %v2209 = vsel %vm858, %v1725, %v2189
        %vm2210 = vcmask 130048
        %v2211 = vsel %vm2210, %v2208, %v2195
        %v2212 = vsel %vm2210, %v2209, %v2197
        %vm2213 = vcmask 195584
        %v2214 = vsel %vm2213, %v2211, %v2203
        %v2215 = vsel %vm2213, %v2212, %v2205
        %v2216 = vld [vmem:[%s666] sm:$0xff]
        %v2217 = vld [vmem:[%s666 + $0x8] sm:$0xff]
        %v2218 = vld [vmem:[%s666 + $0x10] sm:$0xff]
        %v2219 = vld [vmem:[%s666 + $0x18] sm:$0xff]
        %v2220 = vld [vmem:[%s669] sm:$0x1]
        %v2222 = vlaneseq
        %v2223 = vshrl.u32 %v2222, 7
        %v2224 = vsub.s32 0, %v2223
        %v2225 = vrot.slane %v2220, %v2224
        %v2228 = vsel %vm706, %v2214, 0
        %v2231 = vsel %vm706, %v2215, 0
        %2233 = vmatprep.subr.mxu0 0.0
        %2234 = vmatpush1.msra.mxu0 %v2216
        %2235 = vmatprep.subr.mxu0 0.0
        %2236 = vmatpush1.msra.mxu0 %v2217
        %2237 = vmatprep.subr.mxu0 0.0
        %2238 = vmatpush1.msra.mxu0 %v2218
        %2239 = vmatprep.subr.mxu0 0.0
        %2240 = vmatpush1.msra.mxu0 %v2219
        %2241 = vmatprep.subr.mxu0 0.0
        %2242 = vmatpush1.msra.mxu0 0.0
        %2243 = vmatprep.subr.mxu0 0.0
        %2244 = vmatpush1.msra.mxu0 0.0
        %2245 = vmatprep.subr.mxu0 0.0
        %2246 = vmatpush1.msra.mxu0 0.0
        %2247 = vmatprep.subr.mxu0 0.0
        %2248 = vmatpush1.msra.mxu0 0.0
        %2249 = vmatprep.subr.mxu0 0.0
        %2250 = vmatpush1.msra.mxu0 0.0
        %2251 = vmatprep.subr.mxu0 0.0
        %2252 = vmatpush1.msra.mxu0 0.0
        %2253 = vmatprep.subr.mxu0 0.0
        %2254 = vmatpush1.msra.mxu0 0.0
        %2255 = vmatprep.subr.mxu0 0.0
        %2256 = vmatpush1.msra.mxu0 0.0
        %2257 = vmatprep.subr.mxu0 0.0
        %2258 = vmatpush1.msra.mxu0 0.0
        %2259 = vmatprep.subr.mxu0 0.0
        %2260 = vmatpush1.msra.mxu0 0.0
        %2261 = vmatprep.subr.mxu0 0.0
        %2262 = vmatpush1.msra.mxu0 0.0
        %2263 = vmatprep.subr.mxu0 0.0
        %2264 = vmatpush1.msra.mxu0 0.0
        %2265 = vmatprep.subr.mxu0 0.0
        %2266 = vmatpush1.msra.mxu0 0.0
        %2267 = vmatprep.subr.mxu0 0.0
        %2268 = vmatpush1.msra.mxu0 0.0
        %2269 = vmatprep.subr.mxu0 0.0
        %2270 = vmatpush1.msra.mxu0 0.0
        %2271 = vmatprep.subr.mxu0 0.0
        %2272 = vmatpush1.msra.mxu0 0.0
        %2273 = vmatprep.subr.mxu0 0.0
        %2274 = vmatpush1.msra.mxu0 0.0
        %2275 = vmatprep.subr.mxu0 0.0
        %2276 = vmatpush1.msra.mxu0 0.0
        %2277 = vmatprep.subr.mxu0 0.0
        %2278 = vmatpush1.msra.mxu0 0.0
        %2279 = vmatprep.subr.mxu0 0.0
        %2280 = vmatpush1.msra.mxu0 0.0
        %2281 = vmatprep.subr.mxu0 0.0
        %2282 = vmatpush1.msra.mxu0 0.0
        %2283 = vmatprep.subr.mxu0 0.0
        %2284 = vmatpush1.msra.mxu0 0.0
        %2285 = vmatprep.subr.mxu0 0.0
        %2286 = vmatpush1.msra.mxu0 0.0
        %2287 = vmatprep.subr.mxu0 0.0
        %2288 = vmatpush1.msra.mxu0 0.0
        %2289 = vmatprep.subr.mxu0 0.0
        %2290 = vmatpush1.msra.mxu0 0.0
        %2291 = vmatprep.subr.mxu0 0.0
        %2292 = vmatpush1.msra.mxu0 0.0
        %2293 = vmatprep.subr.mxu0 0.0
        %2294 = vmatpush1.msra.mxu0 0.0
        %2295 = vmatprep.subr.mxu0 0.0
        %2296 = vmatpush1.msra.mxu0 0.0
        %2297 = vmatprep.mubr.f32.mxu0 0.0
        %2298 = vmatmul.mubr.f32.gmra.mrb[0].mxu0 %v2228
        %v2299 = vpop.f32.mrb[0].mxu0
        %v2300 = vadd.f32 %v2225, %v2299
        %v2301 = vpop.f32.mrb[0].mxu0
        %2302 = vmatprep.mubr.f32.mxu0 0.0
        %2303 = vmatmul.mubr.f32.gmra.mrb[0].mxu0 %v2231
        %v2304 = vpop.f32.mrb[0].mxu0
        %v2305 = vadd.f32 %v2225, %v2304
        %v2306 = vpop.f32.mrb[0].mxu0
        %2307 = vdwg.mxu0
        %v2308 = vadd.f32 %v702, %v2300
        %v2309 = vadd.f32 %v703, %v2305
        %v2310 = vld [vmem:[%s672] sm:$0x1]
        %v2311 = vld [vmem:[%s675] sm:$0x1]
        %v2312 = vsel %vm706, %v2308, 0.0
        %2313 = vadd.xlane.f32.xlu0 %v2312
        %v2314 = vpop.xlane.xlu0 %2313
        %v2315 = vsel %vm706, %v2309, 0.0
        %2316 = vadd.xlane.f32.xlu0 %v2315
        %v2317 = vpop.xlane.xlu0 %2316
        %v2318 = vmul.f32 %v2314, %v713
        %v2319 = vmul.f32 %v2317, %v713
        %v2320 = vsub.f32 %v2308, %v2318
        %v2321 = vsub.f32 %v2309, %v2319
        %v2322 = vmul.f32 %v2320, %v2320
        %v2323 = vmul.f32 %v2321, %v2321
        %v2324 = vsel %vm706, %v2322, 0.0
        %2325 = vadd.xlane.f32.xlu0 %v2324
        %v2326 = vpop.xlane.xlu0 %2325
        %v2327 = vsel %vm706, %v2323, 0.0
        %2328 = vadd.xlane.f32.xlu0 %v2327
        %v2329 = vpop.xlane.xlu0 %2328
        %v2330 = vmul.f32 %v2326, %v713
        %v2331 = vmul.f32 %v2329, %v713
        %v2332 = vadd.f32 %v2330, 1e-05
        %v2333 = vadd.f32 %v2331, 1e-05
        %v2334 = vrsqrt.pop %v2332
        %v2335 = vrsqrt.pop %v2333
        %v2336 = vmul.f32 %v2320, %v2334
        %v2337 = vmul.f32 %v2321, %v2335
        %v2339 = vlaneseq
        %v2340 = vshrl.u32 %v2339, 7
        %v2341 = vsub.s32 0, %v2340
        %v2342 = vrot.slane %v2310, %v2341
        %v2344 = vmul.f32 %v2336, %v2342
        %v2345 = vmul.f32 %v2337, %v2342
        %v2347 = vlaneseq
        %v2348 = vshrl.u32 %v2347, 7
        %v2349 = vsub.s32 0, %v2348
        %v2350 = vrot.slane %v2311, %v2349
        %v2352 = vadd.f32 %v2344, %v2350
        %v2353 = vadd.f32 %v2345, %v2350
        %v2354 = vld [vmem:[%s680] sm:$0xff]
        %v2355 = vld [vmem:[%s680 + $0x8] sm:$0xff]
        %v2356 = vld [vmem:[%s680 + $0x10] sm:$0xff]
        %v2357 = vld [vmem:[%s680 + $0x18] sm:$0xff]
        %v2358 = vld [vmem:[%s683] sm:$0x1]
        %v2360 = vlaneseq
        %v2361 = vshrl.u32 %v2360, 7
        %v2362 = vsub.s32 0, %v2361
        %v2363 = vrot.slane %v2358, %v2362
        %v2366 = vsel %vm706, %v2352, 0
        %v2369 = vsel %vm706, %v2353, 0
        %2371 = vmatprep.subr.mxu0 0.0
        %2372 = vmatpush1.msra.mxu0 %v2354
        %2373 = vmatprep.subr.mxu0 0.0
        %2374 = vmatpush1.msra.mxu0 %v2355
        %2375 = vmatprep.subr.mxu0 0.0
        %2376 = vmatpush1.msra.mxu0 %v2356
        %2377 = vmatprep.subr.mxu0 0.0
        %2378 = vmatpush1.msra.mxu0 %v2357
        %2379 = vmatprep.subr.mxu0 0.0
        %2380 = vmatpush1.msra.mxu0 0.0
        %2381 = vmatprep.subr.mxu0 0.0
        %2382 = vmatpush1.msra.mxu0 0.0
        %2383 = vmatprep.subr.mxu0 0.0
        %2384 = vmatpush1.msra.mxu0 0.0
        %2385 = vmatprep.subr.mxu0 0.0
        %2386 = vmatpush1.msra.mxu0 0.0
        %2387 = vmatprep.subr.mxu0 0.0
        %2388 = vmatpush1.msra.mxu0 0.0
        %2389 = vmatprep.subr.mxu0 0.0
        %2390 = vmatpush1.msra.mxu0 0.0
        %2391 = vmatprep.subr.mxu0 0.0
        %2392 = vmatpush1.msra.mxu0 0.0
        %2393 = vmatprep.subr.mxu0 0.0
        %2394 = vmatpush1.msra.mxu0 0.0
        %2395 = vmatprep.subr.mxu0 0.0
        %2396 = vmatpush1.msra.mxu0 0.0
        %2397 = vmatprep.subr.mxu0 0.0
        %2398 = vmatpush1.msra.mxu0 0.0
        %2399 = vmatprep.subr.mxu0 0.0
        %2400 = vmatpush1.msra.mxu0 0.0
        %2401 = vmatprep.subr.mxu0 0.0
        %2402 = vmatpush1.msra.mxu0 0.0
        %2403 = vmatprep.subr.mxu0 0.0
        %2404 = vmatpush1.msra.mxu0 0.0
        %2405 = vmatprep.subr.mxu0 0.0
        %2406 = vmatpush1.msra.mxu0 0.0
        %2407 = vmatprep.subr.mxu0 0.0
        %2408 = vmatpush1.msra.mxu0 0.0
        %2409 = vmatprep.subr.mxu0 0.0
        %2410 = vmatpush1.msra.mxu0 0.0
        %2411 = vmatprep.subr.mxu0 0.0
        %2412 = vmatpush1.msra.mxu0 0.0
        %2413 = vmatprep.subr.mxu0 0.0
        %2414 = vmatpush1.msra.mxu0 0.0
        %2415 = vmatprep.subr.mxu0 0.0
        %2416 = vmatpush1.msra.mxu0 0.0
        %2417 = vmatprep.subr.mxu0 0.0
        %2418 = vmatpush1.msra.mxu0 0.0
        %2419 = vmatprep.subr.mxu0 0.0
        %2420 = vmatpush1.msra.mxu0 0.0
        %2421 = vmatprep.subr.mxu0 0.0
        %2422 = vmatpush1.msra.mxu0 0.0
        %2423 = vmatprep.subr.mxu0 0.0
        %2424 = vmatpush1.msra.mxu0 0.0
        %2425 = vmatprep.subr.mxu0 0.0
        %2426 = vmatpush1.msra.mxu0 0.0
        %2427 = vmatprep.subr.mxu0 0.0
        %2428 = vmatpush1.msra.mxu0 0.0
        %2429 = vmatprep.subr.mxu0 0.0
        %2430 = vmatpush1.msra.mxu0 0.0
        %2431 = vmatprep.subr.mxu0 0.0
        %2432 = vmatpush1.msra.mxu0 0.0
        %2433 = vmatprep.subr.mxu0 0.0
        %2434 = vmatpush1.msra.mxu0 0.0
        %2435 = vmatprep.mubr.f32.mxu0 0.0
        %2436 = vmatmul.mubr.f32.gmra.mrb[0].mxu0 %v2366
        %v2437 = vpop.f32.mrb[0].mxu0
        %v2438 = vadd.f32 %v2363, %v2437
        %v2439 = vpop.f32.mrb[0].mxu0
        %2440 = vmatprep.mubr.f32.mxu0 0.0
        %2441 = vmatmul.mubr.f32.gmra.mrb[0].mxu0 %v2369
        %v2442 = vpop.f32.mrb[0].mxu0
        %v2443 = vadd.f32 %v2363, %v2442
        %v2444 = vpop.f32.mrb[0].mxu0
        %2445 = vdwg.mxu0
        %v2446 = vmul.f32 %v2438, 0.5
        %v2447 = vmul.f32 %v2443, 0.5
        %v2448 = vmul.f32 %v2438, 0.044715
        %v2449 = vmul.f32 %v2443, 0.044715
        %v2450 = vmul.f32 %v2448, %v2438
        %v2451 = vmul.f32 %v2449, %v2443
        %v2452 = vmul.f32 %v2450, %v2438
        %v2453 = vmul.f32 %v2451, %v2443
        %v2454 = vadd.f32 %v2438, %v2452
        %v2455 = vadd.f32 %v2443, %v2453
        %v2456 = vmul.f32 %v2454, 0.7978846
        %v2457 = vmul.f32 %v2455, 0.7978846
        %v2458 = vtanh.pop %v2456
        %v2459 = vtanh.pop %v2457
        %v2460 = vadd.f32 %v2458, 1.0
        %v2461 = vadd.f32 %v2459, 1.0
        %v2462 = vmul.f32 %v2446, %v2460
        %v2463 = vmul.f32 %v2447, %v2461
        %v2464 = vld [vmem:[%s688] sm:$0xff]
        %v2465 = vld [vmem:[%s688 + $0x8] sm:$0xff]
        %v2466 = vld [vmem:[%s688 + $0x10] sm:$0xff]
        %v2467 = vld [vmem:[%s688 + $0x18] sm:$0xff]
        %v2468 = vld [vmem:[%s688 + $0x20] sm:$0xff]
        %v2469 = vld [vmem:[%s688 + $0x28] sm:$0xff]
        %v2470 = vld [vmem:[%s688 + $0x30] sm:$0xff]
        %v2471 = vld [vmem:[%s688 + $0x38] sm:$0xff]
        %v2472 = vld [vmem:[%s688 + $0x40] sm:$0xff]
        %v2473 = vld [vmem:[%s688 + $0x48] sm:$0xff]
        %v2474 = vld [vmem:[%s688 + $0x50] sm:$0xff]
        %v2475 = vld [vmem:[%s688 + $0x58] sm:$0xff]
        %v2476 = vld [vmem:[%s688 + $0x60] sm:$0xff]
        %v2477 = vld [vmem:[%s688 + $0x68] sm:$0xff]
        %v2478 = vld [vmem:[%s688 + $0x70] sm:$0xff]
        %v2479 = vld [vmem:[%s688 + $0x78] sm:$0xff]
        %v2480 = vld [vmem:[%s691] sm:$0x1]
        %v2482 = vlaneseq
        %v2483 = vshrl.u32 %v2482, 7
        %v2484 = vsub.s32 0, %v2483
        %v2485 = vrot.slane %v2480, %v2484
        %2487 = vmatprep.subr.mxu0 0.0
        %2488 = vmatpush1.msra.mxu0 %v2464
        %2489 = vmatprep.subr.mxu0 0.0
        %2490 = vmatpush1.msra.mxu0 %v2465
        %2491 = vmatprep.subr.mxu0 0.0
        %2492 = vmatpush1.msra.mxu0 %v2466
        %2493 = vmatprep.subr.mxu0 0.0
        %2494 = vmatpush1.msra.mxu0 %v2467
        %2495 = vmatprep.subr.mxu0 0.0
        %2496 = vmatpush1.msra.mxu0 %v2468
        %2497 = vmatprep.subr.mxu0 0.0
        %2498 = vmatpush1.msra.mxu0 %v2469
        %2499 = vmatprep.subr.mxu0 0.0
        %2500 = vmatpush1.msra.mxu0 %v2470
        %2501 = vmatprep.subr.mxu0 0.0
        %2502 = vmatpush1.msra.mxu0 %v2471
        %2503 = vmatprep.subr.mxu0 0.0
        %2504 = vmatpush1.msra.mxu0 %v2472
        %2505 = vmatprep.subr.mxu0 0.0
        %2506 = vmatpush1.msra.mxu0 %v2473
        %2507 = vmatprep.subr.mxu0 0.0
        %2508 = vmatpush1.msra.mxu0 %v2474
        %2509 = vmatprep.subr.mxu0 0.0
        %2510 = vmatpush1.msra.mxu0 %v2475
        %2511 = vmatprep.subr.mxu0 0.0
        %2512 = vmatpush1.msra.mxu0 %v2476
        %2513 = vmatprep.subr.mxu0 0.0
        %2514 = vmatpush1.msra.mxu0 %v2477
        %2515 = vmatprep.subr.mxu0 0.0
        %2516 = vmatpush1.msra.mxu0 %v2478
        %2517 = vmatprep.subr.mxu0 0.0
        %2518 = vmatpush1.msra.mxu0 %v2479
        %2519 = vmatprep.subr.mxu0 0.0
        %2520 = vmatpush1.msra.mxu0 0.0
        %2521 = vmatprep.subr.mxu0 0.0
        %2522 = vmatpush1.msra.mxu0 0.0
        %2523 = vmatprep.subr.mxu0 0.0
        %2524 = vmatpush1.msra.mxu0 0.0
        %2525 = vmatprep.subr.mxu0 0.0
        %2526 = vmatpush1.msra.mxu0 0.0
        %2527 = vmatprep.subr.mxu0 0.0
        %2528 = vmatpush1.msra.mxu0 0.0
        %2529 = vmatprep.subr.mxu0 0.0
        %2530 = vmatpush1.msra.mxu0 0.0
        %2531 = vmatprep.subr.mxu0 0.0
        %2532 = vmatpush1.msra.mxu0 0.0
        %2533 = vmatprep.subr.mxu0 0.0
        %2534 = vmatpush1.msra.mxu0 0.0
        %2535 = vmatprep.subr.mxu0 0.0
        %2536 = vmatpush1.msra.mxu0 0.0
        %2537 = vmatprep.subr.mxu0 0.0
        %2538 = vmatpush1.msra.mxu0 0.0
        %2539 = vmatprep.subr.mxu0 0.0
        %2540 = vmatpush1.msra.mxu0 0.0
        %2541 = vmatprep.subr.mxu0 0.0
        %2542 = vmatpush1.msra.mxu0 0.0
        %2543 = vmatprep.subr.mxu0 0.0
        %2544 = vmatpush1.msra.mxu0 0.0
        %2545 = vmatprep.subr.mxu0 0.0
        %2546 = vmatpush1.msra.mxu0 0.0
        %2547 = vmatprep.subr.mxu0 0.0
        %2548 = vmatpush1.msra.mxu0 0.0
        %2549 = vmatprep.subr.mxu0 0.0
        %2550 = vmatpush1.msra.mxu0 0.0
        %2551 = vmatprep.mubr.f32.mxu0 0.0
        %2552 = vmatmul.mubr.f32.gmra.mrb[0].mxu0 %v2462
        %v2553 = vpop.f32.mrb[0].mxu0
        %v2554 = vadd.f32 %v2485, %v2553
        %v2555 = vpop.f32.mrb[0].mxu0
        %2556 = vmatprep.mubr.f32.mxu0 0.0
        %2557 = vmatmul.mubr.f32.gmra.mrb[0].mxu0 %v2463
        %v2558 = vpop.f32.mrb[0].mxu0
        %v2559 = vadd.f32 %v2485, %v2558
        %v2560 = vpop.f32.mrb[0].mxu0
        %2561 = vdwg.mxu0
        %v2562 = vadd.f32 %v2308, %v2554
        %v2563 = vadd.f32 %v2309, %v2559
        %p2564 = scmp.lt.s32.totalorder %s32, 1
        // Predicated region
        $region85: #{tpu_custom_call.1} parent=79 // pred_check
          %p2565 = pneg %p2564
        $region86: #{tpu_custom_call.1} parent=79 // pred_check_branch
          %2567 = sbr.rel (%p2565) target = $region88
        $region87: #{tpu_custom_call.1} parent=79 // pred_region
          %2568 = vst.msk [vmem:[#allocation2] sm:$0xff] %vm706, %v2562
          %2569 = vst.msk [vmem:[#allocation2 + $0x8] sm:$0xff] %vm706, %v2563
        $region88: #{tpu_custom_call.1} parent=79 // pred_fallthru
          _
        %p2570 = scmp.eq.s32.totalorder %s32, 1
        // Predicated region
        $region89: #{tpu_custom_call.1} parent=79 // pred_check
          %p2571 = pneg %p2570
        $region90: #{tpu_custom_call.1} parent=79 // pred_check_branch
          %2573 = sbr.rel (%p2571) target = $region92
        $region91: #{tpu_custom_call.1} parent=79 // pred_region
          %v2574 = vld [vmem:[%s13] sm:$0x1]
          %v2575 = vld [vmem:[%s14] sm:$0x1]
          %v2576 = vsel %vm706, %v2562, 0.0
          %2577 = vadd.xlane.f32.xlu0 %v2576
          %v2578 = vpop.xlane.xlu0 %2577
          %v2579 = vsel %vm706, %v2563, 0.0
          %2580 = vadd.xlane.f32.xlu0 %v2579
          %v2581 = vpop.xlane.xlu0 %2580
          %v2582 = vmul.f32 %v2578, %v713
          %v2583 = vmul.f32 %v2581, %v713
          %v2584 = vsub.f32 %v2562, %v2582
          %v2585 = vsub.f32 %v2563, %v2583
          %v2586 = vmul.f32 %v2584, %v2584
          %v2587 = vmul.f32 %v2585, %v2585
          %v2588 = vsel %vm706, %v2586, 0.0
          %2589 = vadd.xlane.f32.xlu0 %v2588
          %v2590 = vpop.xlane.xlu0 %2589
          %v2591 = vsel %vm706, %v2587, 0.0
          %2592 = vadd.xlane.f32.xlu0 %v2591
          %v2593 = vpop.xlane.xlu0 %2592
          %v2594 = vmul.f32 %v2590, %v713
          %v2595 = vmul.f32 %v2593, %v713
          %v2596 = vadd.f32 %v2594, 1e-05
          %v2597 = vadd.f32 %v2595, 1e-05
          %v2598 = vrsqrt.pop %v2596
          %v2599 = vrsqrt.pop %v2597
          %v2600 = vmul.f32 %v2584, %v2598
          %v2601 = vmul.f32 %v2585, %v2599
          %v2603 = vlaneseq
          %v2604 = vshrl.u32 %v2603, 7
          %v2605 = vsub.s32 0, %v2604
          %v2606 = vrot.slane %v2574, %v2605
          %v2608 = vmul.f32 %v2600, %v2606
          %v2609 = vmul.f32 %v2601, %v2606
          %v2611 = vlaneseq
          %v2612 = vshrl.u32 %v2611, 7
          %v2613 = vsub.s32 0, %v2612
          %v2614 = vrot.slane %v2575, %v2613
          %v2616 = vadd.f32 %v2608, %v2614
          %v2617 = vadd.f32 %v2609, %v2614
          %2618 = vst.msk [vmem:[#allocation3] sm:$0xff] %vm706, %v2616
          %2619 = vst.msk [vmem:[#allocation3 + $0x8] sm:$0xff] %vm706, %v2617
        $region92: #{tpu_custom_call.1} parent=79 // pred_fallthru
          _
        // Predicated region
        $region93: #{tpu_custom_call.1} parent=79 // pred_check
          %p2620 = pneg %p437
        $region94: #{tpu_custom_call.1} parent=79 // pred_check_branch
          %2622 = sbr.rel (%p2620) target = $region96
        $region95: #{tpu_custom_call.1} parent=79 // pred_region
          %s2623 = smul.u32 2, %s31
          %s2625 = ssub.s32 256, 256
          %2626 = vsyncadd [#allocation4], %s2625
          %s2627 = smul.addr %s2623, 128
          %s2628 = scalar_lea.hbm %s15, %s2627
          %s2629 = sshll.u32 [#allocation3], 4
          %s2630 = int_to_ptr.vmem [resolvable:$true] %s2629
          %2635 = dma.vmem_to_hbm [thread:$0]  %s2630, 256, %s2628, [#allocation4], 128, 128, 8
        $region96: #{tpu_custom_call.1} parent=79 // pred_fallthru
          _
        // Predicated region
        $region97: #{tpu_custom_call.1} parent=79 // pred_check
          %p2636 = pneg %p437
        $region98: #{tpu_custom_call.1} parent=79 // pred_check_branch
          %2638 = sbr.rel (%p2636) target = $region100
        $region99: #{tpu_custom_call.1} parent=79 // pred_region
          %2639 = dma.done [#allocation4], 256
        $region100: #{tpu_custom_call.1} parent=79 // pred_fallthru
          _
      $region80: #{tpu_custom_call.1} parent=5 // pred_fallthru
        _
      %p2640 = scmp.le.s32.totalorder 2, %s22
      // Predicated region
      $region101: #{tpu_custom_call.1} parent=5 // pred_check
        %p2641 = pneg %p2640
      $region102: #{tpu_custom_call.1} parent=5 // pred_check_branch
        %2643 = sbr.rel (%p2641) target = $region104
      $region103: #{tpu_custom_call.1} parent=5 // pred_region
        %s2644 = ssub.s32 %s22, 2
      $region104: #{tpu_custom_call.1} parent=5 // pred_fallthru
        _
    $region6: #{tpu_custom_call.1} parent=1 // loop_footer
      %s26 = sadd.s32 1, %s22
    $region7: #{tpu_custom_call.1} parent=1 // loop_footer_branch
      %21 = sbr.rel target = $region3
    $region8: #{tpu_custom_call.1} parent=1 // loop_exit
      _
    %2645 = vsyncpa [#allocation4], 1
    %s2646 = scalar_lea.sflag [#allocation4], 1
    %2647 = vsyncpa %s2646, 1

</llo_original>
